<compile_context>
chip_gen: v7x
topology: tpu7x:2x2x1
jax: 0.10.0
libtpu: 0.0.40
codegen_flags: <defaults>
</compile_context>

<pallas_src>
from math import ceil

import jax
import jax.numpy as jnp
from jax.experimental import pallas as pl
from jax.experimental.pallas import tpu as pltpu


# ----------------------------------------------------------------------------
# helpers
# ----------------------------------------------------------------------------
_VMEM_CEILING = 48 << 20      # leaves headroom inside v7x's 64 MiB / TC VMEM
_ADJ_BLOCK_BUDGET = 2 << 20   # bytes of adjacency per grid step (v7x-safe)
_MAX_BT = 8                   # bound the per-step work / vreg pressure


def _pick_bt(batch, n_nodes, itemsize=2):
    """Graphs per grid step: amortize the ~0.35us/step overhead, keep the
    adjacency block small, and keep >=2 grid steps so both v7x TensorCores
    get work on the 'parallel' batch axis."""
    bt = max(1, min(batch, _ADJ_BLOCK_BUDGET // max(1, n_nodes * n_nodes * itemsize)))
    bt = min(bt, _MAX_BT)
    if batch >= 2:
        bt = min(bt, batch // 2)
    bt = max(bt, 1)
    while batch % bt:
        bt -= 1
    return bt


def _compiler_params(block_nbytes):
    """Explicit scoped-VMEM request: 2x per block (double buffer) + headroom."""
    need = 2 * int(block_nbytes) + (4 << 20)
    vmem = int(min(max(need, 16 << 20), _VMEM_CEILING))
    return pltpu.CompilerParams(
        dimension_semantics=("parallel",),
        vmem_limit_bytes=vmem,
    )


# ----------------------------------------------------------------------------
# Pallas kernels
# ----------------------------------------------------------------------------
def _make_sage_conv_kernel(n_heads, use_mask, add_loop):
    """Multi-head DenseSAGEConv(normalize=False) + mask + ReLU + BN partials.

    All heads share one (x, adj) block: the adjacency and features are DMA'd
    once per grid step no matter how many weight sets consume them (this fuses
    gnnX_pool + gnnX_embed).  Self-loops are folded in-kernel (agg += x,
    deg += 1), the degree comes from an XLU lane reduce (no HBM [x|1] tensor),
    the bt graphs are stacked to (bt*N, C) so each shared-weight matmul is one
    MXU dot, and all MXU inputs are bf16 with f32 accumulation.  Each head
    emits its BatchNorm partials packed as one lane-dense (1, 2, F) slab.
    """

    def kernel(*refs):
        idx = 0
        x_ref = refs[idx]; idx += 1
        adj_ref = refs[idx]; idx += 1
        mask_ref = None
        if use_mask:
            mask_ref = refs[idx]; idx += 1
        wb_refs = [(refs[idx + 2 * h], refs[idx + 2 * h + 1]) for h in range(n_heads)]
        idx += 2 * n_heads
        h_refs = refs[idx: idx + n_heads]; idx += n_heads
        stat_refs = refs[idx: idx + n_heads]

        bt, n, c = x_ref.shape
        x_raw = x_ref[...]
        adj_bf = adj_ref[...].astype(jnp.bfloat16)

        # Mean aggregation: batched MXU matmul (bf16 in, f32 acc); degree via a
        # lane row-sum on the otherwise-idle XLU.
        agg = jnp.einsum("bij,bjc->bic", adj_bf, x_raw.astype(jnp.bfloat16),
                         preferred_element_type=jnp.float32)          # (bt, N, C)
        deg = jnp.sum(adj_bf.astype(jnp.float32), axis=-1, keepdims=True)
        if add_loop:
            # diag(adj)=1 folded in-kernel (input diagonal is zero): self
            # feature into the aggregation and +1 into the degree.
            agg = agg + x_raw.astype(jnp.float32)
            deg = deg + 1.0
        deg = jnp.maximum(deg, 1.0)
        agg = agg * pl.reciprocal(deg, approx=True)                   # EUP, VALU-free

        # Stack the bt graphs so every shared-weight matmul sees M = bt*N rows.
        agg2 = agg.reshape(bt * n, c).astype(jnp.bfloat16)
        m = mask_ref[...].reshape(bt * n, 1) if use_mask else None

        for head in range(n_heads):
            w_ref, b_ref = wb_refs[head]
            out = jnp.dot(agg2, w_ref[...].astype(jnp.bfloat16),
                          preferred_element_type=jnp.float32) + b_ref[...]
            if use_mask:
                out = out * m
            out = jnp.maximum(out, 0.0)                               # fused ReLU
            h_refs[head][...] = out.reshape(bt, n, -1).astype(h_refs[head].dtype)
            # Packed BatchNorm partials (post-ReLU / post-mask, matching torch
            # BatchNorm1d over all flattened B*N rows): rows [sum ; sumsq].
            s1 = jnp.sum(out, axis=0, keepdims=True)
            s2 = jnp.sum(out * out, axis=0, keepdims=True)
            stat_refs[head][...] = jnp.concatenate([s1, s2], axis=0)[None]

    return kernel


def _bn_linear_relu_kernel(h_ref, scale_ref, shift_ref, w_ref, b_ref, o_ref):
    """Fused BatchNorm apply + Linear + ReLU (the DiffPoolLayer `lin` branch).

    The (bt, N, C) block is flattened to (bt*N, C) so the shared-weight matmul
    is a single bf16 MXU dot with f32 accumulation.
    """
    bt, n, c = h_ref.shape
    h = h_ref[...].astype(jnp.float32).reshape(bt * n, c)
    hn = h * scale_ref[...] + shift_ref[...]
    out = jnp.dot(hn.astype(jnp.bfloat16), w_ref[...].astype(jnp.bfloat16),
                  preferred_element_type=jnp.float32) + b_ref[...]
    o_ref[...] = jnp.maximum(out, 0.0).reshape(bt, n, -1).astype(o_ref.dtype)


def _make_diff_pool_kernel(bt, use_mask):
    """dense_diff_pool coarsening with the producer's BatchNorm fused in.

    out_x = softmax(s)^T (x*scale+shift) ; out_adj = softmax(s)^T adj softmax(s)
    softmax(s) is transposed ONCE per graph; all contractions are canonical
    last-dim MXU dots with bf16 inputs / f32 accumulation.  The per-graph loop
    is statically unrolled but bounded (bt <= _MAX_BT).
    """

    def kernel(x_ref, adj_ref, s_ref, scale_ref, shift_ref, *rest):
        if use_mask:
            mask_ref, xo_ref, ao_ref = rest
        else:
            xo_ref, ao_ref = rest
        scale = scale_ref[...]
        shift = shift_ref[...]
        for g in range(bt):                      # bounded static unroll
            x = x_ref[g].astype(jnp.float32) * scale + shift          # (N, C)
            s = jax.nn.softmax(s_ref[g].astype(jnp.float32), axis=-1)  # (N, K)
            if use_mask:
                m = mask_ref[g]                                        # (N, 1)
                x = x * m
                s = s * m
            st_bf = s.T.astype(jnp.bfloat16)                           # (K, N)
            s_bf = s.astype(jnp.bfloat16)
            adj_bf = adj_ref[g].astype(jnp.bfloat16)
            out_x = jnp.dot(st_bf, x.astype(jnp.bfloat16),
                            preferred_element_type=jnp.float32)        # (K, C)
            t = jnp.dot(st_bf, adj_bf, preferred_element_type=jnp.float32)  # (K, N)
            out_adj = jnp.dot(t.astype(jnp.bfloat16), s_bf,
                              preferred_element_type=jnp.float32)      # (K, K)
            xo_ref[g] = out_x.astype(xo_ref.dtype)
            ao_ref[g] = out_adj.astype(ao_ref.dtype)

    return kernel


# ----------------------------------------------------------------------------
# Pallas wrappers
# ----------------------------------------------------------------------------
def sage_convs(x, adj, heads, mask=None, add_loop=False, out_dtype=jnp.bfloat16):
    """Fused multi-head DenseSAGEConv.  heads = [(w, b), ...].

    Returns ([h_head, ...], [packed_bn_stats_head, ...]) where each stats array
    is (G, 2, F): row 0 = per-block feature sums, row 1 = per-block sumsq.
    """
    B, N, C = x.shape
    bt = _pick_bt(B, N, adj.dtype.itemsize)
    G = B // bt
    use_mask = mask is not None
    n_heads = len(heads)

    in_specs = [
        pl.BlockSpec((bt, N, C), lambda i: (i, 0, 0)),
        pl.BlockSpec((bt, N, N), lambda i: (i, 0, 0)),
    ]
    args = [x, adj]
    blk = bt * N * C * x.dtype.itemsize + bt * N * N * adj.dtype.itemsize
    if use_mask:
        in_specs.append(pl.BlockSpec((bt, N, 1), lambda i: (i, 0, 0)))
        args.append(mask.reshape(B, N, 1).astype(jnp.float32))
        blk += bt * N * 4

    out_specs, out_shapes = [], []
    for (w, b) in heads:
        F_h = w.shape[1]
        in_specs += [pl.BlockSpec((C, F_h), lambda i: (0, 0)),
                     pl.BlockSpec((1, F_h), lambda i: (0, 0))]
        args += [w, b.reshape(1, F_h)]
        out_specs.append(pl.BlockSpec((bt, N, F_h), lambda i: (i, 0, 0)))
        out_shapes.append(jax.ShapeDtypeStruct((B, N, F_h), out_dtype))
        blk += (C + 1) * F_h * 4 + bt * N * F_h * jnp.dtype(out_dtype).itemsize
    for (w, b) in heads:
        F_h = w.shape[1]
        out_specs.append(pl.BlockSpec((1, 2, F_h), lambda i: (i, 0, 0)))
        out_shapes.append(jax.ShapeDtypeStruct((G, 2, F_h), jnp.float32))
        blk += 2 * F_h * 4

    outs = pl.pallas_call(
        _make_sage_conv_kernel(n_heads, use_mask, add_loop),
        grid=(G,),
        in_specs=in_specs,
        out_specs=tuple(out_specs),
        out_shape=tuple(out_shapes),
        compiler_params=_compiler_params(blk),
    )(*args)
    return list(outs[:n_heads]), list(outs[n_heads:])


def bn_linear_relu(h, scale, shift, w, b, out_dtype=jnp.bfloat16):
    B, N, C = h.shape
    K = w.shape[1]
    bt = _pick_bt(B, N, h.dtype.itemsize)
    G = B // bt
    blk = (bt * N * C * h.dtype.itemsize + 2 * C * 4 + (C + 1) * K * 4
           + bt * N * K * jnp.dtype(out_dtype).itemsize)
    return pl.pallas_call(
        _bn_linear_relu_kernel,
        grid=(G,),
        in_specs=[
            pl.BlockSpec((bt, N, C), lambda i: (i, 0, 0)),
            pl.BlockSpec((1, C), lambda i: (0, 0)),
            pl.BlockSpec((1, C), lambda i: (0, 0)),
            pl.BlockSpec((C, K), lambda i: (0, 0)),
            pl.BlockSpec((1, K), lambda i: (0, 0)),
        ],
        out_specs=pl.BlockSpec((bt, N, K), lambda i: (i, 0, 0)),
        out_shape=jax.ShapeDtypeStruct((B, N, K), out_dtype),
        compiler_params=_compiler_params(blk),
    )(h, scale, shift, w, b.reshape(1, K))


def dense_diff_pool(x, adj, s, scale, shift, mask=None,
                    x_dtype=jnp.bfloat16, adj_dtype=jnp.float32):
    """Coarsen (x, adj) with assignment s; x is BN-normalized (scale/shift) inside."""
    B, N, C = x.shape
    K = s.shape[-1]
    bt = _pick_bt(B, N, adj.dtype.itemsize)
    G = B // bt
    use_mask = mask is not None

    in_specs = [
        pl.BlockSpec((bt, N, C), lambda i: (i, 0, 0)),
        pl.BlockSpec((bt, N, N), lambda i: (i, 0, 0)),
        pl.BlockSpec((bt, N, K), lambda i: (i, 0, 0)),
        pl.BlockSpec((1, C), lambda i: (0, 0)),
        pl.BlockSpec((1, C), lambda i: (0, 0)),
    ]
    args = [x, adj, s, scale, shift]
    blk = (bt * N * C * x.dtype.itemsize + bt * N * N * adj.dtype.itemsize
           + bt * N * K * s.dtype.itemsize + 2 * C * 4
           + bt * K * C * jnp.dtype(x_dtype).itemsize
           + bt * K * K * jnp.dtype(adj_dtype).itemsize)
    if use_mask:
        in_specs.append(pl.BlockSpec((bt, N, 1), lambda i: (i, 0, 0)))
        args.append(mask.reshape(B, N, 1).astype(jnp.float32))
        blk += bt * N * 4

    out_x, out_adj = pl.pallas_call(
        _make_diff_pool_kernel(bt, use_mask),
        grid=(G,),
        in_specs=in_specs,
        out_specs=(
            pl.BlockSpec((bt, K, C), lambda i: (i, 0, 0)),
            pl.BlockSpec((bt, K, K), lambda i: (i, 0, 0)),
        ),
        out_shape=(
            jax.ShapeDtypeStruct((B, K, C), x_dtype),
            jax.ShapeDtypeStruct((B, K, K), adj_dtype),
        ),
        compiler_params=_compiler_params(blk),
    )(*args)
    # TODO(synk): dense_diff_pool's link_loss / ent_loss are not computed; they
    # are unused by this forward pass.
    return out_x, out_adj


# ----------------------------------------------------------------------------
# Model glue (tiny reductions / head in plain JAX, all under one jit)
# ----------------------------------------------------------------------------
def bn_scale_shift(stats, count, eps=1e-5):
    """Reduce packed per-block (sum, sumsq) partials -> BatchNorm1d (training,
    gamma=1, beta=0) scale/shift."""
    total = jnp.sum(stats[:, 0, :].astype(jnp.float32), axis=0)
    total_sq = jnp.sum(stats[:, 1, :].astype(jnp.float32), axis=0)
    mean = total / count
    var = jnp.maximum(total_sq / count - mean * mean, 0.0)   # biased variance
    scale = jax.lax.rsqrt(var + eps)
    shift = -mean * scale
    return scale.reshape(1, -1), shift.reshape(1, -1)


def diffpool_net_forward(params, x, adj, mask):
    B, N, _ = x.shape
    # 0/1 input adjacency -> bf16 is lossless; halves the dominant NxN HBM term.
    adj_bf = adj.astype(jnp.bfloat16)

    # ---- stage 1: gnn1_pool + gnn1_embed fused (adjacency/features read ONCE)
    (h_pool, h_emb), (st_pool, st_emb) = sage_convs(
        x, adj_bf,
        heads=[(params["gnn1_pool"]["conv_w"], params["gnn1_pool"]["conv_b"]),
               (params["gnn1_embed"]["conv_w"], params["gnn1_embed"]["conv_b"])],
        mask=mask, add_loop=True)
    sc_p, sh_p = bn_scale_shift(st_pool, count=B * N)
    sc_e, sh_e = bn_scale_shift(st_emb, count=B * N)
    s1 = bn_linear_relu(h_pool, sc_p, sh_p,
                        params["gnn1_pool"]["lin_w"], params["gnn1_pool"]["lin_b"])
    x2, adj2 = dense_diff_pool(h_emb, adj_bf, s1, sc_e, sh_e, mask)

    # ---- stage 2: gnn2_pool + gnn2_embed fused -------------------------------
    B2, N2, _ = x2.shape
    (h_pool, h_emb), (st_pool, st_emb) = sage_convs(
        x2, adj2,
        heads=[(params["gnn2_pool"]["conv_w"], params["gnn2_pool"]["conv_b"]),
               (params["gnn2_embed"]["conv_w"], params["gnn2_embed"]["conv_b"])])
    sc_p, sh_p = bn_scale_shift(st_pool, count=B2 * N2)
    sc_e, sh_e = bn_scale_shift(st_emb, count=B2 * N2)
    s2 = bn_linear_relu(h_pool, sc_p, sh_p,
                        params["gnn2_pool"]["lin_w"], params["gnn2_pool"]["lin_b"])
    x3, adj3 = dense_diff_pool(h_emb, adj2, s2, sc_e, sh_e)

    # ---- stage 3: gnn3_embed -------------------------------------------------
    B3, N3, _ = x3.shape
    (h3,), (st3,) = sage_convs(
        x3, adj3,
        heads=[(params["gnn3_embed"]["conv_w"], params["gnn3_embed"]["conv_b"])])
    sc3, sh3 = bn_scale_shift(st3, count=B3 * N3)

    # Classifier head: BN apply + node-mean + two tiny Linears (Cout = 32 / 3).
    # Kept in plain JAX: lane-sparse outputs would force masked vst stores and
    # extra kernel launches for negligible compute.
    h3 = h3.astype(jnp.float32) * sc3[:, None, :] + sh3[:, None, :]
    hm = jnp.mean(h3, axis=1)                                  # (B, hidden)
    hm = jax.nn.relu(hm @ params["lin1_w"] + params["lin1_b"])
    return hm @ params["lin2_w"] + params["lin2_b"]


# ----------------------------------------------------------------------------
# Deterministic parameter construction
# ----------------------------------------------------------------------------
def _dense(key, cin, cout, scale=0.1):
    kw, kb = jax.random.split(key)
    w = scale * jax.random.normal(kw, (cin, cout), dtype=jnp.float32)
    b = scale * jax.random.normal(kb, (cout,), dtype=jnp.float32)
    return w, b


def make_diffpool_layer_params(key, cin, cout, with_lin):
    k1, k2 = jax.random.split(key)
    conv_w, conv_b = _dense(k1, cin, cout)
    p = {"conv_w": conv_w, "conv_b": conv_b}
    if with_lin:
        lin_w, lin_b = _dense(k2, cout, cout)
        p["lin_w"] = lin_w
        p["lin_b"] = lin_b
    return p


def make_net_params(key, input_dim, n_classes, max_nodes, hidden_dims,
                    pool_factor=0.5):
    num_nodes1 = ceil(pool_factor * max_nodes)
    num_nodes2 = ceil(pool_factor * num_nodes1)
    expansion = 1  # hidden_channels == []
    keys = jax.random.split(key, 7)
    params = {
        "gnn1_pool": make_diffpool_layer_params(keys[0], input_dim, num_nodes1, True),
        "gnn1_embed": make_diffpool_layer_params(keys[1], input_dim, hidden_dims[0], False),
        "gnn2_pool": make_diffpool_layer_params(keys[2], expansion * hidden_dims[0], num_nodes2, True),
        "gnn2_embed": make_diffpool_layer_params(keys[3], expansion * hidden_dims[0], hidden_dims[1], False),
        "gnn3_embed": make_diffpool_layer_params(keys[4], expansion * hidden_dims[1], hidden_dims[2], False),
    }
    lin1_w, lin1_b = _dense(keys[5], expansion * hidden_dims[2], hidden_dims[3])
    lin2_w, lin2_b = _dense(keys[6], hidden_dims[3], n_classes)
    params.update({"lin1_w": lin1_w, "lin1_b": lin1_b,
                   "lin2_w": lin2_w, "lin2_b": lin2_b})
    return params


# ----------------------------------------------------------------------------
# Demo
# ----------------------------------------------------------------------------
if __name__ == "__main__":
    B, max_nodes, input_dim, n_classes = 2, 16, 8, 3
    hidden_dims = [32, 32, 32, 32]

    root = jax.random.PRNGKey(0)
    k_x, k_adj, k_params = jax.random.split(root, 3)

    x = jax.random.normal(k_x, (B, max_nodes, input_dim), dtype=jnp.float32)
    # random symmetric 0/1 adjacency, zero diagonal
    a = (jax.random.uniform(k_adj, (B, max_nodes, max_nodes)) > 0.6).astype(jnp.float32)
    adj = jnp.clip(a + jnp.swapaxes(a, 1, 2), 0.0, 1.0)
    eye = jnp.eye(max_nodes, dtype=jnp.float32)[None]
    adj = adj * (1.0 - eye)
    # mask: graph 0 fully valid, graph 1 has last 4 nodes masked
    mask = jnp.stack([
        jnp.ones((max_nodes,), dtype=jnp.float32),
        jnp.concatenate([jnp.ones((12,), jnp.float32), jnp.zeros((4,), jnp.float32)]),
    ])

    params = make_net_params(k_params, input_dim, n_classes, max_nodes, hidden_dims)

    forward = jax.jit(diffpool_net_forward)
    logits = forward(params, x, adj, mask)
    logits = jax.block_until_ready(logits)

    assert logits.shape == (B, n_classes)
    assert bool(jnp.all(jnp.isfinite(logits)))
    print("KERNEL_OK")
</pallas_src>

<mosaic_0001>
module attributes {stable_mosaic.version = 11 : i64} {
  func.func @kernel(%arg0: i32, %arg1: memref<1x16x8xf32, #tpu.memory_space<vmem>>, %arg2: memref<1x16x16xbf16, #tpu.memory_space<vmem>>, %arg3: memref<1x16x1xf32, #tpu.memory_space<vmem>>, %arg4: memref<8x8xf32, #tpu.memory_space<vmem>>, %arg5: memref<1x8xf32, #tpu.memory_space<vmem>>, %arg6: memref<8x32xf32, #tpu.memory_space<vmem>>, %arg7: memref<1x32xf32, #tpu.memory_space<vmem>>, %arg8: memref<1x16x8xbf16, #tpu.memory_space<vmem>>, %arg9: memref<1x16x32xbf16, #tpu.memory_space<vmem>>, %arg10: memref<1x2x8xf32, #tpu.memory_space<vmem>>, %arg11: memref<1x2x32xf32, #tpu.memory_space<vmem>>) attributes {dimension_semantics = [#tpu.dimension_semantics<parallel>], iteration_bounds = array<i64: 2>, scalar_prefetch = 0 : i64, scratch_operands = 0 : i64, tpu.core_type = #tpu.core_type<tc>, window_params = [{transform_indices = @transform_0, window_bounds = array<i64: 1, 16, 8>}, {transform_indices = @transform_1, window_bounds = array<i64: 1, 16, 16>}, {transform_indices = @transform_2, window_bounds = array<i64: 1, 16, 1>}, {pipeline_mode = #tpu.pipeline_mode<synchronous>, transform_indices = @transform_3, window_bounds = array<i64: 8, 8>}, {pipeline_mode = #tpu.pipeline_mode<synchronous>, transform_indices = @transform_4, window_bounds = array<i64: 1, 8>}, {pipeline_mode = #tpu.pipeline_mode<synchronous>, transform_indices = @transform_5, window_bounds = array<i64: 8, 32>}, {pipeline_mode = #tpu.pipeline_mode<synchronous>, transform_indices = @transform_6, window_bounds = array<i64: 1, 32>}, {transform_indices = @transform_7, window_bounds = array<i64: 1, 16, 8>}, {transform_indices = @transform_8, window_bounds = array<i64: 1, 16, 32>}, {transform_indices = @transform_9, window_bounds = array<i64: 1, 2, 8>}, {transform_indices = @transform_10, window_bounds = array<i64: 1, 2, 32>}]} {
    %c0 = arith.constant 0 : index
    %c0_0 = arith.constant 0 : index
    %c0_1 = arith.constant 0 : index
    %0 = vector.load %arg1[%c0, %c0_0, %c0_1] : memref<1x16x8xf32, #tpu.memory_space<vmem>>, vector<1x16x8xf32>
    %c0_2 = arith.constant 0 : index
    %c0_3 = arith.constant 0 : index
    %c0_4 = arith.constant 0 : index
    %1 = vector.load %arg2[%c0_2, %c0_3, %c0_4] : memref<1x16x16xbf16, #tpu.memory_space<vmem>>, vector<1x16x16xbf16>
    %2 = arith.truncf %0 : vector<1x16x8xf32> to vector<1x16x8xbf16>
    "tpu.trace_start"() <{level = 10 : i32, message = "bij,bjc->bic"}> : () -> ()
    %cst = arith.constant dense<0.000000e+00> : vector<1x16x8xf32>
    %3 = tpu.matmul %1, %2, %cst {dimension_numbers = #tpu.dot_dimension_numbers<[2], [1], [1], [2], [0, 0, 0, 1, 1, 2], [0], [0]>} : vector<1x16x16xbf16>, vector<1x16x8xbf16>, vector<1x16x8xf32> -> vector<1x16x8xf32>
    "tpu.trace_stop"() : () -> ()
    %4 = arith.extf %1 : vector<1x16x16xbf16> to vector<1x16x16xf32>
    %cst_5 = arith.constant dense<0.000000e+00> : vector<1x16xf32>
    %5 = vector.multi_reduction <add>, %4, %cst_5 [2] : vector<1x16x16xf32> to vector<1x16xf32>
    %6 = vector.shape_cast %5 : vector<1x16xf32> to vector<1x16x1xf32>
    %7 = arith.addf %3, %0 : vector<1x16x8xf32>
    %cst_6 = arith.constant 1.000000e+00 : f32
    %8 = vector.broadcast %cst_6 : f32 to vector<1x16x1xf32>
    %9 = arith.addf %6, %8 : vector<1x16x1xf32>
    %cst_7 = arith.constant 1.000000e+00 : f32
    %10 = vector.broadcast %cst_7 : f32 to vector<1x16x1xf32>
    %11 = arith.maximumf %9, %10 : vector<1x16x1xf32>
    %12 = tpu.reciprocal %11 {approx = true} : vector<1x16x1xf32> -> vector<1x16x1xf32>
    %13 = vector.broadcast %12 : vector<1x16x1xf32> to vector<1x16x8xf32>
    %14 = arith.mulf %7, %13 : vector<1x16x8xf32>
    %15 = vector.shape_cast %14 : vector<1x16x8xf32> to vector<16x8xf32>
    %16 = arith.truncf %15 : vector<16x8xf32> to vector<16x8xbf16>
    %c0_8 = arith.constant 0 : index
    %c0_9 = arith.constant 0 : index
    %c0_10 = arith.constant 0 : index
    %17 = vector.load %arg3[%c0_8, %c0_9, %c0_10] : memref<1x16x1xf32, #tpu.memory_space<vmem>>, vector<1x16x1xf32>
    %18 = vector.shape_cast %17 : vector<1x16x1xf32> to vector<16x1xf32>
    %c0_11 = arith.constant 0 : index
    %c0_12 = arith.constant 0 : index
    %19 = vector.load %arg4[%c0_11, %c0_12] : memref<8x8xf32, #tpu.memory_space<vmem>>, vector<8x8xf32>
    %20 = arith.truncf %19 : vector<8x8xf32> to vector<8x8xbf16>
    %cst_13 = arith.constant dense<0.000000e+00> : vector<16x8xf32>
    %21 = tpu.matmul %16, %20, %cst_13 {dimension_numbers = #tpu.dot_dimension_numbers<[1], [0], [0], [1], [0, 0, 1, 1], [], []>} : vector<16x8xbf16>, vector<8x8xbf16>, vector<16x8xf32> -> vector<16x8xf32>
    %c0_14 = arith.constant 0 : index
    %c0_15 = arith.constant 0 : index
    %22 = vector.load %arg5[%c0_14, %c0_15] : memref<1x8xf32, #tpu.memory_space<vmem>>, vector<1x8xf32>
    %23 = vector.broadcast %22 : vector<1x8xf32> to vector<16x8xf32>
    %24 = arith.addf %21, %23 : vector<16x8xf32>
    %25 = vector.broadcast %18 : vector<16x1xf32> to vector<16x8xf32>
    %26 = arith.mulf %24, %25 : vector<16x8xf32>
    %cst_16 = arith.constant 0.000000e+00 : f32
    %27 = vector.broadcast %cst_16 : f32 to vector<16x8xf32>
    %28 = arith.maximumf %26, %27 : vector<16x8xf32>
    %29 = vector.shape_cast %28 : vector<16x8xf32> to vector<1x16x8xf32>
    %30 = arith.truncf %29 : vector<1x16x8xf32> to vector<1x16x8xbf16>
    %c0_17 = arith.constant 0 : index
    %c0_18 = arith.constant 0 : index
    %c0_19 = arith.constant 0 : index
    %31 = vector.load %arg8[%c0_17, %c0_18, %c0_19] : memref<1x16x8xbf16, #tpu.memory_space<vmem>>, vector<1x16x8xbf16>
    tpu.vector_store %arg8[%c0_17, %c0_18, %c0_19], %30 {strides = array<i32>} : memref<1x16x8xbf16, #tpu.memory_space<vmem>>, vector<1x16x8xbf16>,
    %cst_20 = arith.constant dense<0.000000e+00> : vector<8xf32>
    %32 = vector.multi_reduction <add>, %28, %cst_20 [0] : vector<16x8xf32> to vector<8xf32>
    %33 = vector.shape_cast %32 : vector<8xf32> to vector<1x8xf32>
    %34 = arith.mulf %28, %28 : vector<16x8xf32>
    %cst_21 = arith.constant dense<0.000000e+00> : vector<8xf32>
    %35 = vector.multi_reduction <add>, %34, %cst_21 [0] : vector<16x8xf32> to vector<8xf32>
    %36 = vector.shape_cast %35 : vector<8xf32> to vector<1x8xf32>
    %37 = tpu.concatenate %33, %36 in 0 : vector<1x8xf32>, vector<1x8xf32> -> vector<2x8xf32>
    %38 = vector.shape_cast %37 : vector<2x8xf32> to vector<1x2x8xf32>
    %c0_22 = arith.constant 0 : index
    %c0_23 = arith.constant 0 : index
    %c0_24 = arith.constant 0 : index
    %39 = vector.load %arg10[%c0_22, %c0_23, %c0_24] : memref<1x2x8xf32, #tpu.memory_space<vmem>>, vector<1x2x8xf32>
    tpu.vector_store %arg10[%c0_22, %c0_23, %c0_24], %38 {strides = array<i32>} : memref<1x2x8xf32, #tpu.memory_space<vmem>>, vector<1x2x8xf32>,
    %c0_25 = arith.constant 0 : index
    %c0_26 = arith.constant 0 : index
    %40 = vector.load %arg6[%c0_25, %c0_26] : memref<8x32xf32, #tpu.memory_space<vmem>>, vector<8x32xf32>
    %41 = arith.truncf %40 : vector<8x32xf32> to vector<8x32xbf16>
    %cst_27 = arith.constant dense<0.000000e+00> : vector<16x32xf32>
    %42 = tpu.matmul %16, %41, %cst_27 {dimension_numbers = #tpu.dot_dimension_numbers<[1], [0], [0], [1], [0, 0, 1, 1], [], []>} : vector<16x8xbf16>, vector<8x32xbf16>, vector<16x32xf32> -> vector<16x32xf32>
    %c0_28 = arith.constant 0 : index
    %c0_29 = arith.constant 0 : index
    %43 = vector.load %arg7[%c0_28, %c0_29] : memref<1x32xf32, #tpu.memory_space<vmem>>, vector<1x32xf32>
    %44 = vector.broadcast %43 : vector<1x32xf32> to vector<16x32xf32>
    %45 = arith.addf %42, %44 : vector<16x32xf32>
    %46 = vector.broadcast %18 : vector<16x1xf32> to vector<16x32xf32>
    %47 = arith.mulf %45, %46 : vector<16x32xf32>
    %cst_30 = arith.constant 0.000000e+00 : f32
    %48 = vector.broadcast %cst_30 : f32 to vector<16x32xf32>
    %49 = arith.maximumf %47, %48 : vector<16x32xf32>
    %50 = vector.shape_cast %49 : vector<16x32xf32> to vector<1x16x32xf32>
    %51 = arith.truncf %50 : vector<1x16x32xf32> to vector<1x16x32xbf16>
    %c0_31 = arith.constant 0 : index
    %c0_32 = arith.constant 0 : index
    %c0_33 = arith.constant 0 : index
    %52 = vector.load %arg9[%c0_31, %c0_32, %c0_33] : memref<1x16x32xbf16, #tpu.memory_space<vmem>>, vector<1x16x32xbf16>
    tpu.vector_store %arg9[%c0_31, %c0_32, %c0_33], %51 {strides = array<i32>} : memref<1x16x32xbf16, #tpu.memory_space<vmem>>, vector<1x16x32xbf16>,
    %cst_34 = arith.constant dense<0.000000e+00> : vector<32xf32>
    %53 = vector.multi_reduction <add>, %49, %cst_34 [0] : vector<16x32xf32> to vector<32xf32>
    %54 = vector.shape_cast %53 : vector<32xf32> to vector<1x32xf32>
    %55 = arith.mulf %49, %49 : vector<16x32xf32>
    %cst_35 = arith.constant dense<0.000000e+00> : vector<32xf32>
    %56 = vector.multi_reduction <add>, %55, %cst_35 [0] : vector<16x32xf32> to vector<32xf32>
    %57 = vector.shape_cast %56 : vector<32xf32> to vector<1x32xf32>
    %58 = tpu.concatenate %54, %57 in 0 : vector<1x32xf32>, vector<1x32xf32> -> vector<2x32xf32>
    %59 = vector.shape_cast %58 : vector<2x32xf32> to vector<1x2x32xf32>
    %c0_36 = arith.constant 0 : index
    %c0_37 = arith.constant 0 : index
    %c0_38 = arith.constant 0 : index
    %60 = vector.load %arg11[%c0_36, %c0_37, %c0_38] : memref<1x2x32xf32, #tpu.memory_space<vmem>>, vector<1x2x32xf32>
    tpu.vector_store %arg11[%c0_36, %c0_37, %c0_38], %59 {strides = array<i32>} : memref<1x2x32xf32, #tpu.memory_space<vmem>>, vector<1x2x32xf32>,
    return
  }
  func.func @transform_0(%arg0: i32) -> (i32, i32, i32) {
    %c0_i32 = arith.constant 0 : i32
    %c0_i32_0 = arith.constant 0 : i32
    %c0_i32_1 = arith.constant 0 : i32
    return %arg0, %c0_i32, %c0_i32_0 : i32, i32, i32
  }
  func.func @transform_1(%arg0: i32) -> (i32, i32, i32) {
    %c0_i32 = arith.constant 0 : i32
    %c0_i32_0 = arith.constant 0 : i32
    %c0_i32_1 = arith.constant 0 : i32
    return %arg0, %c0_i32, %c0_i32_0 : i32, i32, i32
  }
  func.func @transform_2(%arg0: i32) -> (i32, i32, i32) {
    %c0_i32 = arith.constant 0 : i32
    %c0_i32_0 = arith.constant 0 : i32
    %c0_i32_1 = arith.constant 0 : i32
    return %arg0, %c0_i32, %c0_i32_0 : i32, i32, i32
  }
  func.func @transform_3(%arg0: i32) -> (i32, i32) {
    %c0_i32 = arith.constant 0 : i32
    %c0_i32_0 = arith.constant 0 : i32
    %c0_i32_1 = arith.constant 0 : i32
    return %c0_i32, %c0_i32_0 : i32, i32
  }
  func.func @transform_4(%arg0: i32) -> (i32, i32) {
    %c0_i32 = arith.constant 0 : i32
    %c0_i32_0 = arith.constant 0 : i32
    %c0_i32_1 = arith.constant 0 : i32
    return %c0_i32, %c0_i32_0 : i32, i32
  }
  func.func @transform_5(%arg0: i32) -> (i32, i32) {
    %c0_i32 = arith.constant 0 : i32
    %c0_i32_0 = arith.constant 0 : i32
    %c0_i32_1 = arith.constant 0 : i32
    return %c0_i32, %c0_i32_0 : i32, i32
  }
  func.func @transform_6(%arg0: i32) -> (i32, i32) {
    %c0_i32 = arith.constant 0 : i32
    %c0_i32_0 = arith.constant 0 : i32
    %c0_i32_1 = arith.constant 0 : i32
    return %c0_i32, %c0_i32_0 : i32, i32
  }
  func.func @transform_7(%arg0: i32) -> (i32, i32, i32) {
    %c0_i32 = arith.constant 0 : i32
    %c0_i32_0 = arith.constant 0 : i32
    %c0_i32_1 = arith.constant 0 : i32
    return %arg0, %c0_i32, %c0_i32_0 : i32, i32, i32
  }
  func.func @transform_8(%arg0: i32) -> (i32, i32, i32) {
    %c0_i32 = arith.constant 0 : i32
    %c0_i32_0 = arith.constant 0 : i32
    %c0_i32_1 = arith.constant 0 : i32
    return %arg0, %c0_i32, %c0_i32_0 : i32, i32, i32
  }
  func.func @transform_9(%arg0: i32) -> (i32, i32, i32) {
    %c0_i32 = arith.constant 0 : i32
    %c0_i32_0 = arith.constant 0 : i32
    %c0_i32_1 = arith.constant 0 : i32
    return %arg0, %c0_i32, %c0_i32_0 : i32, i32, i32
  }
  func.func @transform_10(%arg0: i32) -> (i32, i32, i32) {
    %c0_i32 = arith.constant 0 : i32
    %c0_i32_0 = arith.constant 0 : i32
    %c0_i32_1 = arith.constant 0 : i32
    return %arg0, %c0_i32, %c0_i32_0 : i32, i32, i32
  }
}

module attributes {stable_mosaic.version = 11 : i64} {
  func.func @_bn_linear_relu_kernel(%arg0: i32, %arg1: memref<1x16x8xbf16, #tpu.memory_space<vmem>>, %arg2: memref<1x8xf32, #tpu.memory_space<vmem>>, %arg3: memref<1x8xf32, #tpu.memory_space<vmem>>, %arg4: memref<8x8xf32, #tpu.memory_space<vmem>>, %arg5: memref<1x8xf32, #tpu.memory_space<vmem>>, %arg6: memref<1x16x8xbf16, #tpu.memory_space<vmem>>) attributes {dimension_semantics = [#tpu.dimension_semantics<parallel>], iteration_bounds = array<i64: 2>, scalar_prefetch = 0 : i64, scratch_operands = 0 : i64, tpu.core_type = #tpu.core_type<tc>, window_params = [{transform_indices = @transform_0, window_bounds = array<i64: 1, 16, 8>}, {pipeline_mode = #tpu.pipeline_mode<synchronous>, transform_indices = @transform_1, window_bounds = array<i64: 1, 8>}, {pipeline_mode = #tpu.pipeline_mode<synchronous>, transform_indices = @transform_2, window_bounds = array<i64: 1, 8>}, {pipeline_mode = #tpu.pipeline_mode<synchronous>, transform_indices = @transform_3, window_bounds = array<i64: 8, 8>}, {pipeline_mode = #tpu.pipeline_mode<synchronous>, transform_indices = @transform_4, window_bounds = array<i64: 1, 8>}, {transform_indices = @transform_5, window_bounds = array<i64: 1, 16, 8>}]} {
    %c0 = arith.constant 0 : index
    %c0_0 = arith.constant 0 : index
    %c0_1 = arith.constant 0 : index
    %0 = vector.load %arg1[%c0, %c0_0, %c0_1] : memref<1x16x8xbf16, #tpu.memory_space<vmem>>, vector<1x16x8xbf16>
    %1 = arith.extf %0 : vector<1x16x8xbf16> to vector<1x16x8xf32>
    %2 = vector.shape_cast %1 : vector<1x16x8xf32> to vector<16x8xf32>
    %c0_2 = arith.constant 0 : index
    %c0_3 = arith.constant 0 : index
    %3 = vector.load %arg2[%c0_2, %c0_3] : memref<1x8xf32, #tpu.memory_space<vmem>>, vector<1x8xf32>
    %4 = vector.broadcast %3 : vector<1x8xf32> to vector<16x8xf32>
    %5 = arith.mulf %2, %4 : vector<16x8xf32>
    %c0_4 = arith.constant 0 : index
    %c0_5 = arith.constant 0 : index
    %6 = vector.load %arg3[%c0_4, %c0_5] : memref<1x8xf32, #tpu.memory_space<vmem>>, vector<1x8xf32>
    %7 = vector.broadcast %6 : vector<1x8xf32> to vector<16x8xf32>
    %8 = arith.addf %5, %7 : vector<16x8xf32>
    %9 = arith.truncf %8 : vector<16x8xf32> to vector<16x8xbf16>
    %c0_6 = arith.constant 0 : index
    %c0_7 = arith.constant 0 : index
    %10 = vector.load %arg4[%c0_6, %c0_7] : memref<8x8xf32, #tpu.memory_space<vmem>>, vector<8x8xf32>
    %11 = arith.truncf %10 : vector<8x8xf32> to vector<8x8xbf16>
    %cst = arith.constant dense<0.000000e+00> : vector<16x8xf32>
    %12 = tpu.matmul %9, %11, %cst {dimension_numbers = #tpu.dot_dimension_numbers<[1], [0], [0], [1], [0, 0, 1, 1], [], []>} : vector<16x8xbf16>, vector<8x8xbf16>, vector<16x8xf32> -> vector<16x8xf32>
    %c0_8 = arith.constant 0 : index
    %c0_9 = arith.constant 0 : index
    %13 = vector.load %arg5[%c0_8, %c0_9] : memref<1x8xf32, #tpu.memory_space<vmem>>, vector<1x8xf32>
    %14 = vector.broadcast %13 : vector<1x8xf32> to vector<16x8xf32>
    %15 = arith.addf %12, %14 : vector<16x8xf32>
    %cst_10 = arith.constant 0.000000e+00 : f32
    %16 = vector.broadcast %cst_10 : f32 to vector<16x8xf32>
    %17 = arith.maximumf %15, %16 : vector<16x8xf32>
    %18 = vector.shape_cast %17 : vector<16x8xf32> to vector<1x16x8xf32>
    %19 = arith.truncf %18 : vector<1x16x8xf32> to vector<1x16x8xbf16>
    %c0_11 = arith.constant 0 : index
    %c0_12 = arith.constant 0 : index
    %c0_13 = arith.constant 0 : index
    %20 = vector.load %arg6[%c0_11, %c0_12, %c0_13] : memref<1x16x8xbf16, #tpu.memory_space<vmem>>, vector<1x16x8xbf16>
    tpu.vector_store %arg6[%c0_11, %c0_12, %c0_13], %19 {strides = array<i32>} : memref<1x16x8xbf16, #tpu.memory_space<vmem>>, vector<1x16x8xbf16>,
    return
  }
  func.func @transform_0(%arg0: i32) -> (i32, i32, i32) {
    %c0_i32 = arith.constant 0 : i32
    %c0_i32_0 = arith.constant 0 : i32
    %c0_i32_1 = arith.constant 0 : i32
    return %arg0, %c0_i32, %c0_i32_0 : i32, i32, i32
  }
  func.func @transform_1(%arg0: i32) -> (i32, i32) {
    %c0_i32 = arith.constant 0 : i32
    %c0_i32_0 = arith.constant 0 : i32
    %c0_i32_1 = arith.constant 0 : i32
    return %c0_i32, %c0_i32_0 : i32, i32
  }
  func.func @transform_2(%arg0: i32) -> (i32, i32) {
    %c0_i32 = arith.constant 0 : i32
    %c0_i32_0 = arith.constant 0 : i32
    %c0_i32_1 = arith.constant 0 : i32
    return %c0_i32, %c0_i32_0 : i32, i32
  }
  func.func @transform_3(%arg0: i32) -> (i32, i32) {
    %c0_i32 = arith.constant 0 : i32
    %c0_i32_0 = arith.constant 0 : i32
    %c0_i32_1 = arith.constant 0 : i32
    return %c0_i32, %c0_i32_0 : i32, i32
  }
  func.func @transform_4(%arg0: i32) -> (i32, i32) {
    %c0_i32 = arith.constant 0 : i32
    %c0_i32_0 = arith.constant 0 : i32
    %c0_i32_1 = arith.constant 0 : i32
    return %c0_i32, %c0_i32_0 : i32, i32
  }
  func.func @transform_5(%arg0: i32) -> (i32, i32, i32) {
    %c0_i32 = arith.constant 0 : i32
    %c0_i32_0 = arith.constant 0 : i32
    %c0_i32_1 = arith.constant 0 : i32
    return %arg0, %c0_i32, %c0_i32_0 : i32, i32, i32
  }
}

module attributes {stable_mosaic.version = 11 : i64} {
  func.func @kernel(%arg0: i32, %arg1: memref<1x16x32xbf16, #tpu.memory_space<vmem>>, %arg2: memref<1x16x16xbf16, #tpu.memory_space<vmem>>, %arg3: memref<1x16x8xbf16, #tpu.memory_space<vmem>>, %arg4: memref<1x32xf32, #tpu.memory_space<vmem>>, %arg5: memref<1x32xf32, #tpu.memory_space<vmem>>, %arg6: memref<1x16x1xf32, #tpu.memory_space<vmem>>, %arg7: memref<1x8x32xbf16, #tpu.memory_space<vmem>>, %arg8: memref<1x8x8xf32, #tpu.memory_space<vmem>>) attributes {dimension_semantics = [#tpu.dimension_semantics<parallel>], iteration_bounds = array<i64: 2>, scalar_prefetch = 0 : i64, scratch_operands = 0 : i64, tpu.core_type = #tpu.core_type<tc>, window_params = [{transform_indices = @transform_0, window_bounds = array<i64: 1, 16, 32>}, {transform_indices = @transform_1, window_bounds = array<i64: 1, 16, 16>}, {transform_indices = @transform_2, window_bounds = array<i64: 1, 16, 8>}, {pipeline_mode = #tpu.pipeline_mode<synchronous>, transform_indices = @transform_3, window_bounds = array<i64: 1, 32>}, {pipeline_mode = #tpu.pipeline_mode<synchronous>, transform_indices = @transform_4, window_bounds = array<i64: 1, 32>}, {transform_indices = @transform_5, window_bounds = array<i64: 1, 16, 1>}, {transform_indices = @transform_6, window_bounds = array<i64: 1, 8, 32>}, {transform_indices = @transform_7, window_bounds = array<i64: 1, 8, 8>}]} {
    %c0 = arith.constant 0 : index
    %c0_0 = arith.constant 0 : index
    %0 = vector.load %arg4[%c0, %c0_0] : memref<1x32xf32, #tpu.memory_space<vmem>>, vector<1x32xf32>
    %c0_1 = arith.constant 0 : index
    %c0_2 = arith.constant 0 : index
    %1 = vector.load %arg5[%c0_1, %c0_2] : memref<1x32xf32, #tpu.memory_space<vmem>>, vector<1x32xf32>
    %c0_3 = arith.constant 0 : index
    %c0_4 = arith.constant 0 : index
    %c0_5 = arith.constant 0 : index
    %2 = vector.load %arg1[%c0_3, %c0_4, %c0_5] : memref<1x16x32xbf16, #tpu.memory_space<vmem>>, vector<1x16x32xbf16>
    %3 = vector.shape_cast %2 : vector<1x16x32xbf16> to vector<16x32xbf16>
    %4 = arith.extf %3 : vector<16x32xbf16> to vector<16x32xf32>
    %5 = vector.broadcast %0 : vector<1x32xf32> to vector<16x32xf32>
    %6 = arith.mulf %4, %5 : vector<16x32xf32>
    %7 = vector.broadcast %1 : vector<1x32xf32> to vector<16x32xf32>
    %8 = arith.addf %6, %7 : vector<16x32xf32>
    %c0_6 = arith.constant 0 : index
    %c0_7 = arith.constant 0 : index
    %c0_8 = arith.constant 0 : index
    %9 = vector.load %arg3[%c0_6, %c0_7, %c0_8] : memref<1x16x8xbf16, #tpu.memory_space<vmem>>, vector<1x16x8xbf16>
    %10 = vector.shape_cast %9 : vector<1x16x8xbf16> to vector<16x8xbf16>
    %11 = arith.extf %10 : vector<16x8xbf16> to vector<16x8xf32>
    %cst = arith.constant dense<0xFF800000> : vector<16xf32>
    %12 = vector.multi_reduction <maximumf>, %11, %cst [1] : vector<16x8xf32> to vector<16xf32>
    %cst_9 = arith.constant 0xFF800000 : f32
    %13 = vector.broadcast %cst_9 : f32 to vector<16xf32>
    %14 = arith.maximumf %13, %12 : vector<16xf32>
    %15 = vector.shape_cast %14 : vector<16xf32> to vector<16x1xf32>
    %16 = vector.broadcast %15 : vector<16x1xf32> to vector<16x8xf32>
    %17 = arith.subf %11, %16 : vector<16x8xf32>
    %18 = math.exp %17 : vector<16x8xf32>
    %cst_10 = arith.constant dense<0.000000e+00> : vector<16xf32>
    %19 = vector.multi_reduction <add>, %18, %cst_10 [1] : vector<16x8xf32> to vector<16xf32>
    %20 = vector.shape_cast %19 : vector<16xf32> to vector<16x1xf32>
    %21 = vector.broadcast %20 : vector<16x1xf32> to vector<16x8xf32>
    %22 = arith.divf %18, %21 : vector<16x8xf32>
    %c0_11 = arith.constant 0 : index
    %c0_12 = arith.constant 0 : index
    %c0_13 = arith.constant 0 : index
    %23 = vector.load %arg6[%c0_11, %c0_12, %c0_13] : memref<1x16x1xf32, #tpu.memory_space<vmem>>, vector<1x16x1xf32>
    %24 = vector.shape_cast %23 : vector<1x16x1xf32> to vector<16x1xf32>
    %25 = vector.broadcast %24 : vector<16x1xf32> to vector<16x32xf32>
    %26 = arith.mulf %8, %25 : vector<16x32xf32>
    %27 = vector.broadcast %24 : vector<16x1xf32> to vector<16x8xf32>
    %28 = arith.mulf %22, %27 : vector<16x8xf32>
    %29 = tpu.transpose %28, [1, 0] : vector<16x8xf32> -> vector<8x16xf32>
    %30 = arith.truncf %29 : vector<8x16xf32> to vector<8x16xbf16>
    %31 = arith.truncf %28 : vector<16x8xf32> to vector<16x8xbf16>
    %c0_14 = arith.constant 0 : index
    %c0_15 = arith.constant 0 : index
    %c0_16 = arith.constant 0 : index
    %32 = vector.load %arg2[%c0_14, %c0_15, %c0_16] : memref<1x16x16xbf16, #tpu.memory_space<vmem>>, vector<1x16x16xbf16>
    %33 = vector.shape_cast %32 : vector<1x16x16xbf16> to vector<16x16xbf16>
    %34 = arith.truncf %26 : vector<16x32xf32> to vector<16x32xbf16>
    %cst_17 = arith.constant dense<0.000000e+00> : vector<8x32xf32>
    %35 = tpu.matmul %30, %34, %cst_17 {dimension_numbers = #tpu.dot_dimension_numbers<[1], [0], [0], [1], [0, 0, 1, 1], [], []>} : vector<8x16xbf16>, vector<16x32xbf16>, vector<8x32xf32> -> vector<8x32xf32>
    %cst_18 = arith.constant dense<0.000000e+00> : vector<8x16xf32>
    %36 = tpu.matmul %30, %33, %cst_18 {dimension_numbers = #tpu.dot_dimension_numbers<[1], [0], [0], [1], [0, 0, 1, 1], [], []>} : vector<8x16xbf16>, vector<16x16xbf16>, vector<8x16xf32> -> vector<8x16xf32>
    %37 = arith.truncf %36 : vector<8x16xf32> to vector<8x16xbf16>
    %cst_19 = arith.constant dense<0.000000e+00> : vector<8x8xf32>
    %38 = tpu.matmul %37, %31, %cst_19 {dimension_numbers = #tpu.dot_dimension_numbers<[1], [0], [0], [1], [0, 0, 1, 1], [], []>} : vector<8x16xbf16>, vector<16x8xbf16>, vector<8x8xf32> -> vector<8x8xf32>
    %39 = arith.truncf %35 : vector<8x32xf32> to vector<8x32xbf16>
    %c0_20 = arith.constant 0 : index
    %c0_21 = arith.constant 0 : index
    %c0_22 = arith.constant 0 : index
    %40 = vector.load %arg7[%c0_20, %c0_21, %c0_22] : memref<1x8x32xbf16, #tpu.memory_space<vmem>>, vector<1x8x32xbf16>
    %41 = vector.shape_cast %40 : vector<1x8x32xbf16> to vector<8x32xbf16>
    %42 = vector.shape_cast %39 : vector<8x32xbf16> to vector<1x8x32xbf16>
    tpu.vector_store %arg7[%c0_20, %c0_21, %c0_22], %42 {strides = array<i32>} : memref<1x8x32xbf16, #tpu.memory_space<vmem>>, vector<1x8x32xbf16>,
    %c0_23 = arith.constant 0 : index
    %c0_24 = arith.constant 0 : index
    %c0_25 = arith.constant 0 : index
    %43 = vector.load %arg8[%c0_23, %c0_24, %c0_25] : memref<1x8x8xf32, #tpu.memory_space<vmem>>, vector<1x8x8xf32>
    %44 = vector.shape_cast %43 : vector<1x8x8xf32> to vector<8x8xf32>
    %45 = vector.shape_cast %38 : vector<8x8xf32> to vector<1x8x8xf32>
    tpu.vector_store %arg8[%c0_23, %c0_24, %c0_25], %45 {strides = array<i32>} : memref<1x8x8xf32, #tpu.memory_space<vmem>>, vector<1x8x8xf32>,
    return
  }
  func.func @transform_0(%arg0: i32) -> (i32, i32, i32) {
    %c0_i32 = arith.constant 0 : i32
    %c0_i32_0 = arith.constant 0 : i32
    %c0_i32_1 = arith.constant 0 : i32
    return %arg0, %c0_i32, %c0_i32_0 : i32, i32, i32
  }
  func.func @transform_1(%arg0: i32) -> (i32, i32, i32) {
    %c0_i32 = arith.constant 0 : i32
    %c0_i32_0 = arith.constant 0 : i32
    %c0_i32_1 = arith.constant 0 : i32
    return %arg0, %c0_i32, %c0_i32_0 : i32, i32, i32
  }
  func.func @transform_2(%arg0: i32) -> (i32, i32, i32) {
    %c0_i32 = arith.constant 0 : i32
    %c0_i32_0 = arith.constant 0 : i32
    %c0_i32_1 = arith.constant 0 : i32
    return %arg0, %c0_i32, %c0_i32_0 : i32, i32, i32
  }
  func.func @transform_3(%arg0: i32) -> (i32, i32) {
    %c0_i32 = arith.constant 0 : i32
    %c0_i32_0 = arith.constant 0 : i32
    %c0_i32_1 = arith.constant 0 : i32
    return %c0_i32, %c0_i32_0 : i32, i32
  }
  func.func @transform_4(%arg0: i32) -> (i32, i32) {
    %c0_i32 = arith.constant 0 : i32
    %c0_i32_0 = arith.constant 0 : i32
    %c0_i32_1 = arith.constant 0 : i32
    return %c0_i32, %c0_i32_0 : i32, i32
  }
  func.func @transform_5(%arg0: i32) -> (i32, i32, i32) {
    %c0_i32 = arith.constant 0 : i32
    %c0_i32_0 = arith.constant 0 : i32
    %c0_i32_1 = arith.constant 0 : i32
    return %arg0, %c0_i32, %c0_i32_0 : i32, i32, i32
  }
  func.func @transform_6(%arg0: i32) -> (i32, i32, i32) {
    %c0_i32 = arith.constant 0 : i32
    %c0_i32_0 = arith.constant 0 : i32
    %c0_i32_1 = arith.constant 0 : i32
    return %arg0, %c0_i32, %c0_i32_0 : i32, i32, i32
  }
  func.func @transform_7(%arg0: i32) -> (i32, i32, i32) {
    %c0_i32 = arith.constant 0 : i32
    %c0_i32_0 = arith.constant 0 : i32
    %c0_i32_1 = arith.constant 0 : i32
    return %arg0, %c0_i32, %c0_i32_0 : i32, i32, i32
  }
}

module attributes {stable_mosaic.version = 11 : i64} {
  func.func @kernel(%arg0: i32, %arg1: memref<1x8x32xbf16, #tpu.memory_space<vmem>>, %arg2: memref<1x8x8xf32, #tpu.memory_space<vmem>>, %arg3: memref<32x4xf32, #tpu.memory_space<vmem>>, %arg4: memref<1x4xf32, #tpu.memory_space<vmem>>, %arg5: memref<32x32xf32, #tpu.memory_space<vmem>>, %arg6: memref<1x32xf32, #tpu.memory_space<vmem>>, %arg7: memref<1x8x4xbf16, #tpu.memory_space<vmem>>, %arg8: memref<1x8x32xbf16, #tpu.memory_space<vmem>>, %arg9: memref<1x2x4xf32, #tpu.memory_space<vmem>>, %arg10: memref<1x2x32xf32, #tpu.memory_space<vmem>>) attributes {dimension_semantics = [#tpu.dimension_semantics<parallel>], iteration_bounds = array<i64: 2>, scalar_prefetch = 0 : i64, scratch_operands = 0 : i64, tpu.core_type = #tpu.core_type<tc>, window_params = [{transform_indices = @transform_0, window_bounds = array<i64: 1, 8, 32>}, {transform_indices = @transform_1, window_bounds = array<i64: 1, 8, 8>}, {pipeline_mode = #tpu.pipeline_mode<synchronous>, transform_indices = @transform_2, window_bounds = array<i64: 32, 4>}, {pipeline_mode = #tpu.pipeline_mode<synchronous>, transform_indices = @transform_3, window_bounds = array<i64: 1, 4>}, {pipeline_mode = #tpu.pipeline_mode<synchronous>, transform_indices = @transform_4, window_bounds = array<i64: 32, 32>}, {pipeline_mode = #tpu.pipeline_mode<synchronous>, transform_indices = @transform_5, window_bounds = array<i64: 1, 32>}, {transform_indices = @transform_6, window_bounds = array<i64: 1, 8, 4>}, {transform_indices = @transform_7, window_bounds = array<i64: 1, 8, 32>}, {transform_indices = @transform_8, window_bounds = array<i64: 1, 2, 4>}, {transform_indices = @transform_9, window_bounds = array<i64: 1, 2, 32>}]} {
    %c0 = arith.constant 0 : index
    %c0_0 = arith.constant 0 : index
    %c0_1 = arith.constant 0 : index
    %0 = vector.load %arg1[%c0, %c0_0, %c0_1] : memref<1x8x32xbf16, #tpu.memory_space<vmem>>, vector<1x8x32xbf16>
    %c0_2 = arith.constant 0 : index
    %c0_3 = arith.constant 0 : index
    %c0_4 = arith.constant 0 : index
    %1 = vector.load %arg2[%c0_2, %c0_3, %c0_4] : memref<1x8x8xf32, #tpu.memory_space<vmem>>, vector<1x8x8xf32>
    %2 = arith.truncf %1 : vector<1x8x8xf32> to vector<1x8x8xbf16>
    "tpu.trace_start"() <{level = 10 : i32, message = "bij,bjc->bic"}> : () -> ()
    %cst = arith.constant dense<0.000000e+00> : vector<1x8x32xf32>
    %3 = tpu.matmul %2, %0, %cst {dimension_numbers = #tpu.dot_dimension_numbers<[2], [1], [1], [2], [0, 0, 0, 1, 1, 2], [0], [0]>} : vector<1x8x8xbf16>, vector<1x8x32xbf16>, vector<1x8x32xf32> -> vector<1x8x32xf32>
    "tpu.trace_stop"() : () -> ()
    %4 = arith.extf %2 : vector<1x8x8xbf16> to vector<1x8x8xf32>
    %cst_5 = arith.constant dense<0.000000e+00> : vector<1x8xf32>
    %5 = vector.multi_reduction <add>, %4, %cst_5 [2] : vector<1x8x8xf32> to vector<1x8xf32>
    %6 = vector.shape_cast %5 : vector<1x8xf32> to vector<1x8x1xf32>
    %cst_6 = arith.constant 1.000000e+00 : f32
    %7 = vector.broadcast %cst_6 : f32 to vector<1x8x1xf32>
    %8 = arith.maximumf %6, %7 : vector<1x8x1xf32>
    %9 = tpu.reciprocal %8 {approx = true} : vector<1x8x1xf32> -> vector<1x8x1xf32>
    %10 = vector.broadcast %9 : vector<1x8x1xf32> to vector<1x8x32xf32>
    %11 = arith.mulf %3, %10 : vector<1x8x32xf32>
    %12 = vector.shape_cast %11 : vector<1x8x32xf32> to vector<8x32xf32>
    %13 = arith.truncf %12 : vector<8x32xf32> to vector<8x32xbf16>
    %c0_7 = arith.constant 0 : index
    %c0_8 = arith.constant 0 : index
    %14 = vector.load %arg3[%c0_7, %c0_8] : memref<32x4xf32, #tpu.memory_space<vmem>>, vector<32x4xf32>
    %15 = arith.truncf %14 : vector<32x4xf32> to vector<32x4xbf16>
    %cst_9 = arith.constant dense<0.000000e+00> : vector<8x4xf32>
    %16 = tpu.matmul %13, %15, %cst_9 {dimension_numbers = #tpu.dot_dimension_numbers<[1], [0], [0], [1], [0, 0, 1, 1], [], []>} : vector<8x32xbf16>, vector<32x4xbf16>, vector<8x4xf32> -> vector<8x4xf32>
    %c0_10 = arith.constant 0 : index
    %c0_11 = arith.constant 0 : index
    %17 = vector.load %arg4[%c0_10, %c0_11] : memref<1x4xf32, #tpu.memory_space<vmem>>, vector<1x4xf32>
    %18 = vector.broadcast %17 : vector<1x4xf32> to vector<8x4xf32>
    %19 = arith.addf %16, %18 : vector<8x4xf32>
    %cst_12 = arith.constant 0.000000e+00 : f32
    %20 = vector.broadcast %cst_12 : f32 to vector<8x4xf32>
    %21 = arith.maximumf %19, %20 : vector<8x4xf32>
    %22 = vector.shape_cast %21 : vector<8x4xf32> to vector<1x8x4xf32>
    %23 = arith.truncf %22 : vector<1x8x4xf32> to vector<1x8x4xbf16>
    %c0_13 = arith.constant 0 : index
    %c0_14 = arith.constant 0 : index
    %c0_15 = arith.constant 0 : index
    %24 = vector.load %arg7[%c0_13, %c0_14, %c0_15] : memref<1x8x4xbf16, #tpu.memory_space<vmem>>, vector<1x8x4xbf16>
    tpu.vector_store %arg7[%c0_13, %c0_14, %c0_15], %23 {strides = array<i32>} : memref<1x8x4xbf16, #tpu.memory_space<vmem>>, vector<1x8x4xbf16>,
    %cst_16 = arith.constant dense<0.000000e+00> : vector<4xf32>
    %25 = vector.multi_reduction <add>, %21, %cst_16 [0] : vector<8x4xf32> to vector<4xf32>
    %26 = vector.shape_cast %25 : vector<4xf32> to vector<1x4xf32>
    %27 = arith.mulf %21, %21 : vector<8x4xf32>
    %cst_17 = arith.constant dense<0.000000e+00> : vector<4xf32>
    %28 = vector.multi_reduction <add>, %27, %cst_17 [0] : vector<8x4xf32> to vector<4xf32>
    %29 = vector.shape_cast %28 : vector<4xf32> to vector<1x4xf32>
    %30 = tpu.concatenate %26, %29 in 0 : vector<1x4xf32>, vector<1x4xf32> -> vector<2x4xf32>
    %31 = vector.shape_cast %30 : vector<2x4xf32> to vector<1x2x4xf32>
    %c0_18 = arith.constant 0 : index
    %c0_19 = arith.constant 0 : index
    %c0_20 = arith.constant 0 : index
    %32 = vector.load %arg9[%c0_18, %c0_19, %c0_20] : memref<1x2x4xf32, #tpu.memory_space<vmem>>, vector<1x2x4xf32>
    tpu.vector_store %arg9[%c0_18, %c0_19, %c0_20], %31 {strides = array<i32>} : memref<1x2x4xf32, #tpu.memory_space<vmem>>, vector<1x2x4xf32>,
    %c0_21 = arith.constant 0 : index
    %c0_22 = arith.constant 0 : index
    %33 = vector.load %arg5[%c0_21, %c0_22] : memref<32x32xf32, #tpu.memory_space<vmem>>, vector<32x32xf32>
    %34 = arith.truncf %33 : vector<32x32xf32> to vector<32x32xbf16>
    %cst_23 = arith.constant dense<0.000000e+00> : vector<8x32xf32>
    %35 = tpu.matmul %13, %34, %cst_23 {dimension_numbers = #tpu.dot_dimension_numbers<[1], [0], [0], [1], [0, 0, 1, 1], [], []>} : vector<8x32xbf16>, vector<32x32xbf16>, vector<8x32xf32> -> vector<8x32xf32>
    %c0_24 = arith.constant 0 : index
    %c0_25 = arith.constant 0 : index
    %36 = vector.load %arg6[%c0_24, %c0_25] : memref<1x32xf32, #tpu.memory_space<vmem>>, vector<1x32xf32>
    %37 = vector.broadcast %36 : vector<1x32xf32> to vector<8x32xf32>
    %38 = arith.addf %35, %37 : vector<8x32xf32>
    %cst_26 = arith.constant 0.000000e+00 : f32
    %39 = vector.broadcast %cst_26 : f32 to vector<8x32xf32>
    %40 = arith.maximumf %38, %39 : vector<8x32xf32>
    %41 = vector.shape_cast %40 : vector<8x32xf32> to vector<1x8x32xf32>
    %42 = arith.truncf %41 : vector<1x8x32xf32> to vector<1x8x32xbf16>
    %c0_27 = arith.constant 0 : index
    %c0_28 = arith.constant 0 : index
    %c0_29 = arith.constant 0 : index
    %43 = vector.load %arg8[%c0_27, %c0_28, %c0_29] : memref<1x8x32xbf16, #tpu.memory_space<vmem>>, vector<1x8x32xbf16>
    tpu.vector_store %arg8[%c0_27, %c0_28, %c0_29], %42 {strides = array<i32>} : memref<1x8x32xbf16, #tpu.memory_space<vmem>>, vector<1x8x32xbf16>,
    %cst_30 = arith.constant dense<0.000000e+00> : vector<32xf32>
    %44 = vector.multi_reduction <add>, %40, %cst_30 [0] : vector<8x32xf32> to vector<32xf32>
    %45 = vector.shape_cast %44 : vector<32xf32> to vector<1x32xf32>
    %46 = arith.mulf %40, %40 : vector<8x32xf32>
    %cst_31 = arith.constant dense<0.000000e+00> : vector<32xf32>
    %47 = vector.multi_reduction <add>, %46, %cst_31 [0] : vector<8x32xf32> to vector<32xf32>
    %48 = vector.shape_cast %47 : vector<32xf32> to vector<1x32xf32>
    %49 = tpu.concatenate %45, %48 in 0 : vector<1x32xf32>, vector<1x32xf32> -> vector<2x32xf32>
    %50 = vector.shape_cast %49 : vector<2x32xf32> to vector<1x2x32xf32>
    %c0_32 = arith.constant 0 : index
    %c0_33 = arith.constant 0 : index
    %c0_34 = arith.constant 0 : index
    %51 = vector.load %arg10[%c0_32, %c0_33, %c0_34] : memref<1x2x32xf32, #tpu.memory_space<vmem>>, vector<1x2x32xf32>
    tpu.vector_store %arg10[%c0_32, %c0_33, %c0_34], %50 {strides = array<i32>} : memref<1x2x32xf32, #tpu.memory_space<vmem>>, vector<1x2x32xf32>,
    return
  }
  func.func @transform_0(%arg0: i32) -> (i32, i32, i32) {
    %c0_i32 = arith.constant 0 : i32
    %c0_i32_0 = arith.constant 0 : i32
    %c0_i32_1 = arith.constant 0 : i32
    return %arg0, %c0_i32, %c0_i32_0 : i32, i32, i32
  }
  func.func @transform_1(%arg0: i32) -> (i32, i32, i32) {
    %c0_i32 = arith.constant 0 : i32
    %c0_i32_0 = arith.constant 0 : i32
    %c0_i32_1 = arith.constant 0 : i32
    return %arg0, %c0_i32, %c0_i32_0 : i32, i32, i32
  }
  func.func @transform_2(%arg0: i32) -> (i32, i32) {
    %c0_i32 = arith.constant 0 : i32
    %c0_i32_0 = arith.constant 0 : i32
    %c0_i32_1 = arith.constant 0 : i32
    return %c0_i32, %c0_i32_0 : i32, i32
  }
  func.func @transform_3(%arg0: i32) -> (i32, i32) {
    %c0_i32 = arith.constant 0 : i32
    %c0_i32_0 = arith.constant 0 : i32
    %c0_i32_1 = arith.constant 0 : i32
    return %c0_i32, %c0_i32_0 : i32, i32
  }
  func.func @transform_4(%arg0: i32) -> (i32, i32) {
    %c0_i32 = arith.constant 0 : i32
    %c0_i32_0 = arith.constant 0 : i32
    %c0_i32_1 = arith.constant 0 : i32
    return %c0_i32, %c0_i32_0 : i32, i32
  }
  func.func @transform_5(%arg0: i32) -> (i32, i32) {
    %c0_i32 = arith.constant 0 : i32
    %c0_i32_0 = arith.constant 0 : i32
    %c0_i32_1 = arith.constant 0 : i32
    return %c0_i32, %c0_i32_0 : i32, i32
  }
  func.func @transform_6(%arg0: i32) -> (i32, i32, i32) {
    %c0_i32 = arith.constant 0 : i32
    %c0_i32_0 = arith.constant 0 : i32
    %c0_i32_1 = arith.constant 0 : i32
    return %arg0, %c0_i32, %c0_i32_0 : i32, i32, i32
  }
  func.func @transform_7(%arg0: i32) -> (i32, i32, i32) {
    %c0_i32 = arith.constant 0 : i32
    %c0_i32_0 = arith.constant 0 : i32
    %c0_i32_1 = arith.constant 0 : i32
    return %arg0, %c0_i32, %c0_i32_0 : i32, i32, i32
  }
  func.func @transform_8(%arg0: i32) -> (i32, i32, i32) {
    %c0_i32 = arith.constant 0 : i32
    %c0_i32_0 = arith.constant 0 : i32
    %c0_i32_1 = arith.constant 0 : i32
    return %arg0, %c0_i32, %c0_i32_0 : i32, i32, i32
  }
  func.func @transform_9(%arg0: i32) -> (i32, i32, i32) {
    %c0_i32 = arith.constant 0 : i32
    %c0_i32_0 = arith.constant 0 : i32
    %c0_i32_1 = arith.constant 0 : i32
    return %arg0, %c0_i32, %c0_i32_0 : i32, i32, i32
  }
}

module attributes {stable_mosaic.version = 11 : i64} {
  func.func @_bn_linear_relu_kernel(%arg0: i32, %arg1: memref<1x8x4xbf16, #tpu.memory_space<vmem>>, %arg2: memref<1x4xf32, #tpu.memory_space<vmem>>, %arg3: memref<1x4xf32, #tpu.memory_space<vmem>>, %arg4: memref<4x4xf32, #tpu.memory_space<vmem>>, %arg5: memref<1x4xf32, #tpu.memory_space<vmem>>, %arg6: memref<1x8x4xbf16, #tpu.memory_space<vmem>>) attributes {dimension_semantics = [#tpu.dimension_semantics<parallel>], iteration_bounds = array<i64: 2>, scalar_prefetch = 0 : i64, scratch_operands = 0 : i64, tpu.core_type = #tpu.core_type<tc>, window_params = [{transform_indices = @transform_0, window_bounds = array<i64: 1, 8, 4>}, {pipeline_mode = #tpu.pipeline_mode<synchronous>, transform_indices = @transform_1, window_bounds = array<i64: 1, 4>}, {pipeline_mode = #tpu.pipeline_mode<synchronous>, transform_indices = @transform_2, window_bounds = array<i64: 1, 4>}, {pipeline_mode = #tpu.pipeline_mode<synchronous>, transform_indices = @transform_3, window_bounds = array<i64: 4, 4>}, {pipeline_mode = #tpu.pipeline_mode<synchronous>, transform_indices = @transform_4, window_bounds = array<i64: 1, 4>}, {transform_indices = @transform_5, window_bounds = array<i64: 1, 8, 4>}]} {
    %c0 = arith.constant 0 : index
    %c0_0 = arith.constant 0 : index
    %c0_1 = arith.constant 0 : index
    %0 = vector.load %arg1[%c0, %c0_0, %c0_1] : memref<1x8x4xbf16, #tpu.memory_space<vmem>>, vector<1x8x4xbf16>
    %1 = arith.extf %0 : vector<1x8x4xbf16> to vector<1x8x4xf32>
    %2 = vector.shape_cast %1 : vector<1x8x4xf32> to vector<8x4xf32>
    %c0_2 = arith.constant 0 : index
    %c0_3 = arith.constant 0 : index
    %3 = vector.load %arg2[%c0_2, %c0_3] : memref<1x4xf32, #tpu.memory_space<vmem>>, vector<1x4xf32>
    %4 = vector.broadcast %3 : vector<1x4xf32> to vector<8x4xf32>
    %5 = arith.mulf %2, %4 : vector<8x4xf32>
    %c0_4 = arith.constant 0 : index
    %c0_5 = arith.constant 0 : index
    %6 = vector.load %arg3[%c0_4, %c0_5] : memref<1x4xf32, #tpu.memory_space<vmem>>, vector<1x4xf32>
    %7 = vector.broadcast %6 : vector<1x4xf32> to vector<8x4xf32>
    %8 = arith.addf %5, %7 : vector<8x4xf32>
    %9 = arith.truncf %8 : vector<8x4xf32> to vector<8x4xbf16>
    %c0_6 = arith.constant 0 : index
    %c0_7 = arith.constant 0 : index
    %10 = vector.load %arg4[%c0_6, %c0_7] : memref<4x4xf32, #tpu.memory_space<vmem>>, vector<4x4xf32>
    %11 = arith.truncf %10 : vector<4x4xf32> to vector<4x4xbf16>
    %cst = arith.constant dense<0.000000e+00> : vector<8x4xf32>
    %12 = tpu.matmul %9, %11, %cst {dimension_numbers = #tpu.dot_dimension_numbers<[1], [0], [0], [1], [0, 0, 1, 1], [], []>} : vector<8x4xbf16>, vector<4x4xbf16>, vector<8x4xf32> -> vector<8x4xf32>
    %c0_8 = arith.constant 0 : index
    %c0_9 = arith.constant 0 : index
    %13 = vector.load %arg5[%c0_8, %c0_9] : memref<1x4xf32, #tpu.memory_space<vmem>>, vector<1x4xf32>
    %14 = vector.broadcast %13 : vector<1x4xf32> to vector<8x4xf32>
    %15 = arith.addf %12, %14 : vector<8x4xf32>
    %cst_10 = arith.constant 0.000000e+00 : f32
    %16 = vector.broadcast %cst_10 : f32 to vector<8x4xf32>
    %17 = arith.maximumf %15, %16 : vector<8x4xf32>
    %18 = vector.shape_cast %17 : vector<8x4xf32> to vector<1x8x4xf32>
    %19 = arith.truncf %18 : vector<1x8x4xf32> to vector<1x8x4xbf16>
    %c0_11 = arith.constant 0 : index
    %c0_12 = arith.constant 0 : index
    %c0_13 = arith.constant 0 : index
    %20 = vector.load %arg6[%c0_11, %c0_12, %c0_13] : memref<1x8x4xbf16, #tpu.memory_space<vmem>>, vector<1x8x4xbf16>
    tpu.vector_store %arg6[%c0_11, %c0_12, %c0_13], %19 {strides = array<i32>} : memref<1x8x4xbf16, #tpu.memory_space<vmem>>, vector<1x8x4xbf16>,
    return
  }
  func.func @transform_0(%arg0: i32) -> (i32, i32, i32) {
    %c0_i32 = arith.constant 0 : i32
    %c0_i32_0 = arith.constant 0 : i32
    %c0_i32_1 = arith.constant 0 : i32
    return %arg0, %c0_i32, %c0_i32_0 : i32, i32, i32
  }
  func.func @transform_1(%arg0: i32) -> (i32, i32) {
    %c0_i32 = arith.constant 0 : i32
    %c0_i32_0 = arith.constant 0 : i32
    %c0_i32_1 = arith.constant 0 : i32
    return %c0_i32, %c0_i32_0 : i32, i32
  }
  func.func @transform_2(%arg0: i32) -> (i32, i32) {
    %c0_i32 = arith.constant 0 : i32
    %c0_i32_0 = arith.constant 0 : i32
    %c0_i32_1 = arith.constant 0 : i32
    return %c0_i32, %c0_i32_0 : i32, i32
  }
  func.func @transform_3(%arg0: i32) -> (i32, i32) {
    %c0_i32 = arith.constant 0 : i32
    %c0_i32_0 = arith.constant 0 : i32
    %c0_i32_1 = arith.constant 0 : i32
    return %c0_i32, %c0_i32_0 : i32, i32
  }
  func.func @transform_4(%arg0: i32) -> (i32, i32) {
    %c0_i32 = arith.constant 0 : i32
    %c0_i32_0 = arith.constant 0 : i32
    %c0_i32_1 = arith.constant 0 : i32
    return %c0_i32, %c0_i32_0 : i32, i32
  }
  func.func @transform_5(%arg0: i32) -> (i32, i32, i32) {
    %c0_i32 = arith.constant 0 : i32
    %c0_i32_0 = arith.constant 0 : i32
    %c0_i32_1 = arith.constant 0 : i32
    return %arg0, %c0_i32, %c0_i32_0 : i32, i32, i32
  }
}

module attributes {stable_mosaic.version = 11 : i64} {
  func.func @kernel(%arg0: i32, %arg1: memref<1x4x32xbf16, #tpu.memory_space<vmem>>, %arg2: memref<1x4x4xf32, #tpu.memory_space<vmem>>, %arg3: memref<32x32xf32, #tpu.memory_space<vmem>>, %arg4: memref<1x32xf32, #tpu.memory_space<vmem>>, %arg5: memref<1x4x32xbf16, #tpu.memory_space<vmem>>, %arg6: memref<1x2x32xf32, #tpu.memory_space<vmem>>) attributes {dimension_semantics = [#tpu.dimension_semantics<parallel>], iteration_bounds = array<i64: 2>, scalar_prefetch = 0 : i64, scratch_operands = 0 : i64, tpu.core_type = #tpu.core_type<tc>, window_params = [{transform_indices = @transform_0, window_bounds = array<i64: 1, 4, 32>}, {transform_indices = @transform_1, window_bounds = array<i64: 1, 4, 4>}, {pipeline_mode = #tpu.pipeline_mode<synchronous>, transform_indices = @transform_2, window_bounds = array<i64: 32, 32>}, {pipeline_mode = #tpu.pipeline_mode<synchronous>, transform_indices = @transform_3, window_bounds = array<i64: 1, 32>}, {transform_indices = @transform_4, window_bounds = array<i64: 1, 4, 32>}, {transform_indices = @transform_5, window_bounds = array<i64: 1, 2, 32>}]} {
    %c0 = arith.constant 0 : index
    %c0_0 = arith.constant 0 : index
    %c0_1 = arith.constant 0 : index
    %0 = vector.load %arg1[%c0, %c0_0, %c0_1] : memref<1x4x32xbf16, #tpu.memory_space<vmem>>, vector<1x4x32xbf16>
    %c0_2 = arith.constant 0 : index
    %c0_3 = arith.constant 0 : index
    %c0_4 = arith.constant 0 : index
    %1 = vector.load %arg2[%c0_2, %c0_3, %c0_4] : memref<1x4x4xf32, #tpu.memory_space<vmem>>, vector<1x4x4xf32>
    %2 = arith.truncf %1 : vector<1x4x4xf32> to vector<1x4x4xbf16>
    "tpu.trace_start"() <{level = 10 : i32, message = "bij,bjc->bic"}> : () -> ()
    %cst = arith.constant dense<0.000000e+00> : vector<1x4x32xf32>
    %3 = tpu.matmul %2, %0, %cst {dimension_numbers = #tpu.dot_dimension_numbers<[2], [1], [1], [2], [0, 0, 0, 1, 1, 2], [0], [0]>} : vector<1x4x4xbf16>, vector<1x4x32xbf16>, vector<1x4x32xf32> -> vector<1x4x32xf32>
    "tpu.trace_stop"() : () -> ()
    %4 = arith.extf %2 : vector<1x4x4xbf16> to vector<1x4x4xf32>
    %cst_5 = arith.constant dense<0.000000e+00> : vector<1x4xf32>
    %5 = vector.multi_reduction <add>, %4, %cst_5 [2] : vector<1x4x4xf32> to vector<1x4xf32>
    %6 = vector.shape_cast %5 : vector<1x4xf32> to vector<1x4x1xf32>
    %cst_6 = arith.constant 1.000000e+00 : f32
    %7 = vector.broadcast %cst_6 : f32 to vector<1x4x1xf32>
    %8 = arith.maximumf %6, %7 : vector<1x4x1xf32>
    %9 = tpu.reciprocal %8 {approx = true} : vector<1x4x1xf32> -> vector<1x4x1xf32>
    %10 = vector.broadcast %9 : vector<1x4x1xf32> to vector<1x4x32xf32>
    %11 = arith.mulf %3, %10 : vector<1x4x32xf32>
    %12 = vector.shape_cast %11 : vector<1x4x32xf32> to vector<4x32xf32>
    %13 = arith.truncf %12 : vector<4x32xf32> to vector<4x32xbf16>
    %c0_7 = arith.constant 0 : index
    %c0_8 = arith.constant 0 : index
    %14 = vector.load %arg3[%c0_7, %c0_8] : memref<32x32xf32, #tpu.memory_space<vmem>>, vector<32x32xf32>
    %15 = arith.truncf %14 : vector<32x32xf32> to vector<32x32xbf16>
    %cst_9 = arith.constant dense<0.000000e+00> : vector<4x32xf32>
    %16 = tpu.matmul %13, %15, %cst_9 {dimension_numbers = #tpu.dot_dimension_numbers<[1], [0], [0], [1], [0, 0, 1, 1], [], []>} : vector<4x32xbf16>, vector<32x32xbf16>, vector<4x32xf32> -> vector<4x32xf32>
    %c0_10 = arith.constant 0 : index
    %c0_11 = arith.constant 0 : index
    %17 = vector.load %arg4[%c0_10, %c0_11] : memref<1x32xf32, #tpu.memory_space<vmem>>, vector<1x32xf32>
    %18 = vector.broadcast %17 : vector<1x32xf32> to vector<4x32xf32>
    %19 = arith.addf %16, %18 : vector<4x32xf32>
    %cst_12 = arith.constant 0.000000e+00 : f32
    %20 = vector.broadcast %cst_12 : f32 to vector<4x32xf32>
    %21 = arith.maximumf %19, %20 : vector<4x32xf32>
    %22 = vector.shape_cast %21 : vector<4x32xf32> to vector<1x4x32xf32>
    %23 = arith.truncf %22 : vector<1x4x32xf32> to vector<1x4x32xbf16>
    %c0_13 = arith.constant 0 : index
    %c0_14 = arith.constant 0 : index
    %c0_15 = arith.constant 0 : index
    %24 = vector.load %arg5[%c0_13, %c0_14, %c0_15] : memref<1x4x32xbf16, #tpu.memory_space<vmem>>, vector<1x4x32xbf16>
    tpu.vector_store %arg5[%c0_13, %c0_14, %c0_15], %23 {strides = array<i32>} : memref<1x4x32xbf16, #tpu.memory_space<vmem>>, vector<1x4x32xbf16>,
    %cst_16 = arith.constant dense<0.000000e+00> : vector<32xf32>
    %25 = vector.multi_reduction <add>, %21, %cst_16 [0] : vector<4x32xf32> to vector<32xf32>
    %26 = vector.shape_cast %25 : vector<32xf32> to vector<1x32xf32>
    %27 = arith.mulf %21, %21 : vector<4x32xf32>
    %cst_17 = arith.constant dense<0.000000e+00> : vector<32xf32>
    %28 = vector.multi_reduction <add>, %27, %cst_17 [0] : vector<4x32xf32> to vector<32xf32>
    %29 = vector.shape_cast %28 : vector<32xf32> to vector<1x32xf32>
    %30 = tpu.concatenate %26, %29 in 0 : vector<1x32xf32>, vector<1x32xf32> -> vector<2x32xf32>
    %31 = vector.shape_cast %30 : vector<2x32xf32> to vector<1x2x32xf32>
    %c0_18 = arith.constant 0 : index
    %c0_19 = arith.constant 0 : index
    %c0_20 = arith.constant 0 : index
    %32 = vector.load %arg6[%c0_18, %c0_19, %c0_20] : memref<1x2x32xf32, #tpu.memory_space<vmem>>, vector<1x2x32xf32>
    tpu.vector_store %arg6[%c0_18, %c0_19, %c0_20], %31 {strides = array<i32>} : memref<1x2x32xf32, #tpu.memory_space<vmem>>, vector<1x2x32xf32>,
    return
  }
  func.func @transform_0(%arg0: i32) -> (i32, i32, i32) {
    %c0_i32 = arith.constant 0 : i32
    %c0_i32_0 = arith.constant 0 : i32
    %c0_i32_1 = arith.constant 0 : i32
    return %arg0, %c0_i32, %c0_i32_0 : i32, i32, i32
  }
  func.func @transform_1(%arg0: i32) -> (i32, i32, i32) {
    %c0_i32 = arith.constant 0 : i32
    %c0_i32_0 = arith.constant 0 : i32
    %c0_i32_1 = arith.constant 0 : i32
    return %arg0, %c0_i32, %c0_i32_0 : i32, i32, i32
  }
  func.func @transform_2(%arg0: i32) -> (i32, i32) {
    %c0_i32 = arith.constant 0 : i32
    %c0_i32_0 = arith.constant 0 : i32
    %c0_i32_1 = arith.constant 0 : i32
    return %c0_i32, %c0_i32_0 : i32, i32
  }
  func.func @transform_3(%arg0: i32) -> (i32, i32) {
    %c0_i32 = arith.constant 0 : i32
    %c0_i32_0 = arith.constant 0 : i32
    %c0_i32_1 = arith.constant 0 : i32
    return %c0_i32, %c0_i32_0 : i32, i32
  }
  func.func @transform_4(%arg0: i32) -> (i32, i32, i32) {
    %c0_i32 = arith.constant 0 : i32
    %c0_i32_0 = arith.constant 0 : i32
    %c0_i32_1 = arith.constant 0 : i32
    return %arg0, %c0_i32, %c0_i32_0 : i32, i32, i32
  }
  func.func @transform_5(%arg0: i32) -> (i32, i32, i32) {
    %c0_i32 = arith.constant 0 : i32
    %c0_i32_0 = arith.constant 0 : i32
    %c0_i32_1 = arith.constant 0 : i32
    return %arg0, %c0_i32, %c0_i32_0 : i32, i32, i32
  }
}

module attributes {stable_mosaic.version = 11 : i64} {
  func.func @kernel(%arg0: i32, %arg1: memref<1x8x32xbf16, #tpu.memory_space<vmem>>, %arg2: memref<1x8x8xf32, #tpu.memory_space<vmem>>, %arg3: memref<1x8x4xbf16, #tpu.memory_space<vmem>>, %arg4: memref<1x32xf32, #tpu.memory_space<vmem>>, %arg5: memref<1x32xf32, #tpu.memory_space<vmem>>, %arg6: memref<1x4x32xbf16, #tpu.memory_space<vmem>>, %arg7: memref<1x4x4xf32, #tpu.memory_space<vmem>>) attributes {dimension_semantics = [#tpu.dimension_semantics<parallel>], iteration_bounds = array<i64: 2>, scalar_prefetch = 0 : i64, scratch_operands = 0 : i64, tpu.core_type = #tpu.core_type<tc>, window_params = [{transform_indices = @transform_0, window_bounds = array<i64: 1, 8, 32>}, {transform_indices = @transform_1, window_bounds = array<i64: 1, 8, 8>}, {transform_indices = @transform_2, window_bounds = array<i64: 1, 8, 4>}, {pipeline_mode = #tpu.pipeline_mode<synchronous>, transform_indices = @transform_3, window_bounds = array<i64: 1, 32>}, {pipeline_mode = #tpu.pipeline_mode<synchronous>, transform_indices = @transform_4, window_bounds = array<i64: 1, 32>}, {transform_indices = @transform_5, window_bounds = array<i64: 1, 4, 32>}, {transform_indices = @transform_6, window_bounds = array<i64: 1, 4, 4>}]} {
    %c0 = arith.constant 0 : index
    %c0_0 = arith.constant 0 : index
    %0 = vector.load %arg4[%c0, %c0_0] : memref<1x32xf32, #tpu.memory_space<vmem>>, vector<1x32xf32>
    %c0_1 = arith.constant 0 : index
    %c0_2 = arith.constant 0 : index
    %1 = vector.load %arg5[%c0_1, %c0_2] : memref<1x32xf32, #tpu.memory_space<vmem>>, vector<1x32xf32>
    %c0_3 = arith.constant 0 : index
    %c0_4 = arith.constant 0 : index
    %c0_5 = arith.constant 0 : index
    %2 = vector.load %arg1[%c0_3, %c0_4, %c0_5] : memref<1x8x32xbf16, #tpu.memory_space<vmem>>, vector<1x8x32xbf16>
    %3 = vector.shape_cast %2 : vector<1x8x32xbf16> to vector<8x32xbf16>
    %4 = arith.extf %3 : vector<8x32xbf16> to vector<8x32xf32>
    %5 = vector.broadcast %0 : vector<1x32xf32> to vector<8x32xf32>
    %6 = arith.mulf %4, %5 : vector<8x32xf32>
    %7 = vector.broadcast %1 : vector<1x32xf32> to vector<8x32xf32>
    %8 = arith.addf %6, %7 : vector<8x32xf32>
    %c0_6 = arith.constant 0 : index
    %c0_7 = arith.constant 0 : index
    %c0_8 = arith.constant 0 : index
    %9 = vector.load %arg3[%c0_6, %c0_7, %c0_8] : memref<1x8x4xbf16, #tpu.memory_space<vmem>>, vector<1x8x4xbf16>
    %10 = vector.shape_cast %9 : vector<1x8x4xbf16> to vector<8x4xbf16>
    %11 = arith.extf %10 : vector<8x4xbf16> to vector<8x4xf32>
    %cst = arith.constant dense<0xFF800000> : vector<8xf32>
    %12 = vector.multi_reduction <maximumf>, %11, %cst [1] : vector<8x4xf32> to vector<8xf32>
    %cst_9 = arith.constant 0xFF800000 : f32
    %13 = vector.broadcast %cst_9 : f32 to vector<8xf32>
    %14 = arith.maximumf %13, %12 : vector<8xf32>
    %15 = vector.shape_cast %14 : vector<8xf32> to vector<8x1xf32>
    %16 = vector.broadcast %15 : vector<8x1xf32> to vector<8x4xf32>
    %17 = arith.subf %11, %16 : vector<8x4xf32>
    %18 = math.exp %17 : vector<8x4xf32>
    %cst_10 = arith.constant dense<0.000000e+00> : vector<8xf32>
    %19 = vector.multi_reduction <add>, %18, %cst_10 [1] : vector<8x4xf32> to vector<8xf32>
    %20 = vector.shape_cast %19 : vector<8xf32> to vector<8x1xf32>
    %21 = vector.broadcast %20 : vector<8x1xf32> to vector<8x4xf32>
    %22 = arith.divf %18, %21 : vector<8x4xf32>
    %23 = tpu.transpose %22, [1, 0] : vector<8x4xf32> -> vector<4x8xf32>
    %24 = arith.truncf %23 : vector<4x8xf32> to vector<4x8xbf16>
    %25 = arith.truncf %22 : vector<8x4xf32> to vector<8x4xbf16>
    %c0_11 = arith.constant 0 : index
    %c0_12 = arith.constant 0 : index
    %c0_13 = arith.constant 0 : index
    %26 = vector.load %arg2[%c0_11, %c0_12, %c0_13] : memref<1x8x8xf32, #tpu.memory_space<vmem>>, vector<1x8x8xf32>
    %27 = vector.shape_cast %26 : vector<1x8x8xf32> to vector<8x8xf32>
    %28 = arith.truncf %27 : vector<8x8xf32> to vector<8x8xbf16>
    %29 = arith.truncf %8 : vector<8x32xf32> to vector<8x32xbf16>
    %cst_14 = arith.constant dense<0.000000e+00> : vector<4x32xf32>
    %30 = tpu.matmul %24, %29, %cst_14 {dimension_numbers = #tpu.dot_dimension_numbers<[1], [0], [0], [1], [0, 0, 1, 1], [], []>} : vector<4x8xbf16>, vector<8x32xbf16>, vector<4x32xf32> -> vector<4x32xf32>
    %cst_15 = arith.constant dense<0.000000e+00> : vector<4x8xf32>
    %31 = tpu.matmul %24, %28, %cst_15 {dimension_numbers = #tpu.dot_dimension_numbers<[1], [0], [0], [1], [0, 0, 1, 1], [], []>} : vector<4x8xbf16>, vector<8x8xbf16>, vector<4x8xf32> -> vector<4x8xf32>
    %32 = arith.truncf %31 : vector<4x8xf32> to vector<4x8xbf16>
    %cst_16 = arith.constant dense<0.000000e+00> : vector<4x4xf32>
    %33 = tpu.matmul %32, %25, %cst_16 {dimension_numbers = #tpu.dot_dimension_numbers<[1], [0], [0], [1], [0, 0, 1, 1], [], []>} : vector<4x8xbf16>, vector<8x4xbf16>, vector<4x4xf32> -> vector<4x4xf32>
    %34 = arith.truncf %30 : vector<4x32xf32> to vector<4x32xbf16>
    %c0_17 = arith.constant 0 : index
    %c0_18 = arith.constant 0 : index
    %c0_19 = arith.constant 0 : index
    %35 = vector.load %arg6[%c0_17, %c0_18, %c0_19] : memref<1x4x32xbf16, #tpu.memory_space<vmem>>, vector<1x4x32xbf16>
    %36 = vector.shape_cast %35 : vector<1x4x32xbf16> to vector<4x32xbf16>
    %37 = vector.shape_cast %34 : vector<4x32xbf16> to vector<1x4x32xbf16>
    tpu.vector_store %arg6[%c0_17, %c0_18, %c0_19], %37 {strides = array<i32>} : memref<1x4x32xbf16, #tpu.memory_space<vmem>>, vector<1x4x32xbf16>,
    %c0_20 = arith.constant 0 : index
    %c0_21 = arith.constant 0 : index
    %c0_22 = arith.constant 0 : index
    %38 = vector.load %arg7[%c0_20, %c0_21, %c0_22] : memref<1x4x4xf32, #tpu.memory_space<vmem>>, vector<1x4x4xf32>
    %39 = vector.shape_cast %38 : vector<1x4x4xf32> to vector<4x4xf32>
    %40 = vector.shape_cast %33 : vector<4x4xf32> to vector<1x4x4xf32>
    tpu.vector_store %arg7[%c0_20, %c0_21, %c0_22], %40 {strides = array<i32>} : memref<1x4x4xf32, #tpu.memory_space<vmem>>, vector<1x4x4xf32>,
    return
  }
  func.func @transform_0(%arg0: i32) -> (i32, i32, i32) {
    %c0_i32 = arith.constant 0 : i32
    %c0_i32_0 = arith.constant 0 : i32
    %c0_i32_1 = arith.constant 0 : i32
    return %arg0, %c0_i32, %c0_i32_0 : i32, i32, i32
  }
  func.func @transform_1(%arg0: i32) -> (i32, i32, i32) {
    %c0_i32 = arith.constant 0 : i32
    %c0_i32_0 = arith.constant 0 : i32
    %c0_i32_1 = arith.constant 0 : i32
    return %arg0, %c0_i32, %c0_i32_0 : i32, i32, i32
  }
  func.func @transform_2(%arg0: i32) -> (i32, i32, i32) {
    %c0_i32 = arith.constant 0 : i32
    %c0_i32_0 = arith.constant 0 : i32
    %c0_i32_1 = arith.constant 0 : i32
    return %arg0, %c0_i32, %c0_i32_0 : i32, i32, i32
  }
  func.func @transform_3(%arg0: i32) -> (i32, i32) {
    %c0_i32 = arith.constant 0 : i32
    %c0_i32_0 = arith.constant 0 : i32
    %c0_i32_1 = arith.constant 0 : i32
    return %c0_i32, %c0_i32_0 : i32, i32
  }
  func.func @transform_4(%arg0: i32) -> (i32, i32) {
    %c0_i32 = arith.constant 0 : i32
    %c0_i32_0 = arith.constant 0 : i32
    %c0_i32_1 = arith.constant 0 : i32
    return %c0_i32, %c0_i32_0 : i32, i32
  }
  func.func @transform_5(%arg0: i32) -> (i32, i32, i32) {
    %c0_i32 = arith.constant 0 : i32
    %c0_i32_0 = arith.constant 0 : i32
    %c0_i32_1 = arith.constant 0 : i32
    return %arg0, %c0_i32, %c0_i32_0 : i32, i32, i32
  }
  func.func @transform_6(%arg0: i32) -> (i32, i32, i32) {
    %c0_i32 = arith.constant 0 : i32
    %c0_i32_0 = arith.constant 0 : i32
    %c0_i32_1 = arith.constant 0 : i32
    return %arg0, %c0_i32, %c0_i32_0 : i32, i32, i32
  }
}

</mosaic_0001>

<llo_original>
// kernel: diffpool_net_forward.8
$region0: #{diffpool_net_forward.8}
  #allocation0 [shape = 'u32[]', space=smem, size = 0x4, offset = 0x4, fixed_abs, tag = 'smem constant byte address 0x4 - core index']
  #allocation1 [shape = 'u32[144,128]{1,0:T(1,128)}', space=vmem, size = 0x12000, scoped, tag = 'internal scratch']
  %s0 = inlined_call_operand.vmem [shape: bf16[2,16,8], index: 0, kind: input, shape index: {}]
  %s1 = inlined_call_operand.vmem [shape: f32[1,8], index: 1, kind: input, shape index: {}]
  %s2 = inlined_call_operand.vmem [shape: f32[1,8], index: 2, kind: input, shape index: {}]
  %s3 = inlined_call_operand.vmem [shape: f32[8,8], index: 3, kind: input, shape index: {}]
  %s4 = inlined_call_operand.vmem [shape: f32[1,8], index: 4, kind: input, shape index: {}]
  %s5 = inlined_call_operand.vmem [shape: bf16[2,16,8], index: 5, kind: output, shape index: {}]
  %s6 = sld [smem:[#allocation0]]
  $region53: #{diffpool_net_forward.8} parent=0
    _
  %s8 = ssub.s32 1, %s6
  %s9 = scalar_select 0, %s8, %s6
  loop: start=0, step=1, limit=4
  $region2: #{diffpool_net_forward.8} parent=0 // loop_pre_header
    _
  $region3: #{diffpool_net_forward.8} parent=0 // loop_header
    %s11 = sphi 0, %s15
    %p12 = scmp.ge.s32.totalorder %s11, 4
    %s21 = sphi 0, %s23
    %s24 = sphi 0, %s21
    %s25 = sphi 0, %s24
    %s41 = sphi 0, %s25
    %s45 = sphi 0, %s45
    %s47 = sphi 0, %s45
    %s48 = sphi 0, %s47
    %s62 = sphi 0, %s48
    %s66 = sphi 0, %s66
    %s68 = sphi 0, %s66
    %s69 = sphi 0, %s68
    %s83 = sphi 0, %s69
    %s87 = sphi 0, %s87
    %s89 = sphi 0, %s87
    %s90 = sphi 0, %s89
    %s104 = sphi 0, %s90
    %s108 = sphi 0, %s108
    %s110 = sphi 0, %s108
    %s111 = sphi 0, %s110
    %s125 = sphi 0, %s111
    %s131 = sphi 0, %s133
    %s134 = sphi 0, %s131
    %s135 = sphi 0, %s134
    %s151 = sphi 0, %s135
  $region4: #{diffpool_net_forward.8} parent=0 // loop_header_branch
    %14 = sbr.rel (%p12) target = $region8
  $region5: #{diffpool_net_forward.8} parent=0 // loop_body
    %s16 = ssub.s32 %s11, 1
    %s17 = ssub.s32 %s11, 2
    %s18 = sadd.s32 %s11, 1
    %s19 = ssub.s32 %s11, %s18
    %p20 = scmp.eq.s32.totalorder %s19, 0
    %s22 = sadd.s32 %s21, 1
    %s23 = scalar_select %p20, %s21, %s22
    %p26 = pneg %p20
    %p27 = scmp.eq.s32.totalorder %s11, 1
    %p28 = por %p26, %p27
    %p29 = scmp.ne.s32.totalorder %s21, %s24
    %p30 = scmp.eq.s32.totalorder %s11, 0
    %p31 = por %p29, %p30
    %p32 = scmp.ne.s32.totalorder %s21, %s24
    %p33 = scmp.eq.s32.totalorder %s16, 1
    %p34 = por %p32, %p33
    %p35 = scmp.ne.s32.totalorder %s24, %s25
    %p36 = scmp.eq.s32.totalorder %s16, 0
    %p37 = por %p35, %p36
    %p38 = scmp.ne.s32.totalorder %s24, %s25
    %p39 = scmp.eq.s32.totalorder %s17, 1
    %p40 = por %p38, %p39
    %p42 = scmp.ne.s32.totalorder %s25, %s41
    %p43 = scmp.eq.s32.totalorder %s17, 0
    %p44 = por %p42, %p43
    %s46 = sadd.s32 %s45, 1
    %p49 = scmp.eq.s32.totalorder %s11, 1
    %p50 = scmp.ne.s32.totalorder %s45, %s47
    %p51 = scmp.eq.s32.totalorder %s11, 0
    %p52 = por %p50, %p51
    %p53 = scmp.ne.s32.totalorder %s45, %s47
    %p54 = scmp.eq.s32.totalorder %s16, 1
    %p55 = por %p53, %p54
    %p56 = scmp.ne.s32.totalorder %s47, %s48
    %p57 = scmp.eq.s32.totalorder %s16, 0
    %p58 = por %p56, %p57
    %p59 = scmp.ne.s32.totalorder %s47, %s48
    %p60 = scmp.eq.s32.totalorder %s17, 1
    %p61 = por %p59, %p60
    %p63 = scmp.ne.s32.totalorder %s48, %s62
    %p64 = scmp.eq.s32.totalorder %s17, 0
    %p65 = por %p63, %p64
    %s67 = sadd.s32 %s66, 1
    %p70 = scmp.eq.s32.totalorder %s11, 1
    %p71 = scmp.ne.s32.totalorder %s66, %s68
    %p72 = scmp.eq.s32.totalorder %s11, 0
    %p73 = por %p71, %p72
    %p74 = scmp.ne.s32.totalorder %s66, %s68
    %p75 = scmp.eq.s32.totalorder %s16, 1
    %p76 = por %p74, %p75
    %p77 = scmp.ne.s32.totalorder %s68, %s69
    %p78 = scmp.eq.s32.totalorder %s16, 0
    %p79 = por %p77, %p78
    %p80 = scmp.ne.s32.totalorder %s68, %s69
    %p81 = scmp.eq.s32.totalorder %s17, 1
    %p82 = por %p80, %p81
    %p84 = scmp.ne.s32.totalorder %s69, %s83
    %p85 = scmp.eq.s32.totalorder %s17, 0
    %p86 = por %p84, %p85
    %s88 = sadd.s32 %s87, 1
    %p91 = scmp.eq.s32.totalorder %s11, 1
    %p92 = scmp.ne.s32.totalorder %s87, %s89
    %p93 = scmp.eq.s32.totalorder %s11, 0
    %p94 = por %p92, %p93
    %p95 = scmp.ne.s32.totalorder %s87, %s89
    %p96 = scmp.eq.s32.totalorder %s16, 1
    %p97 = por %p95, %p96
    %p98 = scmp.ne.s32.totalorder %s89, %s90
    %p99 = scmp.eq.s32.totalorder %s16, 0
    %p100 = por %p98, %p99
    %p101 = scmp.ne.s32.totalorder %s89, %s90
    %p102 = scmp.eq.s32.totalorder %s17, 1
    %p103 = por %p101, %p102
    %p105 = scmp.ne.s32.totalorder %s90, %s104
    %p106 = scmp.eq.s32.totalorder %s17, 0
    %p107 = por %p105, %p106
    %s109 = sadd.s32 %s108, 1
    %p112 = scmp.eq.s32.totalorder %s11, 1
    %p113 = scmp.ne.s32.totalorder %s108, %s110
    %p114 = scmp.eq.s32.totalorder %s11, 0
    %p115 = por %p113, %p114
    %p116 = scmp.ne.s32.totalorder %s108, %s110
    %p117 = scmp.eq.s32.totalorder %s16, 1
    %p118 = por %p116, %p117
    %p119 = scmp.ne.s32.totalorder %s110, %s111
    %p120 = scmp.eq.s32.totalorder %s16, 0
    %p121 = por %p119, %p120
    %p122 = scmp.ne.s32.totalorder %s110, %s111
    %p123 = scmp.eq.s32.totalorder %s17, 1
    %p124 = por %p122, %p123
    %p126 = scmp.ne.s32.totalorder %s111, %s125
    %p127 = scmp.eq.s32.totalorder %s17, 0
    %p128 = por %p126, %p127
    %s129 = ssub.s32 %s11, %s18
    %p130 = scmp.eq.s32.totalorder %s129, 0
    %s132 = sadd.s32 %s131, 1
    %s133 = scalar_select %p130, %s131, %s132
    %p136 = pneg %p130
    %p137 = scmp.eq.s32.totalorder %s11, 1
    %p138 = por %p136, %p137
    %p139 = scmp.ne.s32.totalorder %s131, %s134
    %p140 = scmp.eq.s32.totalorder %s11, 0
    %p141 = por %p139, %p140
    %p142 = scmp.ne.s32.totalorder %s131, %s134
    %p143 = scmp.eq.s32.totalorder %s16, 1
    %p144 = por %p142, %p143
    %p145 = scmp.ne.s32.totalorder %s134, %s135
    %p146 = scmp.eq.s32.totalorder %s16, 0
    %p147 = por %p145, %p146
    %p148 = scmp.ne.s32.totalorder %s134, %s135
    %p149 = scmp.eq.s32.totalorder %s17, 1
    %p150 = por %p148, %p149
    %p152 = scmp.ne.s32.totalorder %s135, %s151
    %p153 = scmp.eq.s32.totalorder %s17, 0
    %p154 = por %p152, %p153
    %p155 = scmp.le.s32.totalorder 1, %s11
    %p156 = scmp.lt.s32.totalorder %s11, 3
    %p157 = pnand %p155, %p156
    %p158 = pneg %p157
    // Predicated region
    $region9: #{diffpool_net_forward.8} parent=5 // pred_check
      _
    $region10: #{diffpool_net_forward.8} parent=5 // pred_check_branch
      %160 = sbr.rel (%p157) target = $region12
    $region11: #{diffpool_net_forward.8} parent=5 // pred_region
      %s161 = ssub.s32 %s11, 1
      // Predicated region
      $region13: #{diffpool_net_forward.8} parent=11 // pred_check
        %p162 = pneg %p58
      $region14: #{diffpool_net_forward.8} parent=11 // pred_check_branch
        %164 = sbr.rel (%p162) target = $region16
      $region15: #{diffpool_net_forward.8} parent=11 // pred_region
        _
      $region16: #{diffpool_net_forward.8} parent=11 // pred_fallthru
        _
      // Predicated region
      $region17: #{diffpool_net_forward.8} parent=11 // pred_check
        %p165 = pneg %p79
      $region18: #{diffpool_net_forward.8} parent=11 // pred_check_branch
        %167 = sbr.rel (%p165) target = $region20
      $region19: #{diffpool_net_forward.8} parent=11 // pred_region
        _
      $region20: #{diffpool_net_forward.8} parent=11 // pred_fallthru
        _
      // Predicated region
      $region21: #{diffpool_net_forward.8} parent=11 // pred_check
        %p168 = pneg %p100
      $region22: #{diffpool_net_forward.8} parent=11 // pred_check_branch
        %170 = sbr.rel (%p168) target = $region24
      $region23: #{diffpool_net_forward.8} parent=11 // pred_region
        _
      $region24: #{diffpool_net_forward.8} parent=11 // pred_fallthru
        _
      // Predicated region
      $region25: #{diffpool_net_forward.8} parent=11 // pred_check
        %p171 = pneg %p121
      $region26: #{diffpool_net_forward.8} parent=11 // pred_check_branch
        %173 = sbr.rel (%p171) target = $region28
      $region27: #{diffpool_net_forward.8} parent=11 // pred_region
        _
      $region28: #{diffpool_net_forward.8} parent=11 // pred_fallthru
        _
    $region12: #{diffpool_net_forward.8} parent=5 // pred_fallthru
      _
    %p174 = scmp.lt.s32.totalorder %s11, 2
    // Predicated region
    $region29: #{diffpool_net_forward.8} parent=5 // pred_check
      %p175 = pneg %p174
    $region30: #{diffpool_net_forward.8} parent=5 // pred_check_branch
      %177 = sbr.rel (%p175) target = $region32
    $region31: #{diffpool_net_forward.8} parent=5 // pred_region
      // Predicated region
      $region33: #{diffpool_net_forward.8} parent=31 // pred_check
        %p178 = pneg %p31
      $region34: #{diffpool_net_forward.8} parent=31 // pred_check_branch
        %180 = sbr.rel (%p178) target = $region36
      $region35: #{diffpool_net_forward.8} parent=31 // pred_region
        %p181 = scmp.lt.s32.totalorder %s11, 1
        %s182 = scalar_select %p181, %s11, 1
        %s183 = smul.addr %s182, 2
        %s184 = smul.addr %s183, 4
        %s185 = scalar_lea.vmem %s0, %s184
      $region36: #{diffpool_net_forward.8} parent=31 // pred_fallthru
        _
    $region32: #{diffpool_net_forward.8} parent=5 // pred_fallthru
      _
    %p186 = scmp.le.s32.totalorder 1, %s11
    %p187 = scmp.lt.s32.totalorder %s11, 3
    %p188 = pnand %p186, %p187
    %p189 = pneg %p188
    // Predicated region
    $region37: #{diffpool_net_forward.8} parent=5 // pred_check
      _
    $region38: #{diffpool_net_forward.8} parent=5 // pred_check_branch
      %191 = sbr.rel (%p188) target = $region40
    $region39: #{diffpool_net_forward.8} parent=5 // pred_region
      %s192 = ssub.s32 %s11, 1
      %p193 = scmp.lt.s32.totalorder %s16, 1
      %s194 = scalar_select %p193, %s16, 1
      %s195 = smul.addr %s194, 2
      %s196 = smul.addr %s195, 4
      %s197 = scalar_lea.vmem %s0, %s196
      %p198 = pneg %p37
      %p199 = pneg %p34
      %p200 = pneg %p58
      %p201 = pneg %p55
      %p202 = pneg %p79
      %p203 = pneg %p76
      %p204 = pneg %p100
      %p205 = pneg %p97
      %p206 = pneg %p121
      %p207 = pneg %p118
      %p208 = pneg %p147
      %p209 = pneg %p144
      %p210 = scmp.lt.s32.totalorder %s16, 1
      %s211 = scalar_select %p210, %s16, 1
      %s212 = smul.addr %s211, 2
      %s213 = smul.addr %s212, 4
      %s214 = scalar_lea.vmem %s5, %s213
      %p215 = scmp.lt.s32.totalorder %s16, 1
      %s216 = scalar_select %p215, %s16, 1
      %s217 = smul.addr %s216, 2
      %s218 = smul.addr %s217, 4
      %s219 = scalar_lea.vmem %s0, %s218
      %p220 = scmp.lt.s32.totalorder %s16, 1
      %s221 = scalar_select %p220, %s16, 1
      %s222 = smul.addr %s221, 2
      %s223 = smul.addr %s222, 4
      %s224 = scalar_lea.vmem %s5, %s223
      %v226 = vld [vmem:[%s219] sm:$0xf]
      %v227 = vld [vmem:[%s219 + $0x4] sm:$0xf]
      %v228 = vunpack.c.l.bf16 %v226
      %v229 = vunpack.c.l.bf16 %v227
      %v230 = vld [vmem:[%s1] sm:$0x1]
      %v232 = vlaneseq
      %v233 = vshrl.u32 %v232, 7
      %v234 = vsub.s32 0, %v233
      %v235 = vrot.slane %v230, %v234
      %v237 = vmul.f32 %v228, %v235
      %v238 = vmul.f32 %v229, %v235
      %v239 = vld [vmem:[%s2] sm:$0x1]
      %v241 = vlaneseq
      %v242 = vshrl.u32 %v241, 7
      %v243 = vsub.s32 0, %v242
      %v244 = vrot.slane %v239, %v243
      %v246 = vadd.f32 %v237, %v244
      %v247 = vadd.f32 %v238, %v244
      %v248 = vpack.c.bf16 %v247, %v246
      %v249 = vld [vmem:[%s3] sm:$0xff]
      %v250 = vpack.c.bf16 %v249, %v249
      %v251 = vld [vmem:[%s4] sm:$0x1]
      %v253 = vlaneseq
      %v254 = vshrl.u32 %v253, 7
      %v255 = vsub.s32 0, %v254
      %v256 = vrot.slane %v251, %v255
      %vm258 = vcmask 64512
      %v260 = vsel %vm258, %v248, 0
      %vm262 = vcmask 1043456
      %v264 = vsel %vm262, %v250, 0
      %266 = vmatprep.subr.bf16.mxu0 0
      %267 = vmatpush1.bf16.msra.mxu0 %v264
      %268 = vmatprep.subr.bf16.mxu0 0
      %269 = vmatpush1.bf16.msra.mxu0 0
      %270 = vmatprep.subr.bf16.mxu0 0
      %271 = vmatpush1.bf16.msra.mxu0 0
      %272 = vmatprep.subr.bf16.mxu0 0
      %273 = vmatpush1.bf16.msra.mxu0 0
      %274 = vmatprep.subr.bf16.mxu0 0
      %275 = vmatpush1.bf16.msra.mxu0 0
      %276 = vmatprep.subr.bf16.mxu0 0
      %277 = vmatpush1.bf16.msra.mxu0 0
      %278 = vmatprep.subr.bf16.mxu0 0
      %279 = vmatpush1.bf16.msra.mxu0 0
      %280 = vmatprep.subr.bf16.mxu0 0
      %281 = vmatpush1.bf16.msra.mxu0 0
      %282 = vmatprep.subr.bf16.mxu0 0
      %283 = vmatpush1.bf16.msra.mxu0 0
      %284 = vmatprep.subr.bf16.mxu0 0
      %285 = vmatpush1.bf16.msra.mxu0 0
      %286 = vmatprep.subr.bf16.mxu0 0
      %287 = vmatpush1.bf16.msra.mxu0 0
      %288 = vmatprep.subr.bf16.mxu0 0
      %289 = vmatpush1.bf16.msra.mxu0 0
      %290 = vmatprep.subr.bf16.mxu0 0
      %291 = vmatpush1.bf16.msra.mxu0 0
      %292 = vmatprep.subr.bf16.mxu0 0
      %293 = vmatpush1.bf16.msra.mxu0 0
      %294 = vmatprep.subr.bf16.mxu0 0
      %295 = vmatpush1.bf16.msra.mxu0 0
      %296 = vmatprep.subr.bf16.mxu0 0
      %297 = vmatpush1.bf16.msra.mxu0 0
      %298 = vmatprep.mubr.bf16.mxu0 0
      %299 = vmatmul.mubr.bf16.gmra.mrb[0].mxu0 %v260
      %v300 = vpop.f32.mrb[0].mxu0
      %v301 = vadd.f32 %v256, %v300
      %v302 = vpop.f32.mrb[0].mxu0
      %v303 = vpop.f32.mrb[0].mxu0
      %v304 = vadd.f32 %v256, %v303
      %v305 = vpop.f32.mrb[0].mxu0
      %306 = vdwg.mxu0
      %v307 = vmax.f32 %v301, 0.0
      %v308 = vmax.f32 %v304, 0.0
      %v309 = vpack.c.bf16 %v308, %v307
      %v311 = vunpack.c.l.b16 %v309
      %v312 = vunpack.c.h.b16 %v309
      %v313 = vpack.c.b16 %v311, %v311
      %v314 = vpack.c.b16 %v312, %v312
      %vm317 = vcmask 60416
      %318 = vst.msk [vmem:[%s224] sm:$0xf] %vm317, %v313
      %319 = vst.msk [vmem:[%s224 + $0x4] sm:$0xf] %vm317, %v314
      %p320 = scmp.lt.s32.totalorder %s16, 1
      %s321 = scalar_select %p320, %s16, 1
      %s322 = smul.addr %s321, 2
      %s323 = smul.addr %s322, 4
      %s324 = scalar_lea.vmem %s5, %s323
      // Predicated region
      $region41: #{diffpool_net_forward.8} parent=39 // pred_check
        %p325 = pneg %p144
      $region42: #{diffpool_net_forward.8} parent=39 // pred_check_branch
        %327 = sbr.rel (%p325) target = $region44
      $region43: #{diffpool_net_forward.8} parent=39 // pred_region
        _
      $region44: #{diffpool_net_forward.8} parent=39 // pred_fallthru
        _
    $region40: #{diffpool_net_forward.8} parent=5 // pred_fallthru
      _
    %p328 = scmp.le.s32.totalorder 2, %s11
    // Predicated region
    $region45: #{diffpool_net_forward.8} parent=5 // pred_check
      %p329 = pneg %p328
    $region46: #{diffpool_net_forward.8} parent=5 // pred_check_branch
      %331 = sbr.rel (%p329) target = $region48
    $region47: #{diffpool_net_forward.8} parent=5 // pred_region
      %s332 = ssub.s32 %s11, 2
      // Predicated region
      $region49: #{diffpool_net_forward.8} parent=47 // pred_check
        %p333 = pneg %p150
      $region50: #{diffpool_net_forward.8} parent=47 // pred_check_branch
        %335 = sbr.rel (%p333) target = $region52
      $region51: #{diffpool_net_forward.8} parent=47 // pred_region
        %p336 = scmp.lt.s32.totalorder %s17, 1
        %s337 = scalar_select %p336, %s17, 1
        %s338 = smul.addr %s337, 2
        %s339 = smul.addr %s338, 4
        %s340 = scalar_lea.vmem %s5, %s339
      $region52: #{diffpool_net_forward.8} parent=47 // pred_fallthru
        _
    $region48: #{diffpool_net_forward.8} parent=5 // pred_fallthru
      _
  $region6: #{diffpool_net_forward.8} parent=0 // loop_footer
    %s15 = sadd.s32 1, %s11
  $region7: #{diffpool_net_forward.8} parent=0 // loop_footer_branch
    %10 = sbr.rel target = $region3
  $region8: #{diffpool_net_forward.8} parent=0 // loop_exit
    _

// kernel: diffpool_net_forward.7
$region0: #{diffpool_net_forward.7}
  #allocation0 [shape = 'u32[]', space=smem, size = 0x4, offset = 0x4, fixed_abs, tag = 'smem constant byte address 0x4 - core index']
  #allocation1 [shape = 'u32[144,128]{1,0:T(1,128)}', space=vmem, size = 0x12000, scoped, tag = 'internal scratch']
  %s0 = inlined_call_operand.vmem [shape: f32[2,16,8], index: 0, kind: input, shape index: {}]
  %s1 = inlined_call_operand.vmem [shape: bf16[2,16,16], index: 1, kind: input, shape index: {}]
  %s2 = inlined_call_operand.vmem [shape: f32[2,16,1], index: 2, kind: input, shape index: {}]
  %s3 = inlined_call_operand.vmem [shape: f32[8,8], index: 3, kind: input, shape index: {}]
  %s4 = inlined_call_operand.vmem [shape: f32[1,8], index: 4, kind: input, shape index: {}]
  %s5 = inlined_call_operand.vmem [shape: f32[8,32], index: 5, kind: input, shape index: {}]
  %s6 = inlined_call_operand.vmem [shape: f32[1,32], index: 6, kind: input, shape index: {}]
  %s7 = inlined_call_operand.vmem [shape: bf16[2,16,8], index: 7, kind: output, shape index: {0}]
  %s8 = inlined_call_operand.vmem [shape: bf16[2,16,32], index: 8, kind: output, shape index: {1}]
  %s9 = inlined_call_operand.vmem [shape: f32[2,2,8], index: 9, kind: output, shape index: {2}]
  %s10 = inlined_call_operand.vmem [shape: f32[2,2,32], index: 10, kind: output, shape index: {3}]
  %11 = xla_tuple %s7, %s8, %s9, %s10
  %s12 = sld [smem:[#allocation0]]
  $region85: #{diffpool_net_forward.7} parent=0
    _
  %s14 = ssub.s32 1, %s12
  %s15 = scalar_select 0, %s14, %s12
  loop: start=0, step=1, limit=4
  $region2: #{diffpool_net_forward.7} parent=0 // loop_pre_header
    _
  $region3: #{diffpool_net_forward.7} parent=0 // loop_header
    %s17 = sphi 0, %s21
    %p18 = scmp.ge.s32.totalorder %s17, 4
    %s27 = sphi 0, %s29
    %s30 = sphi 0, %s27
    %s31 = sphi 0, %s30
    %s47 = sphi 0, %s31
    %s53 = sphi 0, %s55
    %s56 = sphi 0, %s53
    %s57 = sphi 0, %s56
    %s73 = sphi 0, %s57
    %s79 = sphi 0, %s81
    %s82 = sphi 0, %s79
    %s83 = sphi 0, %s82
    %s99 = sphi 0, %s83
    %s103 = sphi 0, %s103
    %s105 = sphi 0, %s103
    %s106 = sphi 0, %s105
    %s120 = sphi 0, %s106
    %s124 = sphi 0, %s124
    %s126 = sphi 0, %s124
    %s127 = sphi 0, %s126
    %s141 = sphi 0, %s127
    %s145 = sphi 0, %s145
    %s147 = sphi 0, %s145
    %s148 = sphi 0, %s147
    %s162 = sphi 0, %s148
    %s166 = sphi 0, %s166
    %s168 = sphi 0, %s166
    %s169 = sphi 0, %s168
    %s183 = sphi 0, %s169
    %s189 = sphi 0, %s191
    %s192 = sphi 0, %s189
    %s193 = sphi 0, %s192
    %s209 = sphi 0, %s193
    %s215 = sphi 0, %s217
    %s218 = sphi 0, %s215
    %s219 = sphi 0, %s218
    %s235 = sphi 0, %s219
    %s241 = sphi 0, %s243
    %s244 = sphi 0, %s241
    %s245 = sphi 0, %s244
    %s261 = sphi 0, %s245
    %s267 = sphi 0, %s269
    %s270 = sphi 0, %s267
    %s271 = sphi 0, %s270
    %s287 = sphi 0, %s271
  $region4: #{diffpool_net_forward.7} parent=0 // loop_header_branch
    %20 = sbr.rel (%p18) target = $region8
  $region5: #{diffpool_net_forward.7} parent=0 // loop_body
    %s22 = ssub.s32 %s17, 1
    %s23 = ssub.s32 %s17, 2
    %s24 = sadd.s32 %s17, 1
    %s25 = ssub.s32 %s17, %s24
    %p26 = scmp.eq.s32.totalorder %s25, 0
    %s28 = sadd.s32 %s27, 1
    %s29 = scalar_select %p26, %s27, %s28
    %p32 = pneg %p26
    %p33 = scmp.eq.s32.totalorder %s17, 1
    %p34 = por %p32, %p33
    %p35 = scmp.ne.s32.totalorder %s27, %s30
    %p36 = scmp.eq.s32.totalorder %s17, 0
    %p37 = por %p35, %p36
    %p38 = scmp.ne.s32.totalorder %s27, %s30
    %p39 = scmp.eq.s32.totalorder %s22, 1
    %p40 = por %p38, %p39
    %p41 = scmp.ne.s32.totalorder %s30, %s31
    %p42 = scmp.eq.s32.totalorder %s22, 0
    %p43 = por %p41, %p42
    %p44 = scmp.ne.s32.totalorder %s30, %s31
    %p45 = scmp.eq.s32.totalorder %s23, 1
    %p46 = por %p44, %p45
    %p48 = scmp.ne.s32.totalorder %s31, %s47
    %p49 = scmp.eq.s32.totalorder %s23, 0
    %p50 = por %p48, %p49
    %s51 = ssub.s32 %s17, %s24
    %p52 = scmp.eq.s32.totalorder %s51, 0
    %s54 = sadd.s32 %s53, 1
    %s55 = scalar_select %p52, %s53, %s54
    %p58 = pneg %p52
    %p59 = scmp.eq.s32.totalorder %s17, 1
    %p60 = por %p58, %p59
    %p61 = scmp.ne.s32.totalorder %s53, %s56
    %p62 = scmp.eq.s32.totalorder %s17, 0
    %p63 = por %p61, %p62
    %p64 = scmp.ne.s32.totalorder %s53, %s56
    %p65 = scmp.eq.s32.totalorder %s22, 1
    %p66 = por %p64, %p65
    %p67 = scmp.ne.s32.totalorder %s56, %s57
    %p68 = scmp.eq.s32.totalorder %s22, 0
    %p69 = por %p67, %p68
    %p70 = scmp.ne.s32.totalorder %s56, %s57
    %p71 = scmp.eq.s32.totalorder %s23, 1
    %p72 = por %p70, %p71
    %p74 = scmp.ne.s32.totalorder %s57, %s73
    %p75 = scmp.eq.s32.totalorder %s23, 0
    %p76 = por %p74, %p75
    %s77 = ssub.s32 %s17, %s24
    %p78 = scmp.eq.s32.totalorder %s77, 0
    %s80 = sadd.s32 %s79, 1
    %s81 = scalar_select %p78, %s79, %s80
    %p84 = pneg %p78
    %p85 = scmp.eq.s32.totalorder %s17, 1
    %p86 = por %p84, %p85
    %p87 = scmp.ne.s32.totalorder %s79, %s82
    %p88 = scmp.eq.s32.totalorder %s17, 0
    %p89 = por %p87, %p88
    %p90 = scmp.ne.s32.totalorder %s79, %s82
    %p91 = scmp.eq.s32.totalorder %s22, 1
    %p92 = por %p90, %p91
    %p93 = scmp.ne.s32.totalorder %s82, %s83
    %p94 = scmp.eq.s32.totalorder %s22, 0
    %p95 = por %p93, %p94
    %p96 = scmp.ne.s32.totalorder %s82, %s83
    %p97 = scmp.eq.s32.totalorder %s23, 1
    %p98 = por %p96, %p97
    %p100 = scmp.ne.s32.totalorder %s83, %s99
    %p101 = scmp.eq.s32.totalorder %s23, 0
    %p102 = por %p100, %p101
    %s104 = sadd.s32 %s103, 1
    %p107 = scmp.eq.s32.totalorder %s17, 1
    %p108 = scmp.ne.s32.totalorder %s103, %s105
    %p109 = scmp.eq.s32.totalorder %s17, 0
    %p110 = por %p108, %p109
    %p111 = scmp.ne.s32.totalorder %s103, %s105
    %p112 = scmp.eq.s32.totalorder %s22, 1
    %p113 = por %p111, %p112
    %p114 = scmp.ne.s32.totalorder %s105, %s106
    %p115 = scmp.eq.s32.totalorder %s22, 0
    %p116 = por %p114, %p115
    %p117 = scmp.ne.s32.totalorder %s105, %s106
    %p118 = scmp.eq.s32.totalorder %s23, 1
    %p119 = por %p117, %p118
    %p121 = scmp.ne.s32.totalorder %s106, %s120
    %p122 = scmp.eq.s32.totalorder %s23, 0
    %p123 = por %p121, %p122
    %s125 = sadd.s32 %s124, 1
    %p128 = scmp.eq.s32.totalorder %s17, 1
    %p129 = scmp.ne.s32.totalorder %s124, %s126
    %p130 = scmp.eq.s32.totalorder %s17, 0
    %p131 = por %p129, %p130
    %p132 = scmp.ne.s32.totalorder %s124, %s126
    %p133 = scmp.eq.s32.totalorder %s22, 1
    %p134 = por %p132, %p133
    %p135 = scmp.ne.s32.totalorder %s126, %s127
    %p136 = scmp.eq.s32.totalorder %s22, 0
    %p137 = por %p135, %p136
    %p138 = scmp.ne.s32.totalorder %s126, %s127
    %p139 = scmp.eq.s32.totalorder %s23, 1
    %p140 = por %p138, %p139
    %p142 = scmp.ne.s32.totalorder %s127, %s141
    %p143 = scmp.eq.s32.totalorder %s23, 0
    %p144 = por %p142, %p143
    %s146 = sadd.s32 %s145, 1
    %p149 = scmp.eq.s32.totalorder %s17, 1
    %p150 = scmp.ne.s32.totalorder %s145, %s147
    %p151 = scmp.eq.s32.totalorder %s17, 0
    %p152 = por %p150, %p151
    %p153 = scmp.ne.s32.totalorder %s145, %s147
    %p154 = scmp.eq.s32.totalorder %s22, 1
    %p155 = por %p153, %p154
    %p156 = scmp.ne.s32.totalorder %s147, %s148
    %p157 = scmp.eq.s32.totalorder %s22, 0
    %p158 = por %p156, %p157
    %p159 = scmp.ne.s32.totalorder %s147, %s148
    %p160 = scmp.eq.s32.totalorder %s23, 1
    %p161 = por %p159, %p160
    %p163 = scmp.ne.s32.totalorder %s148, %s162
    %p164 = scmp.eq.s32.totalorder %s23, 0
    %p165 = por %p163, %p164
    %s167 = sadd.s32 %s166, 1
    %p170 = scmp.eq.s32.totalorder %s17, 1
    %p171 = scmp.ne.s32.totalorder %s166, %s168
    %p172 = scmp.eq.s32.totalorder %s17, 0
    %p173 = por %p171, %p172
    %p174 = scmp.ne.s32.totalorder %s166, %s168
    %p175 = scmp.eq.s32.totalorder %s22, 1
    %p176 = por %p174, %p175
    %p177 = scmp.ne.s32.totalorder %s168, %s169
    %p178 = scmp.eq.s32.totalorder %s22, 0
    %p179 = por %p177, %p178
    %p180 = scmp.ne.s32.totalorder %s168, %s169
    %p181 = scmp.eq.s32.totalorder %s23, 1
    %p182 = por %p180, %p181
    %p184 = scmp.ne.s32.totalorder %s169, %s183
    %p185 = scmp.eq.s32.totalorder %s23, 0
    %p186 = por %p184, %p185
    %s187 = ssub.s32 %s17, %s24
    %p188 = scmp.eq.s32.totalorder %s187, 0
    %s190 = sadd.s32 %s189, 1
    %s191 = scalar_select %p188, %s189, %s190
    %p194 = pneg %p188
    %p195 = scmp.eq.s32.totalorder %s17, 1
    %p196 = por %p194, %p195
    %p197 = scmp.ne.s32.totalorder %s189, %s192
    %p198 = scmp.eq.s32.totalorder %s17, 0
    %p199 = por %p197, %p198
    %p200 = scmp.ne.s32.totalorder %s189, %s192
    %p201 = scmp.eq.s32.totalorder %s22, 1
    %p202 = por %p200, %p201
    %p203 = scmp.ne.s32.totalorder %s192, %s193
    %p204 = scmp.eq.s32.totalorder %s22, 0
    %p205 = por %p203, %p204
    %p206 = scmp.ne.s32.totalorder %s192, %s193
    %p207 = scmp.eq.s32.totalorder %s23, 1
    %p208 = por %p206, %p207
    %p210 = scmp.ne.s32.totalorder %s193, %s209
    %p211 = scmp.eq.s32.totalorder %s23, 0
    %p212 = por %p210, %p211
    %s213 = ssub.s32 %s17, %s24
    %p214 = scmp.eq.s32.totalorder %s213, 0
    %s216 = sadd.s32 %s215, 1
    %s217 = scalar_select %p214, %s215, %s216
    %p220 = pneg %p214
    %p221 = scmp.eq.s32.totalorder %s17, 1
    %p222 = por %p220, %p221
    %p223 = scmp.ne.s32.totalorder %s215, %s218
    %p224 = scmp.eq.s32.totalorder %s17, 0
    %p225 = por %p223, %p224
    %p226 = scmp.ne.s32.totalorder %s215, %s218
    %p227 = scmp.eq.s32.totalorder %s22, 1
    %p228 = por %p226, %p227
    %p229 = scmp.ne.s32.totalorder %s218, %s219
    %p230 = scmp.eq.s32.totalorder %s22, 0
    %p231 = por %p229, %p230
    %p232 = scmp.ne.s32.totalorder %s218, %s219
    %p233 = scmp.eq.s32.totalorder %s23, 1
    %p234 = por %p232, %p233
    %p236 = scmp.ne.s32.totalorder %s219, %s235
    %p237 = scmp.eq.s32.totalorder %s23, 0
    %p238 = por %p236, %p237
    %s239 = ssub.s32 %s17, %s24
    %p240 = scmp.eq.s32.totalorder %s239, 0
    %s242 = sadd.s32 %s241, 1
    %s243 = scalar_select %p240, %s241, %s242
    %p246 = pneg %p240
    %p247 = scmp.eq.s32.totalorder %s17, 1
    %p248 = por %p246, %p247
    %p249 = scmp.ne.s32.totalorder %s241, %s244
    %p250 = scmp.eq.s32.totalorder %s17, 0
    %p251 = por %p249, %p250
    %p252 = scmp.ne.s32.totalorder %s241, %s244
    %p253 = scmp.eq.s32.totalorder %s22, 1
    %p254 = por %p252, %p253
    %p255 = scmp.ne.s32.totalorder %s244, %s245
    %p256 = scmp.eq.s32.totalorder %s22, 0
    %p257 = por %p255, %p256
    %p258 = scmp.ne.s32.totalorder %s244, %s245
    %p259 = scmp.eq.s32.totalorder %s23, 1
    %p260 = por %p258, %p259
    %p262 = scmp.ne.s32.totalorder %s245, %s261
    %p263 = scmp.eq.s32.totalorder %s23, 0
    %p264 = por %p262, %p263
    %s265 = ssub.s32 %s17, %s24
    %p266 = scmp.eq.s32.totalorder %s265, 0
    %s268 = sadd.s32 %s267, 1
    %s269 = scalar_select %p266, %s267, %s268
    %p272 = pneg %p266
    %p273 = scmp.eq.s32.totalorder %s17, 1
    %p274 = por %p272, %p273
    %p275 = scmp.ne.s32.totalorder %s267, %s270
    %p276 = scmp.eq.s32.totalorder %s17, 0
    %p277 = por %p275, %p276
    %p278 = scmp.ne.s32.totalorder %s267, %s270
    %p279 = scmp.eq.s32.totalorder %s22, 1
    %p280 = por %p278, %p279
    %p281 = scmp.ne.s32.totalorder %s270, %s271
    %p282 = scmp.eq.s32.totalorder %s22, 0
    %p283 = por %p281, %p282
    %p284 = scmp.ne.s32.totalorder %s270, %s271
    %p285 = scmp.eq.s32.totalorder %s23, 1
    %p286 = por %p284, %p285
    %p288 = scmp.ne.s32.totalorder %s271, %s287
    %p289 = scmp.eq.s32.totalorder %s23, 0
    %p290 = por %p288, %p289
    %p291 = scmp.le.s32.totalorder 1, %s17
    %p292 = scmp.lt.s32.totalorder %s17, 3
    %p293 = pnand %p291, %p292
    %p294 = pneg %p293
    // Predicated region
    $region9: #{diffpool_net_forward.7} parent=5 // pred_check
      _
    $region10: #{diffpool_net_forward.7} parent=5 // pred_check_branch
      %296 = sbr.rel (%p293) target = $region12
    $region11: #{diffpool_net_forward.7} parent=5 // pred_region
      %s297 = ssub.s32 %s17, 1
      // Predicated region
      $region13: #{diffpool_net_forward.7} parent=11 // pred_check
        %p298 = pneg %p116
      $region14: #{diffpool_net_forward.7} parent=11 // pred_check_branch
        %300 = sbr.rel (%p298) target = $region16
      $region15: #{diffpool_net_forward.7} parent=11 // pred_region
        _
      $region16: #{diffpool_net_forward.7} parent=11 // pred_fallthru
        _
      // Predicated region
      $region17: #{diffpool_net_forward.7} parent=11 // pred_check
        %p301 = pneg %p137
      $region18: #{diffpool_net_forward.7} parent=11 // pred_check_branch
        %303 = sbr.rel (%p301) target = $region20
      $region19: #{diffpool_net_forward.7} parent=11 // pred_region
        _
      $region20: #{diffpool_net_forward.7} parent=11 // pred_fallthru
        _
      // Predicated region
      $region21: #{diffpool_net_forward.7} parent=11 // pred_check
        %p304 = pneg %p158
      $region22: #{diffpool_net_forward.7} parent=11 // pred_check_branch
        %306 = sbr.rel (%p304) target = $region24
      $region23: #{diffpool_net_forward.7} parent=11 // pred_region
        _
      $region24: #{diffpool_net_forward.7} parent=11 // pred_fallthru
        _
      // Predicated region
      $region25: #{diffpool_net_forward.7} parent=11 // pred_check
        %p307 = pneg %p179
      $region26: #{diffpool_net_forward.7} parent=11 // pred_check_branch
        %309 = sbr.rel (%p307) target = $region28
      $region27: #{diffpool_net_forward.7} parent=11 // pred_region
        _
      $region28: #{diffpool_net_forward.7} parent=11 // pred_fallthru
        _
    $region12: #{diffpool_net_forward.7} parent=5 // pred_fallthru
      _
    %p310 = scmp.lt.s32.totalorder %s17, 2
    // Predicated region
    $region29: #{diffpool_net_forward.7} parent=5 // pred_check
      %p311 = pneg %p310
    $region30: #{diffpool_net_forward.7} parent=5 // pred_check_branch
      %313 = sbr.rel (%p311) target = $region32
    $region31: #{diffpool_net_forward.7} parent=5 // pred_region
      // Predicated region
      $region33: #{diffpool_net_forward.7} parent=31 // pred_check
        %p314 = pneg %p37
      $region34: #{diffpool_net_forward.7} parent=31 // pred_check_branch
        %316 = sbr.rel (%p314) target = $region36
      $region35: #{diffpool_net_forward.7} parent=31 // pred_region
        %p317 = scmp.lt.s32.totalorder %s17, 1
        %s318 = scalar_select %p317, %s17, 1
        %s319 = smul.addr %s318, 2
        %s320 = smul.addr %s319, 8
        %s321 = scalar_lea.vmem %s0, %s320
      $region36: #{diffpool_net_forward.7} parent=31 // pred_fallthru
        _
      // Predicated region
      $region37: #{diffpool_net_forward.7} parent=31 // pred_check
        %p322 = pneg %p63
      $region38: #{diffpool_net_forward.7} parent=31 // pred_check_branch
        %324 = sbr.rel (%p322) target = $region40
      $region39: #{diffpool_net_forward.7} parent=31 // pred_region
        %p325 = scmp.lt.s32.totalorder %s17, 1
        %s326 = scalar_select %p325, %s17, 1
        %s327 = smul.addr %s326, 2
        %s328 = smul.addr %s327, 4
        %s329 = scalar_lea.vmem %s1, %s328
      $region40: #{diffpool_net_forward.7} parent=31 // pred_fallthru
        _
      // Predicated region
      $region41: #{diffpool_net_forward.7} parent=31 // pred_check
        %p330 = pneg %p89
      $region42: #{diffpool_net_forward.7} parent=31 // pred_check_branch
        %332 = sbr.rel (%p330) target = $region44
      $region43: #{diffpool_net_forward.7} parent=31 // pred_region
        %p333 = scmp.lt.s32.totalorder %s17, 1
        %s334 = scalar_select %p333, %s17, 1
        %s335 = smul.addr %s334, 2
        %s336 = smul.addr %s335, 8
        %s337 = scalar_lea.vmem %s2, %s336
      $region44: #{diffpool_net_forward.7} parent=31 // pred_fallthru
        _
    $region32: #{diffpool_net_forward.7} parent=5 // pred_fallthru
      _
    %p338 = scmp.le.s32.totalorder 1, %s17
    %p339 = scmp.lt.s32.totalorder %s17, 3
    %p340 = pnand %p338, %p339
    %p341 = pneg %p340
    // Predicated region
    $region45: #{diffpool_net_forward.7} parent=5 // pred_check
      _
    $region46: #{diffpool_net_forward.7} parent=5 // pred_check_branch
      %343 = sbr.rel (%p340) target = $region48
    $region47: #{diffpool_net_forward.7} parent=5 // pred_region
      %s344 = ssub.s32 %s17, 1
      %p345 = scmp.lt.s32.totalorder %s22, 1
      %s346 = scalar_select %p345, %s22, 1
      %s347 = smul.addr %s346, 2
      %s348 = smul.addr %s347, 8
      %s349 = scalar_lea.vmem %s0, %s348
      %p350 = pneg %p43
      %p351 = pneg %p40
      %p352 = scmp.lt.s32.totalorder %s22, 1
      %s353 = scalar_select %p352, %s22, 1
      %s354 = smul.addr %s353, 2
      %s355 = smul.addr %s354, 4
      %s356 = scalar_lea.vmem %s1, %s355
      %p357 = pneg %p69
      %p358 = pneg %p66
      %p359 = scmp.lt.s32.totalorder %s22, 1
      %s360 = scalar_select %p359, %s22, 1
      %s361 = smul.addr %s360, 2
      %s362 = smul.addr %s361, 8
      %s363 = scalar_lea.vmem %s2, %s362
      %p364 = pneg %p95
      %p365 = pneg %p92
      %p366 = pneg %p116
      %p367 = pneg %p113
      %p368 = pneg %p137
      %p369 = pneg %p134
      %p370 = pneg %p158
      %p371 = pneg %p155
      %p372 = pneg %p179
      %p373 = pneg %p176
      %p374 = pneg %p205
      %p375 = pneg %p202
      %p376 = scmp.lt.s32.totalorder %s22, 1
      %s377 = scalar_select %p376, %s22, 1
      %s378 = smul.addr %s377, 2
      %s379 = smul.addr %s378, 4
      %s380 = scalar_lea.vmem %s7, %s379
      %p381 = pneg %p231
      %p382 = pneg %p228
      %p383 = scmp.lt.s32.totalorder %s22, 1
      %s384 = scalar_select %p383, %s22, 1
      %s385 = smul.addr %s384, 2
      %s386 = smul.addr %s385, 4
      %s387 = scalar_lea.vmem %s8, %s386
      %p388 = pneg %p257
      %p389 = pneg %p254
      %p390 = scmp.lt.s32.totalorder %s22, 1
      %s391 = scalar_select %p390, %s22, 1
      %s392 = smul.addr %s391, 2
      %s393 = scalar_lea.vmem %s9, %s392
      %p394 = pneg %p283
      %p395 = pneg %p280
      %p396 = scmp.lt.s32.totalorder %s22, 1
      %s397 = scalar_select %p396, %s22, 1
      %s398 = smul.addr %s397, 2
      %s399 = scalar_lea.vmem %s10, %s398
      %p400 = scmp.lt.s32.totalorder %s22, 1
      %s401 = scalar_select %p400, %s22, 1
      %s402 = smul.addr %s401, 2
      %s403 = smul.addr %s402, 8
      %s404 = scalar_lea.vmem %s0, %s403
      %p405 = scmp.lt.s32.totalorder %s22, 1
      %s406 = scalar_select %p405, %s22, 1
      %s407 = smul.addr %s406, 2
      %s408 = smul.addr %s407, 4
      %s409 = scalar_lea.vmem %s1, %s408
      %p410 = scmp.lt.s32.totalorder %s22, 1
      %s411 = scalar_select %p410, %s22, 1
      %s412 = smul.addr %s411, 2
      %s413 = smul.addr %s412, 8
      %s414 = scalar_lea.vmem %s2, %s413
      %p415 = scmp.lt.s32.totalorder %s22, 1
      %s416 = scalar_select %p415, %s22, 1
      %s417 = smul.addr %s416, 2
      %s418 = smul.addr %s417, 4
      %s419 = scalar_lea.vmem %s7, %s418
      %p420 = scmp.lt.s32.totalorder %s22, 1
      %s421 = scalar_select %p420, %s22, 1
      %s422 = smul.addr %s421, 2
      %s423 = smul.addr %s422, 4
      %s424 = scalar_lea.vmem %s8, %s423
      %p425 = scmp.lt.s32.totalorder %s22, 1
      %s426 = scalar_select %p425, %s22, 1
      %s427 = smul.addr %s426, 2
      %s428 = scalar_lea.vmem %s9, %s427
      %p429 = scmp.lt.s32.totalorder %s22, 1
      %s430 = scalar_select %p429, %s22, 1
      %s431 = smul.addr %s430, 2
      %s432 = scalar_lea.vmem %s10, %s431
      %v434 = vld [vmem:[%s404] sm:$0xff]
      %v435 = vld [vmem:[%s404 + $0x8] sm:$0xff]
      %v436 = vld [vmem:[%s409] sm:$0xf]
      %v437 = vld [vmem:[%s409 + $0x4] sm:$0xf]
      %v438 = vpack.c.bf16 %v435, %v434
      %v439 = vunpack.c.l.bf16 %v436
      %v440 = vunpack.c.l.bf16 %v437
      %vm441 = vcmask 130048
      %v442 = vsel %vm441, %v439, 0.0
      %443 = vadd.xlane.f32.xlu0 %v442
      %v444 = vpop.xlane.xlu0 %443
      %v445 = vsel %vm441, %v440, 0.0
      %446 = vadd.xlane.f32.xlu0 %v445
      %v447 = vpop.xlane.xlu0 %446
      %v450 = vunpack.c.l.b16 %v436
      %v451 = vunpack.c.l.b16 %v437
      %v452 = vpack.c.b16 %v451, %v450
      %v454 = vsel %vm441, %v452, 0
      %456 = vmatprep.subr.bf16.mxu0 0
      %457 = vmatpush1.bf16.msra.mxu0 %v438
      %458 = vmatprep.subr.bf16.mxu0 0
      %459 = vmatpush1.bf16.msra.mxu0 0
      %460 = vmatprep.subr.bf16.mxu0 0
      %461 = vmatpush1.bf16.msra.mxu0 0
      %462 = vmatprep.subr.bf16.mxu0 0
      %463 = vmatpush1.bf16.msra.mxu0 0
      %464 = vmatprep.subr.bf16.mxu0 0
      %465 = vmatpush1.bf16.msra.mxu0 0
      %466 = vmatprep.subr.bf16.mxu0 0
      %467 = vmatpush1.bf16.msra.mxu0 0
      %468 = vmatprep.subr.bf16.mxu0 0
      %469 = vmatpush1.bf16.msra.mxu0 0
      %470 = vmatprep.subr.bf16.mxu0 0
      %471 = vmatpush1.bf16.msra.mxu0 0
      %472 = vmatprep.subr.bf16.mxu0 0
      %473 = vmatpush1.bf16.msra.mxu0 0
      %474 = vmatprep.subr.bf16.mxu0 0
      %475 = vmatpush1.bf16.msra.mxu0 0
      %476 = vmatprep.subr.bf16.mxu0 0
      %477 = vmatpush1.bf16.msra.mxu0 0
      %478 = vmatprep.subr.bf16.mxu0 0
      %479 = vmatpush1.bf16.msra.mxu0 0
      %480 = vmatprep.subr.bf16.mxu0 0
      %481 = vmatpush1.bf16.msra.mxu0 0
      %482 = vmatprep.subr.bf16.mxu0 0
      %483 = vmatpush1.bf16.msra.mxu0 0
      %484 = vmatprep.subr.bf16.mxu0 0
      %485 = vmatpush1.bf16.msra.mxu0 0
      %486 = vmatprep.subr.bf16.mxu0 0
      %487 = vmatpush1.bf16.msra.mxu0 0
      %488 = vmatprep.mubr.bf16.mxu0 0
      %489 = vmatmul.mubr.bf16.gmra.mrb[0].mxu0 %v454
      %v490 = vpop.f32.mrb[0].mxu0
      %v491 = vadd.f32 %v434, %v490
      %v492 = vpop.f32.mrb[0].mxu0
      %v493 = vpop.f32.mrb[0].mxu0
      %v494 = vadd.f32 %v435, %v493
      %v495 = vpop.f32.mrb[0].mxu0
      %496 = vdwg.mxu0
      %v497 = vadd.f32 %v444, 1.0
      %v498 = vadd.f32 %v447, 1.0
      %v499 = vmax.f32 %v497, 1.0
      %v500 = vmax.f32 %v498, 1.0
      %v501 = vrcp.pop %v499
      %v502 = vrcp.pop %v500
      %v503 = vmul.f32 %v491, %v501
      %v504 = vmul.f32 %v494, %v502
      %v505 = vpack.c.bf16 %v504, %v503
      %v506 = vld [vmem:[%s414] sm:$0xff]
      %v507 = vld [vmem:[%s414 + $0x8] sm:$0xff]
      %v508 = vld [vmem:[%s3] sm:$0xff]
      %v509 = vpack.c.bf16 %v508, %v508
      %v510 = vld [vmem:[%s4] sm:$0x1]
      %v512 = vlaneseq
      %v513 = vshrl.u32 %v512, 7
      %v514 = vsub.s32 0, %v513
      %v515 = vrot.slane %v510, %v514
      %vm517 = vcmask 64512
      %v519 = vsel %vm517, %v505, 0
      %vm521 = vcmask 1043456
      %v523 = vsel %vm521, %v509, 0
      %525 = vmatprep.subr.bf16.mxu0 0
      %526 = vmatpush1.bf16.msra.mxu0 %v523
      %527 = vmatprep.subr.bf16.mxu0 0
      %528 = vmatpush1.bf16.msra.mxu0 0
      %529 = vmatprep.subr.bf16.mxu0 0
      %530 = vmatpush1.bf16.msra.mxu0 0
      %531 = vmatprep.subr.bf16.mxu0 0
      %532 = vmatpush1.bf16.msra.mxu0 0
      %533 = vmatprep.subr.bf16.mxu0 0
      %534 = vmatpush1.bf16.msra.mxu0 0
      %535 = vmatprep.subr.bf16.mxu0 0
      %536 = vmatpush1.bf16.msra.mxu0 0
      %537 = vmatprep.subr.bf16.mxu0 0
      %538 = vmatpush1.bf16.msra.mxu0 0
      %539 = vmatprep.subr.bf16.mxu0 0
      %540 = vmatpush1.bf16.msra.mxu0 0
      %541 = vmatprep.subr.bf16.mxu0 0
      %542 = vmatpush1.bf16.msra.mxu0 0
      %543 = vmatprep.subr.bf16.mxu0 0
      %544 = vmatpush1.bf16.msra.mxu0 0
      %545 = vmatprep.subr.bf16.mxu0 0
      %546 = vmatpush1.bf16.msra.mxu0 0
      %547 = vmatprep.subr.bf16.mxu0 0
      %548 = vmatpush1.bf16.msra.mxu0 0
      %549 = vmatprep.subr.bf16.mxu0 0
      %550 = vmatpush1.bf16.msra.mxu0 0
      %551 = vmatprep.subr.bf16.mxu0 0
      %552 = vmatpush1.bf16.msra.mxu0 0
      %553 = vmatprep.subr.bf16.mxu0 0
      %554 = vmatpush1.bf16.msra.mxu0 0
      %555 = vmatprep.subr.bf16.mxu0 0
      %556 = vmatpush1.bf16.msra.mxu0 0
      %557 = vmatprep.mubr.bf16.mxu0 0
      %558 = vmatmul.mubr.bf16.gmra.mrb[0].mxu0 %v519
      %v559 = vpop.f32.mrb[0].mxu0
      %v560 = vadd.f32 %v515, %v559
      %v561 = vpop.f32.mrb[0].mxu0
      %v562 = vpop.f32.mrb[0].mxu0
      %v563 = vadd.f32 %v515, %v562
      %v564 = vpop.f32.mrb[0].mxu0
      %565 = vdwg.mxu0
      %567 = vset.pattern.permute.xlu0 0
      %568 = vperm.xlu0 %567, %v506
      %v569 = vpop.permute.xlu0 %568
      %572 = vset.pattern.permute.xlu0 0
      %573 = vperm.xlu0 %572, %v507
      %v574 = vpop.permute.xlu0 %573
      %v576 = vmul.f32 %v560, %v569
      %v577 = vmul.f32 %v563, %v574
      %v578 = vmax.f32 %v576, 0.0
      %v579 = vmax.f32 %v577, 0.0
      %v580 = vpack.c.bf16 %v579, %v578
      %v582 = vunpack.c.l.b16 %v580
      %v583 = vunpack.c.h.b16 %v580
      %v584 = vpack.c.b16 %v582, %v582
      %v585 = vpack.c.b16 %v583, %v583
      %vm588 = vcmask 60416
      %589 = vst.msk [vmem:[%s419] sm:$0xf] %vm588, %v584
      %590 = vst.msk [vmem:[%s419 + $0x4] sm:$0xf] %vm588, %v585
      %v591 = vsel %vm517, %v578, 0.0
      %v592 = vsel %vm517, %v579, 0.0
      %v593 = vadd.f32 %v591, %v592
      %v594 = vrot.slane %v593, 4
      %v595 = vadd.f32 %v593, %v594
      %v596 = vrot.slane %v595, 2
      %v597 = vadd.f32 %v595, %v596
      %v598 = vrot.slane %v597, 1
      %v599 = vadd.f32 %v597, %v598
      %v600 = vmul.f32 %v578, %v578
      %v601 = vmul.f32 %v579, %v579
      %v602 = vsel %vm517, %v600, 0.0
      %v603 = vsel %vm517, %v601, 0.0
      %v604 = vadd.f32 %v602, %v603
      %v605 = vrot.slane %v604, 4
      %v606 = vadd.f32 %v604, %v605
      %v607 = vrot.slane %v606, 2
      %v608 = vadd.f32 %v606, %v607
      %v609 = vrot.slane %v608, 1
      %v610 = vadd.f32 %v608, %v609
      %vm611 = vcmask 1040384
      %v612 = vsel %vm611, %v599, %v610
      %vm613 = vcmask 58368
      %614 = vst.msk [vmem:[%s428] sm:$0x3] %vm613, %v612
      %v615 = vld [vmem:[%s5] sm:$0xff]
      %v616 = vpack.c.bf16 %v615, %v615
      %v617 = vld [vmem:[%s6] sm:$0x1]
      %v619 = vlaneseq
      %v620 = vshrl.u32 %v619, 7
      %v621 = vsub.s32 0, %v620
      %v622 = vrot.slane %v617, %v621
      %v625 = vsel %vm521, %v616, 0
      %627 = vmatprep.subr.bf16.mxu0 0
      %628 = vmatpush1.bf16.msra.mxu0 %v625
      %629 = vmatprep.subr.bf16.mxu0 0
      %630 = vmatpush1.bf16.msra.mxu0 0
      %631 = vmatprep.subr.bf16.mxu0 0
      %632 = vmatpush1.bf16.msra.mxu0 0
      %633 = vmatprep.subr.bf16.mxu0 0
      %634 = vmatpush1.bf16.msra.mxu0 0
      %635 = vmatprep.subr.bf16.mxu0 0
      %636 = vmatpush1.bf16.msra.mxu0 0
      %637 = vmatprep.subr.bf16.mxu0 0
      %638 = vmatpush1.bf16.msra.mxu0 0
      %639 = vmatprep.subr.bf16.mxu0 0
      %640 = vmatpush1.bf16.msra.mxu0 0
      %641 = vmatprep.subr.bf16.mxu0 0
      %642 = vmatpush1.bf16.msra.mxu0 0
      %643 = vmatprep.subr.bf16.mxu0 0
      %644 = vmatpush1.bf16.msra.mxu0 0
      %645 = vmatprep.subr.bf16.mxu0 0
      %646 = vmatpush1.bf16.msra.mxu0 0
      %647 = vmatprep.subr.bf16.mxu0 0
      %648 = vmatpush1.bf16.msra.mxu0 0
      %649 = vmatprep.subr.bf16.mxu0 0
      %650 = vmatpush1.bf16.msra.mxu0 0
      %651 = vmatprep.subr.bf16.mxu0 0
      %652 = vmatpush1.bf16.msra.mxu0 0
      %653 = vmatprep.subr.bf16.mxu0 0
      %654 = vmatpush1.bf16.msra.mxu0 0
      %655 = vmatprep.subr.bf16.mxu0 0
      %656 = vmatpush1.bf16.msra.mxu0 0
      %657 = vmatprep.subr.bf16.mxu0 0
      %658 = vmatpush1.bf16.msra.mxu0 0
      %659 = vmatprep.mubr.bf16.mxu0 0
      %660 = vmatmul.mubr.bf16.gmra.mrb[0].mxu0 %v519
      %v661 = vpop.f32.mrb[0].mxu0
      %v662 = vadd.f32 %v622, %v661
      %v663 = vpop.f32.mrb[0].mxu0
      %v664 = vpop.f32.mrb[0].mxu0
      %v665 = vadd.f32 %v622, %v664
      %v666 = vpop.f32.mrb[0].mxu0
      %667 = vdwg.mxu0
      %v668 = vmul.f32 %v662, %v569
      %v669 = vmul.f32 %v665, %v574
      %v670 = vmax.f32 %v668, 0.0
      %v671 = vmax.f32 %v669, 0.0
      %v672 = vpack.c.bf16 %v671, %v670
      %v674 = vunpack.c.l.b16 %v672
      %v675 = vunpack.c.h.b16 %v672
      %v676 = vpack.c.b16 %v674, %v674
      %v677 = vpack.c.b16 %v675, %v675
      %vm680 = vcmask 257024
      %681 = vst.msk [vmem:[%s424] sm:$0xf] %vm680, %v676
      %682 = vst.msk [vmem:[%s424 + $0x4] sm:$0xf] %vm680, %v677
      %vm683 = vcmask 261120
      %v684 = vsel %vm683, %v670, 0.0
      %v685 = vsel %vm683, %v671, 0.0
      %v686 = vadd.f32 %v684, %v685
      %v687 = vrot.slane %v686, 4
      %v688 = vadd.f32 %v686, %v687
      %v689 = vrot.slane %v688, 2
      %v690 = vadd.f32 %v688, %v689
      %v691 = vrot.slane %v690, 1
      %v692 = vadd.f32 %v690, %v691
      %v693 = vmul.f32 %v670, %v670
      %v694 = vmul.f32 %v671, %v671
      %v695 = vsel %vm683, %v693, 0.0
      %v696 = vsel %vm683, %v694, 0.0
      %v697 = vadd.f32 %v695, %v696
      %v698 = vrot.slane %v697, 4
      %v699 = vadd.f32 %v697, %v698
      %v700 = vrot.slane %v699, 2
      %v701 = vadd.f32 %v699, %v700
      %v702 = vrot.slane %v701, 1
      %v703 = vadd.f32 %v701, %v702
      %v704 = vsel %vm611, %v692, %v703
      %vm705 = vcmask 254976
      %706 = vst.msk [vmem:[%s432] sm:$0x3] %vm705, %v704
      %p707 = scmp.lt.s32.totalorder %s22, 1
      %s708 = scalar_select %p707, %s22, 1
      %s709 = smul.addr %s708, 2
      %s710 = smul.addr %s709, 4
      %s711 = scalar_lea.vmem %s7, %s710
      %p712 = scmp.lt.s32.totalorder %s22, 1
      %s713 = scalar_select %p712, %s22, 1
      %s714 = smul.addr %s713, 2
      %s715 = smul.addr %s714, 4
      %s716 = scalar_lea.vmem %s8, %s715
      %p717 = scmp.lt.s32.totalorder %s22, 1
      %s718 = scalar_select %p717, %s22, 1
      %s719 = smul.addr %s718, 2
      %s720 = scalar_lea.vmem %s9, %s719
      %p721 = scmp.lt.s32.totalorder %s22, 1
      %s722 = scalar_select %p721, %s22, 1
      %s723 = smul.addr %s722, 2
      %s724 = scalar_lea.vmem %s10, %s723
      // Predicated region
      $region49: #{diffpool_net_forward.7} parent=47 // pred_check
        %p725 = pneg %p202
      $region50: #{diffpool_net_forward.7} parent=47 // pred_check_branch
        %727 = sbr.rel (%p725) target = $region52
      $region51: #{diffpool_net_forward.7} parent=47 // pred_region
        _
      $region52: #{diffpool_net_forward.7} parent=47 // pred_fallthru
        _
      // Predicated region
      $region53: #{diffpool_net_forward.7} parent=47 // pred_check
        %p728 = pneg %p228
      $region54: #{diffpool_net_forward.7} parent=47 // pred_check_branch
        %730 = sbr.rel (%p728) target = $region56
      $region55: #{diffpool_net_forward.7} parent=47 // pred_region
        _
      $region56: #{diffpool_net_forward.7} parent=47 // pred_fallthru
        _
      // Predicated region
      $region57: #{diffpool_net_forward.7} parent=47 // pred_check
        %p731 = pneg %p254
      $region58: #{diffpool_net_forward.7} parent=47 // pred_check_branch
        %733 = sbr.rel (%p731) target = $region60
      $region59: #{diffpool_net_forward.7} parent=47 // pred_region
        _
      $region60: #{diffpool_net_forward.7} parent=47 // pred_fallthru
        _
      // Predicated region
      $region61: #{diffpool_net_forward.7} parent=47 // pred_check
        %p734 = pneg %p280
      $region62: #{diffpool_net_forward.7} parent=47 // pred_check_branch
        %736 = sbr.rel (%p734) target = $region64
      $region63: #{diffpool_net_forward.7} parent=47 // pred_region
        _
      $region64: #{diffpool_net_forward.7} parent=47 // pred_fallthru
        _
    $region48: #{diffpool_net_forward.7} parent=5 // pred_fallthru
      _
    %p737 = scmp.le.s32.totalorder 2, %s17
    // Predicated region
    $region65: #{diffpool_net_forward.7} parent=5 // pred_check
      %p738 = pneg %p737
    $region66: #{diffpool_net_forward.7} parent=5 // pred_check_branch
      %740 = sbr.rel (%p738) target = $region68
    $region67: #{diffpool_net_forward.7} parent=5 // pred_region
      %s741 = ssub.s32 %s17, 2
      // Predicated region
      $region69: #{diffpool_net_forward.7} parent=67 // pred_check
        %p742 = pneg %p208
      $region70: #{diffpool_net_forward.7} parent=67 // pred_check_branch
        %744 = sbr.rel (%p742) target = $region72
      $region71: #{diffpool_net_forward.7} parent=67 // pred_region
        %p745 = scmp.lt.s32.totalorder %s23, 1
        %s746 = scalar_select %p745, %s23, 1
        %s747 = smul.addr %s746, 2
        %s748 = smul.addr %s747, 4
        %s749 = scalar_lea.vmem %s7, %s748
      $region72: #{diffpool_net_forward.7} parent=67 // pred_fallthru
        _
      // Predicated region
      $region73: #{diffpool_net_forward.7} parent=67 // pred_check
        %p750 = pneg %p234
      $region74: #{diffpool_net_forward.7} parent=67 // pred_check_branch
        %752 = sbr.rel (%p750) target = $region76
      $region75: #{diffpool_net_forward.7} parent=67 // pred_region
        %p753 = scmp.lt.s32.totalorder %s23, 1
        %s754 = scalar_select %p753, %s23, 1
        %s755 = smul.addr %s754, 2
        %s756 = smul.addr %s755, 4
        %s757 = scalar_lea.vmem %s8, %s756
      $region76: #{diffpool_net_forward.7} parent=67 // pred_fallthru
        _
      // Predicated region
      $region77: #{diffpool_net_forward.7} parent=67 // pred_check
        %p758 = pneg %p260
      $region78: #{diffpool_net_forward.7} parent=67 // pred_check_branch
        %760 = sbr.rel (%p758) target = $region80
      $region79: #{diffpool_net_forward.7} parent=67 // pred_region
        %p761 = scmp.lt.s32.totalorder %s23, 1
        %s762 = scalar_select %p761, %s23, 1
        %s763 = smul.addr %s762, 2
        %s764 = scalar_lea.vmem %s9, %s763
      $region80: #{diffpool_net_forward.7} parent=67 // pred_fallthru
        _
      // Predicated region
      $region81: #{diffpool_net_forward.7} parent=67 // pred_check
        %p765 = pneg %p286
      $region82: #{diffpool_net_forward.7} parent=67 // pred_check_branch
        %767 = sbr.rel (%p765) target = $region84
      $region83: #{diffpool_net_forward.7} parent=67 // pred_region
        %p768 = scmp.lt.s32.totalorder %s23, 1
        %s769 = scalar_select %p768, %s23, 1
        %s770 = smul.addr %s769, 2
        %s771 = scalar_lea.vmem %s10, %s770
      $region84: #{diffpool_net_forward.7} parent=67 // pred_fallthru
        _
    $region68: #{diffpool_net_forward.7} parent=5 // pred_fallthru
      _
  $region6: #{diffpool_net_forward.7} parent=0 // loop_footer
    %s21 = sadd.s32 1, %s17
  $region7: #{diffpool_net_forward.7} parent=0 // loop_footer_branch
    %16 = sbr.rel target = $region3
  $region8: #{diffpool_net_forward.7} parent=0 // loop_exit
    _

// kernel: diffpool_net_forward.9
$region0: #{diffpool_net_forward.9}
  #allocation0 [shape = 'u32[]', space=smem, size = 0x4, offset = 0x4, fixed_abs, tag = 'smem constant byte address 0x4 - core index']
  #allocation1 [shape = 'u32[144,128]{1,0:T(1,128)}', space=vmem, size = 0x12000, scoped, tag = 'internal scratch']
  %s0 = inlined_call_operand.vmem [shape: bf16[2,16,32], index: 0, kind: input, shape index: {}]
  %s1 = inlined_call_operand.vmem [shape: bf16[2,16,16], index: 1, kind: input, shape index: {}]
  %s2 = inlined_call_operand.vmem [shape: bf16[2,16,8], index: 2, kind: input, shape index: {}]
  %s3 = inlined_call_operand.vmem [shape: f32[1,32], index: 3, kind: input, shape index: {}]
  %s4 = inlined_call_operand.vmem [shape: f32[1,32], index: 4, kind: input, shape index: {}]
  %s5 = inlined_call_operand.vmem [shape: f32[2,16,1], index: 5, kind: input, shape index: {}]
  %s6 = inlined_call_operand.vmem [shape: bf16[2,8,32], index: 6, kind: output, shape index: {0}]
  %s7 = inlined_call_operand.vmem [shape: f32[2,8,8], index: 7, kind: output, shape index: {1}]
  %8 = xla_tuple %s6, %s7
  %s9 = sld [smem:[#allocation0]]
  $region65: #{diffpool_net_forward.9} parent=0
    _
  %s11 = ssub.s32 1, %s9
  %s12 = scalar_select 0, %s11, %s9
  loop: start=0, step=1, limit=4
  $region2: #{diffpool_net_forward.9} parent=0 // loop_pre_header
    _
  $region3: #{diffpool_net_forward.9} parent=0 // loop_header
    %s14 = sphi 0, %s18
    %p15 = scmp.ge.s32.totalorder %s14, 4
    %s24 = sphi 0, %s26
    %s27 = sphi 0, %s24
    %s28 = sphi 0, %s27
    %s44 = sphi 0, %s28
    %s50 = sphi 0, %s52
    %s53 = sphi 0, %s50
    %s54 = sphi 0, %s53
    %s70 = sphi 0, %s54
    %s76 = sphi 0, %s78
    %s79 = sphi 0, %s76
    %s80 = sphi 0, %s79
    %s96 = sphi 0, %s80
    %s100 = sphi 0, %s100
    %s102 = sphi 0, %s100
    %s103 = sphi 0, %s102
    %s117 = sphi 0, %s103
    %s121 = sphi 0, %s121
    %s123 = sphi 0, %s121
    %s124 = sphi 0, %s123
    %s138 = sphi 0, %s124
    %s144 = sphi 0, %s146
    %s147 = sphi 0, %s144
    %s148 = sphi 0, %s147
    %s164 = sphi 0, %s148
    %s170 = sphi 0, %s172
    %s173 = sphi 0, %s170
    %s174 = sphi 0, %s173
    %s190 = sphi 0, %s174
    %s196 = sphi 0, %s198
    %s199 = sphi 0, %s196
    %s200 = sphi 0, %s199
    %s216 = sphi 0, %s200
  $region4: #{diffpool_net_forward.9} parent=0 // loop_header_branch
    %17 = sbr.rel (%p15) target = $region8
  $region5: #{diffpool_net_forward.9} parent=0 // loop_body
    %s19 = ssub.s32 %s14, 1
    %s20 = ssub.s32 %s14, 2
    %s21 = sadd.s32 %s14, 1
    %s22 = ssub.s32 %s14, %s21
    %p23 = scmp.eq.s32.totalorder %s22, 0
    %s25 = sadd.s32 %s24, 1
    %s26 = scalar_select %p23, %s24, %s25
    %p29 = pneg %p23
    %p30 = scmp.eq.s32.totalorder %s14, 1
    %p31 = por %p29, %p30
    %p32 = scmp.ne.s32.totalorder %s24, %s27
    %p33 = scmp.eq.s32.totalorder %s14, 0
    %p34 = por %p32, %p33
    %p35 = scmp.ne.s32.totalorder %s24, %s27
    %p36 = scmp.eq.s32.totalorder %s19, 1
    %p37 = por %p35, %p36
    %p38 = scmp.ne.s32.totalorder %s27, %s28
    %p39 = scmp.eq.s32.totalorder %s19, 0
    %p40 = por %p38, %p39
    %p41 = scmp.ne.s32.totalorder %s27, %s28
    %p42 = scmp.eq.s32.totalorder %s20, 1
    %p43 = por %p41, %p42
    %p45 = scmp.ne.s32.totalorder %s28, %s44
    %p46 = scmp.eq.s32.totalorder %s20, 0
    %p47 = por %p45, %p46
    %s48 = ssub.s32 %s14, %s21
    %p49 = scmp.eq.s32.totalorder %s48, 0
    %s51 = sadd.s32 %s50, 1
    %s52 = scalar_select %p49, %s50, %s51
    %p55 = pneg %p49
    %p56 = scmp.eq.s32.totalorder %s14, 1
    %p57 = por %p55, %p56
    %p58 = scmp.ne.s32.totalorder %s50, %s53
    %p59 = scmp.eq.s32.totalorder %s14, 0
    %p60 = por %p58, %p59
    %p61 = scmp.ne.s32.totalorder %s50, %s53
    %p62 = scmp.eq.s32.totalorder %s19, 1
    %p63 = por %p61, %p62
    %p64 = scmp.ne.s32.totalorder %s53, %s54
    %p65 = scmp.eq.s32.totalorder %s19, 0
    %p66 = por %p64, %p65
    %p67 = scmp.ne.s32.totalorder %s53, %s54
    %p68 = scmp.eq.s32.totalorder %s20, 1
    %p69 = por %p67, %p68
    %p71 = scmp.ne.s32.totalorder %s54, %s70
    %p72 = scmp.eq.s32.totalorder %s20, 0
    %p73 = por %p71, %p72
    %s74 = ssub.s32 %s14, %s21
    %p75 = scmp.eq.s32.totalorder %s74, 0
    %s77 = sadd.s32 %s76, 1
    %s78 = scalar_select %p75, %s76, %s77
    %p81 = pneg %p75
    %p82 = scmp.eq.s32.totalorder %s14, 1
    %p83 = por %p81, %p82
    %p84 = scmp.ne.s32.totalorder %s76, %s79
    %p85 = scmp.eq.s32.totalorder %s14, 0
    %p86 = por %p84, %p85
    %p87 = scmp.ne.s32.totalorder %s76, %s79
    %p88 = scmp.eq.s32.totalorder %s19, 1
    %p89 = por %p87, %p88
    %p90 = scmp.ne.s32.totalorder %s79, %s80
    %p91 = scmp.eq.s32.totalorder %s19, 0
    %p92 = por %p90, %p91
    %p93 = scmp.ne.s32.totalorder %s79, %s80
    %p94 = scmp.eq.s32.totalorder %s20, 1
    %p95 = por %p93, %p94
    %p97 = scmp.ne.s32.totalorder %s80, %s96
    %p98 = scmp.eq.s32.totalorder %s20, 0
    %p99 = por %p97, %p98
    %s101 = sadd.s32 %s100, 1
    %p104 = scmp.eq.s32.totalorder %s14, 1
    %p105 = scmp.ne.s32.totalorder %s100, %s102
    %p106 = scmp.eq.s32.totalorder %s14, 0
    %p107 = por %p105, %p106
    %p108 = scmp.ne.s32.totalorder %s100, %s102
    %p109 = scmp.eq.s32.totalorder %s19, 1
    %p110 = por %p108, %p109
    %p111 = scmp.ne.s32.totalorder %s102, %s103
    %p112 = scmp.eq.s32.totalorder %s19, 0
    %p113 = por %p111, %p112
    %p114 = scmp.ne.s32.totalorder %s102, %s103
    %p115 = scmp.eq.s32.totalorder %s20, 1
    %p116 = por %p114, %p115
    %p118 = scmp.ne.s32.totalorder %s103, %s117
    %p119 = scmp.eq.s32.totalorder %s20, 0
    %p120 = por %p118, %p119
    %s122 = sadd.s32 %s121, 1
    %p125 = scmp.eq.s32.totalorder %s14, 1
    %p126 = scmp.ne.s32.totalorder %s121, %s123
    %p127 = scmp.eq.s32.totalorder %s14, 0
    %p128 = por %p126, %p127
    %p129 = scmp.ne.s32.totalorder %s121, %s123
    %p130 = scmp.eq.s32.totalorder %s19, 1
    %p131 = por %p129, %p130
    %p132 = scmp.ne.s32.totalorder %s123, %s124
    %p133 = scmp.eq.s32.totalorder %s19, 0
    %p134 = por %p132, %p133
    %p135 = scmp.ne.s32.totalorder %s123, %s124
    %p136 = scmp.eq.s32.totalorder %s20, 1
    %p137 = por %p135, %p136
    %p139 = scmp.ne.s32.totalorder %s124, %s138
    %p140 = scmp.eq.s32.totalorder %s20, 0
    %p141 = por %p139, %p140
    %s142 = ssub.s32 %s14, %s21
    %p143 = scmp.eq.s32.totalorder %s142, 0
    %s145 = sadd.s32 %s144, 1
    %s146 = scalar_select %p143, %s144, %s145
    %p149 = pneg %p143
    %p150 = scmp.eq.s32.totalorder %s14, 1
    %p151 = por %p149, %p150
    %p152 = scmp.ne.s32.totalorder %s144, %s147
    %p153 = scmp.eq.s32.totalorder %s14, 0
    %p154 = por %p152, %p153
    %p155 = scmp.ne.s32.totalorder %s144, %s147
    %p156 = scmp.eq.s32.totalorder %s19, 1
    %p157 = por %p155, %p156
    %p158 = scmp.ne.s32.totalorder %s147, %s148
    %p159 = scmp.eq.s32.totalorder %s19, 0
    %p160 = por %p158, %p159
    %p161 = scmp.ne.s32.totalorder %s147, %s148
    %p162 = scmp.eq.s32.totalorder %s20, 1
    %p163 = por %p161, %p162
    %p165 = scmp.ne.s32.totalorder %s148, %s164
    %p166 = scmp.eq.s32.totalorder %s20, 0
    %p167 = por %p165, %p166
    %s168 = ssub.s32 %s14, %s21
    %p169 = scmp.eq.s32.totalorder %s168, 0
    %s171 = sadd.s32 %s170, 1
    %s172 = scalar_select %p169, %s170, %s171
    %p175 = pneg %p169
    %p176 = scmp.eq.s32.totalorder %s14, 1
    %p177 = por %p175, %p176
    %p178 = scmp.ne.s32.totalorder %s170, %s173
    %p179 = scmp.eq.s32.totalorder %s14, 0
    %p180 = por %p178, %p179
    %p181 = scmp.ne.s32.totalorder %s170, %s173
    %p182 = scmp.eq.s32.totalorder %s19, 1
    %p183 = por %p181, %p182
    %p184 = scmp.ne.s32.totalorder %s173, %s174
    %p185 = scmp.eq.s32.totalorder %s19, 0
    %p186 = por %p184, %p185
    %p187 = scmp.ne.s32.totalorder %s173, %s174
    %p188 = scmp.eq.s32.totalorder %s20, 1
    %p189 = por %p187, %p188
    %p191 = scmp.ne.s32.totalorder %s174, %s190
    %p192 = scmp.eq.s32.totalorder %s20, 0
    %p193 = por %p191, %p192
    %s194 = ssub.s32 %s14, %s21
    %p195 = scmp.eq.s32.totalorder %s194, 0
    %s197 = sadd.s32 %s196, 1
    %s198 = scalar_select %p195, %s196, %s197
    %p201 = pneg %p195
    %p202 = scmp.eq.s32.totalorder %s14, 1
    %p203 = por %p201, %p202
    %p204 = scmp.ne.s32.totalorder %s196, %s199
    %p205 = scmp.eq.s32.totalorder %s14, 0
    %p206 = por %p204, %p205
    %p207 = scmp.ne.s32.totalorder %s196, %s199
    %p208 = scmp.eq.s32.totalorder %s19, 1
    %p209 = por %p207, %p208
    %p210 = scmp.ne.s32.totalorder %s199, %s200
    %p211 = scmp.eq.s32.totalorder %s19, 0
    %p212 = por %p210, %p211
    %p213 = scmp.ne.s32.totalorder %s199, %s200
    %p214 = scmp.eq.s32.totalorder %s20, 1
    %p215 = por %p213, %p214
    %p217 = scmp.ne.s32.totalorder %s200, %s216
    %p218 = scmp.eq.s32.totalorder %s20, 0
    %p219 = por %p217, %p218
    %p220 = scmp.le.s32.totalorder 1, %s14
    %p221 = scmp.lt.s32.totalorder %s14, 3
    %p222 = pnand %p220, %p221
    %p223 = pneg %p222
    // Predicated region
    $region9: #{diffpool_net_forward.9} parent=5 // pred_check
      _
    $region10: #{diffpool_net_forward.9} parent=5 // pred_check_branch
      %225 = sbr.rel (%p222) target = $region12
    $region11: #{diffpool_net_forward.9} parent=5 // pred_region
      %s226 = ssub.s32 %s14, 1
      // Predicated region
      $region13: #{diffpool_net_forward.9} parent=11 // pred_check
        %p227 = pneg %p113
      $region14: #{diffpool_net_forward.9} parent=11 // pred_check_branch
        %229 = sbr.rel (%p227) target = $region16
      $region15: #{diffpool_net_forward.9} parent=11 // pred_region
        _
      $region16: #{diffpool_net_forward.9} parent=11 // pred_fallthru
        _
      // Predicated region
      $region17: #{diffpool_net_forward.9} parent=11 // pred_check
        %p230 = pneg %p134
      $region18: #{diffpool_net_forward.9} parent=11 // pred_check_branch
        %232 = sbr.rel (%p230) target = $region20
      $region19: #{diffpool_net_forward.9} parent=11 // pred_region
        _
      $region20: #{diffpool_net_forward.9} parent=11 // pred_fallthru
        _
    $region12: #{diffpool_net_forward.9} parent=5 // pred_fallthru
      _
    %p233 = scmp.lt.s32.totalorder %s14, 2
    // Predicated region
    $region21: #{diffpool_net_forward.9} parent=5 // pred_check
      %p234 = pneg %p233
    $region22: #{diffpool_net_forward.9} parent=5 // pred_check_branch
      %236 = sbr.rel (%p234) target = $region24
    $region23: #{diffpool_net_forward.9} parent=5 // pred_region
      // Predicated region
      $region25: #{diffpool_net_forward.9} parent=23 // pred_check
        %p237 = pneg %p34
      $region26: #{diffpool_net_forward.9} parent=23 // pred_check_branch
        %239 = sbr.rel (%p237) target = $region28
      $region27: #{diffpool_net_forward.9} parent=23 // pred_region
        %p240 = scmp.lt.s32.totalorder %s14, 1
        %s241 = scalar_select %p240, %s14, 1
        %s242 = smul.addr %s241, 2
        %s243 = smul.addr %s242, 4
        %s244 = scalar_lea.vmem %s0, %s243
      $region28: #{diffpool_net_forward.9} parent=23 // pred_fallthru
        _
      // Predicated region
      $region29: #{diffpool_net_forward.9} parent=23 // pred_check
        %p245 = pneg %p60
      $region30: #{diffpool_net_forward.9} parent=23 // pred_check_branch
        %247 = sbr.rel (%p245) target = $region32
      $region31: #{diffpool_net_forward.9} parent=23 // pred_region
        %p248 = scmp.lt.s32.totalorder %s14, 1
        %s249 = scalar_select %p248, %s14, 1
        %s250 = smul.addr %s249, 2
        %s251 = smul.addr %s250, 4
        %s252 = scalar_lea.vmem %s1, %s251
      $region32: #{diffpool_net_forward.9} parent=23 // pred_fallthru
        _
      // Predicated region
      $region33: #{diffpool_net_forward.9} parent=23 // pred_check
        %p253 = pneg %p86
      $region34: #{diffpool_net_forward.9} parent=23 // pred_check_branch
        %255 = sbr.rel (%p253) target = $region36
      $region35: #{diffpool_net_forward.9} parent=23 // pred_region
        %p256 = scmp.lt.s32.totalorder %s14, 1
        %s257 = scalar_select %p256, %s14, 1
        %s258 = smul.addr %s257, 2
        %s259 = smul.addr %s258, 4
        %s260 = scalar_lea.vmem %s2, %s259
      $region36: #{diffpool_net_forward.9} parent=23 // pred_fallthru
        _
      // Predicated region
      $region37: #{diffpool_net_forward.9} parent=23 // pred_check
        %p261 = pneg %p154
      $region38: #{diffpool_net_forward.9} parent=23 // pred_check_branch
        %263 = sbr.rel (%p261) target = $region40
      $region39: #{diffpool_net_forward.9} parent=23 // pred_region
        %p264 = scmp.lt.s32.totalorder %s14, 1
        %s265 = scalar_select %p264, %s14, 1
        %s266 = smul.addr %s265, 2
        %s267 = smul.addr %s266, 8
        %s268 = scalar_lea.vmem %s5, %s267
      $region40: #{diffpool_net_forward.9} parent=23 // pred_fallthru
        _
    $region24: #{diffpool_net_forward.9} parent=5 // pred_fallthru
      _
    %p269 = scmp.le.s32.totalorder 1, %s14
    %p270 = scmp.lt.s32.totalorder %s14, 3
    %p271 = pnand %p269, %p270
    %p272 = pneg %p271
    // Predicated region
    $region41: #{diffpool_net_forward.9} parent=5 // pred_check
      _
    $region42: #{diffpool_net_forward.9} parent=5 // pred_check_branch
      %274 = sbr.rel (%p271) target = $region44
    $region43: #{diffpool_net_forward.9} parent=5 // pred_region
      %s275 = ssub.s32 %s14, 1
      %p276 = scmp.lt.s32.totalorder %s19, 1
      %s277 = scalar_select %p276, %s19, 1
      %s278 = smul.addr %s277, 2
      %s279 = smul.addr %s278, 4
      %s280 = scalar_lea.vmem %s0, %s279
      %p281 = pneg %p40
      %p282 = pneg %p37
      %p283 = scmp.lt.s32.totalorder %s19, 1
      %s284 = scalar_select %p283, %s19, 1
      %s285 = smul.addr %s284, 2
      %s286 = smul.addr %s285, 4
      %s287 = scalar_lea.vmem %s1, %s286
      %p288 = pneg %p66
      %p289 = pneg %p63
      %p290 = scmp.lt.s32.totalorder %s19, 1
      %s291 = scalar_select %p290, %s19, 1
      %s292 = smul.addr %s291, 2
      %s293 = smul.addr %s292, 4
      %s294 = scalar_lea.vmem %s2, %s293
      %p295 = pneg %p92
      %p296 = pneg %p89
      %p297 = pneg %p113
      %p298 = pneg %p110
      %p299 = pneg %p134
      %p300 = pneg %p131
      %p301 = scmp.lt.s32.totalorder %s19, 1
      %s302 = scalar_select %p301, %s19, 1
      %s303 = smul.addr %s302, 2
      %s304 = smul.addr %s303, 8
      %s305 = scalar_lea.vmem %s5, %s304
      %p306 = pneg %p160
      %p307 = pneg %p157
      %p308 = pneg %p186
      %p309 = pneg %p183
      %p310 = scmp.lt.s32.totalorder %s19, 1
      %s311 = scalar_select %p310, %s19, 1
      %s312 = smul.addr %s311, 4
      %s313 = scalar_lea.vmem %s6, %s312
      %p314 = pneg %p212
      %p315 = pneg %p209
      %p316 = scmp.lt.s32.totalorder %s19, 1
      %s317 = scalar_select %p316, %s19, 1
      %s318 = smul.addr %s317, 8
      %s319 = scalar_lea.vmem %s7, %s318
      %p320 = scmp.lt.s32.totalorder %s19, 1
      %s321 = scalar_select %p320, %s19, 1
      %s322 = smul.addr %s321, 2
      %s323 = smul.addr %s322, 4
      %s324 = scalar_lea.vmem %s0, %s323
      %p325 = scmp.lt.s32.totalorder %s19, 1
      %s326 = scalar_select %p325, %s19, 1
      %s327 = smul.addr %s326, 2
      %s328 = smul.addr %s327, 4
      %s329 = scalar_lea.vmem %s1, %s328
      %p330 = scmp.lt.s32.totalorder %s19, 1
      %s331 = scalar_select %p330, %s19, 1
      %s332 = smul.addr %s331, 2
      %s333 = smul.addr %s332, 4
      %s334 = scalar_lea.vmem %s2, %s333
      %p335 = scmp.lt.s32.totalorder %s19, 1
      %s336 = scalar_select %p335, %s19, 1
      %s337 = smul.addr %s336, 2
      %s338 = smul.addr %s337, 8
      %s339 = scalar_lea.vmem %s5, %s338
      %p340 = scmp.lt.s32.totalorder %s19, 1
      %s341 = scalar_select %p340, %s19, 1
      %s342 = smul.addr %s341, 4
      %s343 = scalar_lea.vmem %s6, %s342
      %p344 = scmp.lt.s32.totalorder %s19, 1
      %s345 = scalar_select %p344, %s19, 1
      %s346 = smul.addr %s345, 8
      %s347 = scalar_lea.vmem %s7, %s346
      %v349 = vld [vmem:[%s3] sm:$0x1]
      %v350 = vld [vmem:[%s4] sm:$0x1]
      %v351 = vld [vmem:[%s324] sm:$0xf]
      %v352 = vld [vmem:[%s324 + $0x4] sm:$0xf]
      %v353 = vunpack.c.l.bf16 %v351
      %v354 = vunpack.c.l.bf16 %v352
      %v356 = vlaneseq
      %v357 = vshrl.u32 %v356, 7
      %v358 = vsub.s32 0, %v357
      %v359 = vrot.slane %v349, %v358
      %v361 = vmul.f32 %v353, %v359
      %v362 = vmul.f32 %v354, %v359
      %v364 = vlaneseq
      %v365 = vshrl.u32 %v364, 7
      %v366 = vsub.s32 0, %v365
      %v367 = vrot.slane %v350, %v366
      %v369 = vadd.f32 %v361, %v367
      %v370 = vadd.f32 %v362, %v367
      %v371 = vld [vmem:[%s334] sm:$0xf]
      %v372 = vld [vmem:[%s334 + $0x4] sm:$0xf]
      %v373 = vunpack.c.l.bf16 %v371
      %v374 = vunpack.c.l.bf16 %v372
      %vm375 = vcmask 64512
      %v376 = vsel %vm375, %v373, -inf
      %377 = vmax.xlane.f32.xlu0 %v376
      %v378 = vpop.xlane.xlu0 %377
      %v379 = vsel %vm375, %v374, -inf
      %380 = vmax.xlane.f32.xlu0 %v379
      %v381 = vpop.xlane.xlu0 %380
      %v382 = vsub.f32 %v373, %v378
      %v383 = vsub.f32 %v374, %v381
      %v384 = vmul.f32 %v382, 1.442695
      %v385 = vpow.pop %v384
      %v386 = vmul.f32 %v383, 1.442695
      %v387 = vpow.pop %v386
      %v388 = vsel %vm375, %v385, 0.0
      %389 = vadd.xlane.f32.xlu0 %v388
      %v390 = vpop.xlane.xlu0 %389
      %v391 = vsel %vm375, %v387, 0.0
      %392 = vadd.xlane.f32.xlu0 %v391
      %v393 = vpop.xlane.xlu0 %392
      %v394 = vrcp.pop %v390
      %v395 = vmul.f32 %v385, %v394
      %v396 = vrcp.pop %v393
      %v397 = vmul.f32 %v387, %v396
      %v398 = vld [vmem:[%s339] sm:$0xff]
      %v399 = vld [vmem:[%s339 + $0x8] sm:$0xff]
      %401 = vset.pattern.permute.xlu0 0
      %402 = vperm.xlu0 %401, %v398
      %v403 = vpop.permute.xlu0 %402
      %406 = vset.pattern.permute.xlu0 0
      %407 = vperm.xlu0 %406, %v399
      %v408 = vpop.permute.xlu0 %407
      %v410 = vmul.f32 %v369, %v403
      %v411 = vmul.f32 %v370, %v408
      %v412 = vmul.f32 %v395, %v403
      %v413 = vmul.f32 %v397, %v408
      %414 = vxpose.xlu0.b32.start [1/16] %v412, 128
      %415 = vxpose.xlu0.b32.cont [2/16] %v413, 128
      %416 = vxpose.xlu0.b32.cont [3/16] 0.0, 128
      %417 = vxpose.xlu0.b32.cont [4/16] 0.0, 128
      %418 = vxpose.xlu0.b32.cont [5/16] 0.0, 128
      %419 = vxpose.xlu0.b32.cont [6/16] 0.0, 128
      %420 = vxpose.xlu0.b32.cont [7/16] 0.0, 128
      %421 = vxpose.xlu0.b32.cont [8/16] 0.0, 128
      %422 = vxpose.xlu0.b32.cont [9/16] 0.0, 128
      %423 = vxpose.xlu0.b32.cont [10/16] 0.0, 128
      %424 = vxpose.xlu0.b32.cont [11/16] 0.0, 128
      %425 = vxpose.xlu0.b32.cont [12/16] 0.0, 128
      %426 = vxpose.xlu0.b32.cont [13/16] 0.0, 128
      %427 = vxpose.xlu0.b32.cont [14/16] 0.0, 128
      %428 = vxpose.xlu0.b32.cont [15/16] 0.0, 128
      %429 = vxpose.xlu0.b32.end [16/16] 0.0, 128
      %v430 = vpop.trf.xlu0
      %v431 = vpop.trf.xlu0
      %v432 = vpop.trf.xlu0
      %v433 = vpop.trf.xlu0
      %v434 = vpop.trf.xlu0
      %v435 = vpop.trf.xlu0
      %v436 = vpop.trf.xlu0
      %v437 = vpop.trf.xlu0
      %v438 = vpop.trf.xlu0
      %v439 = vpop.trf.xlu0
      %v440 = vpop.trf.xlu0
      %v441 = vpop.trf.xlu0
      %v442 = vpop.trf.xlu0
      %v443 = vpop.trf.xlu0
      %v444 = vpop.trf.xlu0
      %v445 = vpop.trf.xlu0
      %v446 = vpack.c.bf16 %v430, %v430
      %v447 = vpack.c.bf16 %v413, %v412
      %v448 = vld [vmem:[%s329] sm:$0xf]
      %v449 = vld [vmem:[%s329 + $0x4] sm:$0xf]
      %v450 = vpack.c.bf16 %v411, %v410
      %vm451 = vcmask 130048
      %v453 = vsel %vm451, %v446, 0
      %455 = vmatprep.subr.bf16.mxu0 0
      %456 = vmatpush1.bf16.msra.mxu0 %v450
      %457 = vmatprep.subr.bf16.mxu0 0
      %458 = vmatpush1.bf16.msra.mxu0 0
      %459 = vmatprep.subr.bf16.mxu0 0
      %460 = vmatpush1.bf16.msra.mxu0 0
      %461 = vmatprep.subr.bf16.mxu0 0
      %462 = vmatpush1.bf16.msra.mxu0 0
      %463 = vmatprep.subr.bf16.mxu0 0
      %464 = vmatpush1.bf16.msra.mxu0 0
      %465 = vmatprep.subr.bf16.mxu0 0
      %466 = vmatpush1.bf16.msra.mxu0 0
      %467 = vmatprep.subr.bf16.mxu0 0
      %468 = vmatpush1.bf16.msra.mxu0 0
      %469 = vmatprep.subr.bf16.mxu0 0
      %470 = vmatpush1.bf16.msra.mxu0 0
      %471 = vmatprep.subr.bf16.mxu0 0
      %472 = vmatpush1.bf16.msra.mxu0 0
      %473 = vmatprep.subr.bf16.mxu0 0
      %474 = vmatpush1.bf16.msra.mxu0 0
      %475 = vmatprep.subr.bf16.mxu0 0
      %476 = vmatpush1.bf16.msra.mxu0 0
      %477 = vmatprep.subr.bf16.mxu0 0
      %478 = vmatpush1.bf16.msra.mxu0 0
      %479 = vmatprep.subr.bf16.mxu0 0
      %480 = vmatpush1.bf16.msra.mxu0 0
      %481 = vmatprep.subr.bf16.mxu0 0
      %482 = vmatpush1.bf16.msra.mxu0 0
      %483 = vmatprep.subr.bf16.mxu0 0
      %484 = vmatpush1.bf16.msra.mxu0 0
      %485 = vmatprep.subr.bf16.mxu0 0
      %486 = vmatpush1.bf16.msra.mxu0 0
      %487 = vmatprep.mubr.bf16.mxu0 0
      %488 = vmatmul.mubr.bf16.gmra.mrb[0].mxu0 %v453
      %v489 = vpop.f32.mrb[0].mxu0
      %v490 = vadd.f32 0.0, %v489
      %v491 = vpop.f32.mrb[0].mxu0
      %v492 = vpop.f32.mrb[0].mxu0
      %v493 = vpop.f32.mrb[0].mxu0
      %494 = vdwg.mxu0
      %v497 = vunpack.c.l.b16 %v448
      %v498 = vunpack.c.l.b16 %v449
      %v499 = vpack.c.b16 %v498, %v497
      %501 = vmatprep.subr.bf16.mxu0 0
      %502 = vmatpush1.bf16.msra.mxu0 %v499
      %503 = vmatprep.subr.bf16.mxu0 0
      %504 = vmatpush1.bf16.msra.mxu0 0
      %505 = vmatprep.subr.bf16.mxu0 0
      %506 = vmatpush1.bf16.msra.mxu0 0
      %507 = vmatprep.subr.bf16.mxu0 0
      %508 = vmatpush1.bf16.msra.mxu0 0
      %509 = vmatprep.subr.bf16.mxu0 0
      %510 = vmatpush1.bf16.msra.mxu0 0
      %511 = vmatprep.subr.bf16.mxu0 0
      %512 = vmatpush1.bf16.msra.mxu0 0
      %513 = vmatprep.subr.bf16.mxu0 0
      %514 = vmatpush1.bf16.msra.mxu0 0
      %515 = vmatprep.subr.bf16.mxu0 0
      %516 = vmatpush1.bf16.msra.mxu0 0
      %517 = vmatprep.subr.bf16.mxu0 0
      %518 = vmatpush1.bf16.msra.mxu0 0
      %519 = vmatprep.subr.bf16.mxu0 0
      %520 = vmatpush1.bf16.msra.mxu0 0
      %521 = vmatprep.subr.bf16.mxu0 0
      %522 = vmatpush1.bf16.msra.mxu0 0
      %523 = vmatprep.subr.bf16.mxu0 0
      %524 = vmatpush1.bf16.msra.mxu0 0
      %525 = vmatprep.subr.bf16.mxu0 0
      %526 = vmatpush1.bf16.msra.mxu0 0
      %527 = vmatprep.subr.bf16.mxu0 0
      %528 = vmatpush1.bf16.msra.mxu0 0
      %529 = vmatprep.subr.bf16.mxu0 0
      %530 = vmatpush1.bf16.msra.mxu0 0
      %531 = vmatprep.subr.bf16.mxu0 0
      %532 = vmatpush1.bf16.msra.mxu0 0
      %533 = vmatprep.mubr.bf16.mxu0 0
      %534 = vmatmul.mubr.bf16.gmra.mrb[0].mxu0 %v453
      %v535 = vpop.f32.mrb[0].mxu0
      %v536 = vadd.f32 0.0, %v535
      %v537 = vpop.f32.mrb[0].mxu0
      %v538 = vpop.f32.mrb[0].mxu0
      %v539 = vpop.f32.mrb[0].mxu0
      %540 = vdwg.mxu0
      %v541 = vpack.c.bf16 %v536, %v536
      %v543 = vsel %vm451, %v541, 0
      %545 = vmatprep.subr.bf16.mxu0 0
      %546 = vmatpush1.bf16.msra.mxu0 %v447
      %547 = vmatprep.subr.bf16.mxu0 0
      %548 = vmatpush1.bf16.msra.mxu0 0
      %549 = vmatprep.subr.bf16.mxu0 0
      %550 = vmatpush1.bf16.msra.mxu0 0
      %551 = vmatprep.subr.bf16.mxu0 0
      %552 = vmatpush1.bf16.msra.mxu0 0
      %553 = vmatprep.subr.bf16.mxu0 0
      %554 = vmatpush1.bf16.msra.mxu0 0
      %555 = vmatprep.subr.bf16.mxu0 0
      %556 = vmatpush1.bf16.msra.mxu0 0
      %557 = vmatprep.subr.bf16.mxu0 0
      %558 = vmatpush1.bf16.msra.mxu0 0
      %559 = vmatprep.subr.bf16.mxu0 0
      %560 = vmatpush1.bf16.msra.mxu0 0
      %561 = vmatprep.subr.bf16.mxu0 0
      %562 = vmatpush1.bf16.msra.mxu0 0
      %563 = vmatprep.subr.bf16.mxu0 0
      %564 = vmatpush1.bf16.msra.mxu0 0
      %565 = vmatprep.subr.bf16.mxu0 0
      %566 = vmatpush1.bf16.msra.mxu0 0
      %567 = vmatprep.subr.bf16.mxu0 0
      %568 = vmatpush1.bf16.msra.mxu0 0
      %569 = vmatprep.subr.bf16.mxu0 0
      %570 = vmatpush1.bf16.msra.mxu0 0
      %571 = vmatprep.subr.bf16.mxu0 0
      %572 = vmatpush1.bf16.msra.mxu0 0
      %573 = vmatprep.subr.bf16.mxu0 0
      %574 = vmatpush1.bf16.msra.mxu0 0
      %575 = vmatprep.subr.bf16.mxu0 0
      %576 = vmatpush1.bf16.msra.mxu0 0
      %577 = vmatprep.mubr.bf16.mxu0 0
      %578 = vmatmul.mubr.bf16.gmra.mrb[0].mxu0 %v543
      %v579 = vpop.f32.mrb[0].mxu0
      %v580 = vadd.f32 0.0, %v579
      %v581 = vpop.f32.mrb[0].mxu0
      %v582 = vpop.f32.mrb[0].mxu0
      %v583 = vpop.f32.mrb[0].mxu0
      %584 = vdwg.mxu0
      %v585 = vpack.c.bf16 %v490, %v490
      %vm586 = vcmask 257024
      %587 = vst.msk [vmem:[%s343] sm:$0xf] %vm586, %v585
      %588 = vst.msk [vmem:[%s347] sm:$0xff] %vm375, %v580
      %p589 = scmp.lt.s32.totalorder %s19, 1
      %s590 = scalar_select %p589, %s19, 1
      %s591 = smul.addr %s590, 4
      %s592 = scalar_lea.vmem %s6, %s591
      %p593 = scmp.lt.s32.totalorder %s19, 1
      %s594 = scalar_select %p593, %s19, 1
      %s595 = smul.addr %s594, 8
      %s596 = scalar_lea.vmem %s7, %s595
      // Predicated region
      $region45: #{diffpool_net_forward.9} parent=43 // pred_check
        %p597 = pneg %p183
      $region46: #{diffpool_net_forward.9} parent=43 // pred_check_branch
        %599 = sbr.rel (%p597) target = $region48
      $region47: #{diffpool_net_forward.9} parent=43 // pred_region
        _
      $region48: #{diffpool_net_forward.9} parent=43 // pred_fallthru
        _
      // Predicated region
      $region49: #{diffpool_net_forward.9} parent=43 // pred_check
        %p600 = pneg %p209
      $region50: #{diffpool_net_forward.9} parent=43 // pred_check_branch
        %602 = sbr.rel (%p600) target = $region52
      $region51: #{diffpool_net_forward.9} parent=43 // pred_region
        _
      $region52: #{diffpool_net_forward.9} parent=43 // pred_fallthru
        _
    $region44: #{diffpool_net_forward.9} parent=5 // pred_fallthru
      _
    %p603 = scmp.le.s32.totalorder 2, %s14
    // Predicated region
    $region53: #{diffpool_net_forward.9} parent=5 // pred_check
      %p604 = pneg %p603
    $region54: #{diffpool_net_forward.9} parent=5 // pred_check_branch
      %606 = sbr.rel (%p604) target = $region56
    $region55: #{diffpool_net_forward.9} parent=5 // pred_region
      %s607 = ssub.s32 %s14, 2
      // Predicated region
      $region57: #{diffpool_net_forward.9} parent=55 // pred_check
        %p608 = pneg %p189
      $region58: #{diffpool_net_forward.9} parent=55 // pred_check_branch
        %610 = sbr.rel (%p608) target = $region60
      $region59: #{diffpool_net_forward.9} parent=55 // pred_region
        %p611 = scmp.lt.s32.totalorder %s20, 1
        %s612 = scalar_select %p611, %s20, 1
        %s613 = smul.addr %s612, 4
        %s614 = scalar_lea.vmem %s6, %s613
      $region60: #{diffpool_net_forward.9} parent=55 // pred_fallthru
        _
      // Predicated region
      $region61: #{diffpool_net_forward.9} parent=55 // pred_check
        %p615 = pneg %p215
      $region62: #{diffpool_net_forward.9} parent=55 // pred_check_branch
        %617 = sbr.rel (%p615) target = $region64
      $region63: #{diffpool_net_forward.9} parent=55 // pred_region
        %p618 = scmp.lt.s32.totalorder %s20, 1
        %s619 = scalar_select %p618, %s20, 1
        %s620 = smul.addr %s619, 8
        %s621 = scalar_lea.vmem %s7, %s620
      $region64: #{diffpool_net_forward.9} parent=55 // pred_fallthru
        _
    $region56: #{diffpool_net_forward.9} parent=5 // pred_fallthru
      _
  $region6: #{diffpool_net_forward.9} parent=0 // loop_footer
    %s18 = sadd.s32 1, %s14
  $region7: #{diffpool_net_forward.9} parent=0 // loop_footer_branch
    %13 = sbr.rel target = $region3
  $region8: #{diffpool_net_forward.9} parent=0 // loop_exit
    _

// kernel: diffpool_net_forward.10
$region0: #{diffpool_net_forward.10}
  #allocation0 [shape = 'u32[]', space=smem, size = 0x4, offset = 0x4, fixed_abs, tag = 'smem constant byte address 0x4 - core index']
  #allocation1 [shape = 'u32[144,128]{1,0:T(1,128)}', space=vmem, size = 0x12000, scoped, tag = 'internal scratch']
  %s0 = inlined_call_operand.vmem [shape: bf16[2,8,32], index: 0, kind: input, shape index: {}]
  %s1 = inlined_call_operand.vmem [shape: f32[2,8,8], index: 1, kind: input, shape index: {}]
  %s2 = inlined_call_operand.vmem [shape: f32[32,4], index: 2, kind: input, shape index: {}]
  %s3 = inlined_call_operand.vmem [shape: f32[1,4], index: 3, kind: input, shape index: {}]
  %s4 = inlined_call_operand.vmem [shape: f32[32,32], index: 4, kind: input, shape index: {}]
  %s5 = inlined_call_operand.vmem [shape: f32[1,32], index: 5, kind: input, shape index: {}]
  %s6 = inlined_call_operand.vmem [shape: bf16[2,8,4], index: 6, kind: output, shape index: {0}]
  %s7 = inlined_call_operand.vmem [shape: bf16[2,8,32], index: 7, kind: output, shape index: {1}]
  %s8 = inlined_call_operand.vmem [shape: f32[2,2,4], index: 8, kind: output, shape index: {2}]
  %s9 = inlined_call_operand.vmem [shape: f32[2,2,32], index: 9, kind: output, shape index: {3}]
  %10 = xla_tuple %s6, %s7, %s8, %s9
  %s11 = sld [smem:[#allocation0]]
  $region81: #{diffpool_net_forward.10} parent=0
    _
  %s13 = ssub.s32 1, %s11
  %s14 = scalar_select 0, %s13, %s11
  loop: start=0, step=1, limit=4
  $region2: #{diffpool_net_forward.10} parent=0 // loop_pre_header
    _
  $region3: #{diffpool_net_forward.10} parent=0 // loop_header
    %s16 = sphi 0, %s20
    %p17 = scmp.ge.s32.totalorder %s16, 4
    %s26 = sphi 0, %s28
    %s29 = sphi 0, %s26
    %s30 = sphi 0, %s29
    %s46 = sphi 0, %s30
    %s52 = sphi 0, %s54
    %s55 = sphi 0, %s52
    %s56 = sphi 0, %s55
    %s72 = sphi 0, %s56
    %s76 = sphi 0, %s76
    %s78 = sphi 0, %s76
    %s79 = sphi 0, %s78
    %s93 = sphi 0, %s79
    %s97 = sphi 0, %s97
    %s99 = sphi 0, %s97
    %s100 = sphi 0, %s99
    %s114 = sphi 0, %s100
    %s118 = sphi 0, %s118
    %s120 = sphi 0, %s118
    %s121 = sphi 0, %s120
    %s135 = sphi 0, %s121
    %s139 = sphi 0, %s139
    %s141 = sphi 0, %s139
    %s142 = sphi 0, %s141
    %s156 = sphi 0, %s142
    %s162 = sphi 0, %s164
    %s165 = sphi 0, %s162
    %s166 = sphi 0, %s165
    %s182 = sphi 0, %s166
    %s188 = sphi 0, %s190
    %s191 = sphi 0, %s188
    %s192 = sphi 0, %s191
    %s208 = sphi 0, %s192
    %s214 = sphi 0, %s216
    %s217 = sphi 0, %s214
    %s218 = sphi 0, %s217
    %s234 = sphi 0, %s218
    %s240 = sphi 0, %s242
    %s243 = sphi 0, %s240
    %s244 = sphi 0, %s243
    %s260 = sphi 0, %s244
  $region4: #{diffpool_net_forward.10} parent=0 // loop_header_branch
    %19 = sbr.rel (%p17) target = $region8
  $region5: #{diffpool_net_forward.10} parent=0 // loop_body
    %s21 = ssub.s32 %s16, 1
    %s22 = ssub.s32 %s16, 2
    %s23 = sadd.s32 %s16, 1
    %s24 = ssub.s32 %s16, %s23
    %p25 = scmp.eq.s32.totalorder %s24, 0
    %s27 = sadd.s32 %s26, 1
    %s28 = scalar_select %p25, %s26, %s27
    %p31 = pneg %p25
    %p32 = scmp.eq.s32.totalorder %s16, 1
    %p33 = por %p31, %p32
    %p34 = scmp.ne.s32.totalorder %s26, %s29
    %p35 = scmp.eq.s32.totalorder %s16, 0
    %p36 = por %p34, %p35
    %p37 = scmp.ne.s32.totalorder %s26, %s29
    %p38 = scmp.eq.s32.totalorder %s21, 1
    %p39 = por %p37, %p38
    %p40 = scmp.ne.s32.totalorder %s29, %s30
    %p41 = scmp.eq.s32.totalorder %s21, 0
    %p42 = por %p40, %p41
    %p43 = scmp.ne.s32.totalorder %s29, %s30
    %p44 = scmp.eq.s32.totalorder %s22, 1
    %p45 = por %p43, %p44
    %p47 = scmp.ne.s32.totalorder %s30, %s46
    %p48 = scmp.eq.s32.totalorder %s22, 0
    %p49 = por %p47, %p48
    %s50 = ssub.s32 %s16, %s23
    %p51 = scmp.eq.s32.totalorder %s50, 0
    %s53 = sadd.s32 %s52, 1
    %s54 = scalar_select %p51, %s52, %s53
    %p57 = pneg %p51
    %p58 = scmp.eq.s32.totalorder %s16, 1
    %p59 = por %p57, %p58
    %p60 = scmp.ne.s32.totalorder %s52, %s55
    %p61 = scmp.eq.s32.totalorder %s16, 0
    %p62 = por %p60, %p61
    %p63 = scmp.ne.s32.totalorder %s52, %s55
    %p64 = scmp.eq.s32.totalorder %s21, 1
    %p65 = por %p63, %p64
    %p66 = scmp.ne.s32.totalorder %s55, %s56
    %p67 = scmp.eq.s32.totalorder %s21, 0
    %p68 = por %p66, %p67
    %p69 = scmp.ne.s32.totalorder %s55, %s56
    %p70 = scmp.eq.s32.totalorder %s22, 1
    %p71 = por %p69, %p70
    %p73 = scmp.ne.s32.totalorder %s56, %s72
    %p74 = scmp.eq.s32.totalorder %s22, 0
    %p75 = por %p73, %p74
    %s77 = sadd.s32 %s76, 1
    %p80 = scmp.eq.s32.totalorder %s16, 1
    %p81 = scmp.ne.s32.totalorder %s76, %s78
    %p82 = scmp.eq.s32.totalorder %s16, 0
    %p83 = por %p81, %p82
    %p84 = scmp.ne.s32.totalorder %s76, %s78
    %p85 = scmp.eq.s32.totalorder %s21, 1
    %p86 = por %p84, %p85
    %p87 = scmp.ne.s32.totalorder %s78, %s79
    %p88 = scmp.eq.s32.totalorder %s21, 0
    %p89 = por %p87, %p88
    %p90 = scmp.ne.s32.totalorder %s78, %s79
    %p91 = scmp.eq.s32.totalorder %s22, 1
    %p92 = por %p90, %p91
    %p94 = scmp.ne.s32.totalorder %s79, %s93
    %p95 = scmp.eq.s32.totalorder %s22, 0
    %p96 = por %p94, %p95
    %s98 = sadd.s32 %s97, 1
    %p101 = scmp.eq.s32.totalorder %s16, 1
    %p102 = scmp.ne.s32.totalorder %s97, %s99
    %p103 = scmp.eq.s32.totalorder %s16, 0
    %p104 = por %p102, %p103
    %p105 = scmp.ne.s32.totalorder %s97, %s99
    %p106 = scmp.eq.s32.totalorder %s21, 1
    %p107 = por %p105, %p106
    %p108 = scmp.ne.s32.totalorder %s99, %s100
    %p109 = scmp.eq.s32.totalorder %s21, 0
    %p110 = por %p108, %p109
    %p111 = scmp.ne.s32.totalorder %s99, %s100
    %p112 = scmp.eq.s32.totalorder %s22, 1
    %p113 = por %p111, %p112
    %p115 = scmp.ne.s32.totalorder %s100, %s114
    %p116 = scmp.eq.s32.totalorder %s22, 0
    %p117 = por %p115, %p116
    %s119 = sadd.s32 %s118, 1
    %p122 = scmp.eq.s32.totalorder %s16, 1
    %p123 = scmp.ne.s32.totalorder %s118, %s120
    %p124 = scmp.eq.s32.totalorder %s16, 0
    %p125 = por %p123, %p124
    %p126 = scmp.ne.s32.totalorder %s118, %s120
    %p127 = scmp.eq.s32.totalorder %s21, 1
    %p128 = por %p126, %p127
    %p129 = scmp.ne.s32.totalorder %s120, %s121
    %p130 = scmp.eq.s32.totalorder %s21, 0
    %p131 = por %p129, %p130
    %p132 = scmp.ne.s32.totalorder %s120, %s121
    %p133 = scmp.eq.s32.totalorder %s22, 1
    %p134 = por %p132, %p133
    %p136 = scmp.ne.s32.totalorder %s121, %s135
    %p137 = scmp.eq.s32.totalorder %s22, 0
    %p138 = por %p136, %p137
    %s140 = sadd.s32 %s139, 1
    %p143 = scmp.eq.s32.totalorder %s16, 1
    %p144 = scmp.ne.s32.totalorder %s139, %s141
    %p145 = scmp.eq.s32.totalorder %s16, 0
    %p146 = por %p144, %p145
    %p147 = scmp.ne.s32.totalorder %s139, %s141
    %p148 = scmp.eq.s32.totalorder %s21, 1
    %p149 = por %p147, %p148
    %p150 = scmp.ne.s32.totalorder %s141, %s142
    %p151 = scmp.eq.s32.totalorder %s21, 0
    %p152 = por %p150, %p151
    %p153 = scmp.ne.s32.totalorder %s141, %s142
    %p154 = scmp.eq.s32.totalorder %s22, 1
    %p155 = por %p153, %p154
    %p157 = scmp.ne.s32.totalorder %s142, %s156
    %p158 = scmp.eq.s32.totalorder %s22, 0
    %p159 = por %p157, %p158
    %s160 = ssub.s32 %s16, %s23
    %p161 = scmp.eq.s32.totalorder %s160, 0
    %s163 = sadd.s32 %s162, 1
    %s164 = scalar_select %p161, %s162, %s163
    %p167 = pneg %p161
    %p168 = scmp.eq.s32.totalorder %s16, 1
    %p169 = por %p167, %p168
    %p170 = scmp.ne.s32.totalorder %s162, %s165
    %p171 = scmp.eq.s32.totalorder %s16, 0
    %p172 = por %p170, %p171
    %p173 = scmp.ne.s32.totalorder %s162, %s165
    %p174 = scmp.eq.s32.totalorder %s21, 1
    %p175 = por %p173, %p174
    %p176 = scmp.ne.s32.totalorder %s165, %s166
    %p177 = scmp.eq.s32.totalorder %s21, 0
    %p178 = por %p176, %p177
    %p179 = scmp.ne.s32.totalorder %s165, %s166
    %p180 = scmp.eq.s32.totalorder %s22, 1
    %p181 = por %p179, %p180
    %p183 = scmp.ne.s32.totalorder %s166, %s182
    %p184 = scmp.eq.s32.totalorder %s22, 0
    %p185 = por %p183, %p184
    %s186 = ssub.s32 %s16, %s23
    %p187 = scmp.eq.s32.totalorder %s186, 0
    %s189 = sadd.s32 %s188, 1
    %s190 = scalar_select %p187, %s188, %s189
    %p193 = pneg %p187
    %p194 = scmp.eq.s32.totalorder %s16, 1
    %p195 = por %p193, %p194
    %p196 = scmp.ne.s32.totalorder %s188, %s191
    %p197 = scmp.eq.s32.totalorder %s16, 0
    %p198 = por %p196, %p197
    %p199 = scmp.ne.s32.totalorder %s188, %s191
    %p200 = scmp.eq.s32.totalorder %s21, 1
    %p201 = por %p199, %p200
    %p202 = scmp.ne.s32.totalorder %s191, %s192
    %p203 = scmp.eq.s32.totalorder %s21, 0
    %p204 = por %p202, %p203
    %p205 = scmp.ne.s32.totalorder %s191, %s192
    %p206 = scmp.eq.s32.totalorder %s22, 1
    %p207 = por %p205, %p206
    %p209 = scmp.ne.s32.totalorder %s192, %s208
    %p210 = scmp.eq.s32.totalorder %s22, 0
    %p211 = por %p209, %p210
    %s212 = ssub.s32 %s16, %s23
    %p213 = scmp.eq.s32.totalorder %s212, 0
    %s215 = sadd.s32 %s214, 1
    %s216 = scalar_select %p213, %s214, %s215
    %p219 = pneg %p213
    %p220 = scmp.eq.s32.totalorder %s16, 1
    %p221 = por %p219, %p220
    %p222 = scmp.ne.s32.totalorder %s214, %s217
    %p223 = scmp.eq.s32.totalorder %s16, 0
    %p224 = por %p222, %p223
    %p225 = scmp.ne.s32.totalorder %s214, %s217
    %p226 = scmp.eq.s32.totalorder %s21, 1
    %p227 = por %p225, %p226
    %p228 = scmp.ne.s32.totalorder %s217, %s218
    %p229 = scmp.eq.s32.totalorder %s21, 0
    %p230 = por %p228, %p229
    %p231 = scmp.ne.s32.totalorder %s217, %s218
    %p232 = scmp.eq.s32.totalorder %s22, 1
    %p233 = por %p231, %p232
    %p235 = scmp.ne.s32.totalorder %s218, %s234
    %p236 = scmp.eq.s32.totalorder %s22, 0
    %p237 = por %p235, %p236
    %s238 = ssub.s32 %s16, %s23
    %p239 = scmp.eq.s32.totalorder %s238, 0
    %s241 = sadd.s32 %s240, 1
    %s242 = scalar_select %p239, %s240, %s241
    %p245 = pneg %p239
    %p246 = scmp.eq.s32.totalorder %s16, 1
    %p247 = por %p245, %p246
    %p248 = scmp.ne.s32.totalorder %s240, %s243
    %p249 = scmp.eq.s32.totalorder %s16, 0
    %p250 = por %p248, %p249
    %p251 = scmp.ne.s32.totalorder %s240, %s243
    %p252 = scmp.eq.s32.totalorder %s21, 1
    %p253 = por %p251, %p252
    %p254 = scmp.ne.s32.totalorder %s243, %s244
    %p255 = scmp.eq.s32.totalorder %s21, 0
    %p256 = por %p254, %p255
    %p257 = scmp.ne.s32.totalorder %s243, %s244
    %p258 = scmp.eq.s32.totalorder %s22, 1
    %p259 = por %p257, %p258
    %p261 = scmp.ne.s32.totalorder %s244, %s260
    %p262 = scmp.eq.s32.totalorder %s22, 0
    %p263 = por %p261, %p262
    %p264 = scmp.le.s32.totalorder 1, %s16
    %p265 = scmp.lt.s32.totalorder %s16, 3
    %p266 = pnand %p264, %p265
    %p267 = pneg %p266
    // Predicated region
    $region9: #{diffpool_net_forward.10} parent=5 // pred_check
      _
    $region10: #{diffpool_net_forward.10} parent=5 // pred_check_branch
      %269 = sbr.rel (%p266) target = $region12
    $region11: #{diffpool_net_forward.10} parent=5 // pred_region
      %s270 = ssub.s32 %s16, 1
      // Predicated region
      $region13: #{diffpool_net_forward.10} parent=11 // pred_check
        %p271 = pneg %p89
      $region14: #{diffpool_net_forward.10} parent=11 // pred_check_branch
        %273 = sbr.rel (%p271) target = $region16
      $region15: #{diffpool_net_forward.10} parent=11 // pred_region
        _
      $region16: #{diffpool_net_forward.10} parent=11 // pred_fallthru
        _
      // Predicated region
      $region17: #{diffpool_net_forward.10} parent=11 // pred_check
        %p274 = pneg %p110
      $region18: #{diffpool_net_forward.10} parent=11 // pred_check_branch
        %276 = sbr.rel (%p274) target = $region20
      $region19: #{diffpool_net_forward.10} parent=11 // pred_region
        _
      $region20: #{diffpool_net_forward.10} parent=11 // pred_fallthru
        _
      // Predicated region
      $region21: #{diffpool_net_forward.10} parent=11 // pred_check
        %p277 = pneg %p131
      $region22: #{diffpool_net_forward.10} parent=11 // pred_check_branch
        %279 = sbr.rel (%p277) target = $region24
      $region23: #{diffpool_net_forward.10} parent=11 // pred_region
        _
      $region24: #{diffpool_net_forward.10} parent=11 // pred_fallthru
        _
      // Predicated region
      $region25: #{diffpool_net_forward.10} parent=11 // pred_check
        %p280 = pneg %p152
      $region26: #{diffpool_net_forward.10} parent=11 // pred_check_branch
        %282 = sbr.rel (%p280) target = $region28
      $region27: #{diffpool_net_forward.10} parent=11 // pred_region
        _
      $region28: #{diffpool_net_forward.10} parent=11 // pred_fallthru
        _
    $region12: #{diffpool_net_forward.10} parent=5 // pred_fallthru
      _
    %p283 = scmp.lt.s32.totalorder %s16, 2
    // Predicated region
    $region29: #{diffpool_net_forward.10} parent=5 // pred_check
      %p284 = pneg %p283
    $region30: #{diffpool_net_forward.10} parent=5 // pred_check_branch
      %286 = sbr.rel (%p284) target = $region32
    $region31: #{diffpool_net_forward.10} parent=5 // pred_region
      // Predicated region
      $region33: #{diffpool_net_forward.10} parent=31 // pred_check
        %p287 = pneg %p36
      $region34: #{diffpool_net_forward.10} parent=31 // pred_check_branch
        %289 = sbr.rel (%p287) target = $region36
      $region35: #{diffpool_net_forward.10} parent=31 // pred_region
        %p290 = scmp.lt.s32.totalorder %s16, 1
        %s291 = scalar_select %p290, %s16, 1
        %s292 = smul.addr %s291, 4
        %s293 = scalar_lea.vmem %s0, %s292
      $region36: #{diffpool_net_forward.10} parent=31 // pred_fallthru
        _
      // Predicated region
      $region37: #{diffpool_net_forward.10} parent=31 // pred_check
        %p294 = pneg %p62
      $region38: #{diffpool_net_forward.10} parent=31 // pred_check_branch
        %296 = sbr.rel (%p294) target = $region40
      $region39: #{diffpool_net_forward.10} parent=31 // pred_region
        %p297 = scmp.lt.s32.totalorder %s16, 1
        %s298 = scalar_select %p297, %s16, 1
        %s299 = smul.addr %s298, 8
        %s300 = scalar_lea.vmem %s1, %s299
      $region40: #{diffpool_net_forward.10} parent=31 // pred_fallthru
        _
    $region32: #{diffpool_net_forward.10} parent=5 // pred_fallthru
      _
    %p301 = scmp.le.s32.totalorder 1, %s16
    %p302 = scmp.lt.s32.totalorder %s16, 3
    %p303 = pnand %p301, %p302
    %p304 = pneg %p303
    // Predicated region
    $region41: #{diffpool_net_forward.10} parent=5 // pred_check
      _
    $region42: #{diffpool_net_forward.10} parent=5 // pred_check_branch
      %306 = sbr.rel (%p303) target = $region44
    $region43: #{diffpool_net_forward.10} parent=5 // pred_region
      %s307 = ssub.s32 %s16, 1
      %p308 = scmp.lt.s32.totalorder %s21, 1
      %s309 = scalar_select %p308, %s21, 1
      %s310 = smul.addr %s309, 4
      %s311 = scalar_lea.vmem %s0, %s310
      %p312 = pneg %p42
      %p313 = pneg %p39
      %p314 = scmp.lt.s32.totalorder %s21, 1
      %s315 = scalar_select %p314, %s21, 1
      %s316 = smul.addr %s315, 8
      %s317 = scalar_lea.vmem %s1, %s316
      %p318 = pneg %p68
      %p319 = pneg %p65
      %p320 = pneg %p89
      %p321 = pneg %p86
      %p322 = pneg %p110
      %p323 = pneg %p107
      %p324 = pneg %p131
      %p325 = pneg %p128
      %p326 = pneg %p152
      %p327 = pneg %p149
      %p328 = pneg %p178
      %p329 = pneg %p175
      %p330 = scmp.lt.s32.totalorder %s21, 1
      %s331 = scalar_select %p330, %s21, 1
      %s332 = smul.addr %s331, 4
      %s333 = scalar_lea.vmem %s6, %s332
      %p334 = pneg %p204
      %p335 = pneg %p201
      %p336 = scmp.lt.s32.totalorder %s21, 1
      %s337 = scalar_select %p336, %s21, 1
      %s338 = smul.addr %s337, 4
      %s339 = scalar_lea.vmem %s7, %s338
      %p340 = pneg %p230
      %p341 = pneg %p227
      %p342 = scmp.lt.s32.totalorder %s21, 1
      %s343 = scalar_select %p342, %s21, 1
      %s344 = smul.addr %s343, 2
      %s345 = scalar_lea.vmem %s8, %s344
      %p346 = pneg %p256
      %p347 = pneg %p253
      %p348 = scmp.lt.s32.totalorder %s21, 1
      %s349 = scalar_select %p348, %s21, 1
      %s350 = smul.addr %s349, 2
      %s351 = scalar_lea.vmem %s9, %s350
      %p352 = scmp.lt.s32.totalorder %s21, 1
      %s353 = scalar_select %p352, %s21, 1
      %s354 = smul.addr %s353, 4
      %s355 = scalar_lea.vmem %s0, %s354
      %p356 = scmp.lt.s32.totalorder %s21, 1
      %s357 = scalar_select %p356, %s21, 1
      %s358 = smul.addr %s357, 8
      %s359 = scalar_lea.vmem %s1, %s358
      %p360 = scmp.lt.s32.totalorder %s21, 1
      %s361 = scalar_select %p360, %s21, 1
      %s362 = smul.addr %s361, 4
      %s363 = scalar_lea.vmem %s6, %s362
      %p364 = scmp.lt.s32.totalorder %s21, 1
      %s365 = scalar_select %p364, %s21, 1
      %s366 = smul.addr %s365, 4
      %s367 = scalar_lea.vmem %s7, %s366
      %p368 = scmp.lt.s32.totalorder %s21, 1
      %s369 = scalar_select %p368, %s21, 1
      %s370 = smul.addr %s369, 2
      %s371 = scalar_lea.vmem %s8, %s370
      %p372 = scmp.lt.s32.totalorder %s21, 1
      %s373 = scalar_select %p372, %s21, 1
      %s374 = smul.addr %s373, 2
      %s375 = scalar_lea.vmem %s9, %s374
      %v377 = vld [vmem:[%s355] sm:$0xf]
      %v378 = vld [vmem:[%s359] sm:$0xff]
      %v379 = vpack.c.bf16 %v378, %v378
      %vm380 = vcmask 64512
      %v382 = vsel %vm380, %v379, 0
      %vm384 = vcmask 1043456
      %v386 = vsel %vm384, %v377, 0
      %388 = vmatprep.subr.bf16.mxu0 0
      %389 = vmatpush1.bf16.msra.mxu0 %v386
      %390 = vmatprep.subr.bf16.mxu0 0
      %391 = vmatpush1.bf16.msra.mxu0 0
      %392 = vmatprep.subr.bf16.mxu0 0
      %393 = vmatpush1.bf16.msra.mxu0 0
      %394 = vmatprep.subr.bf16.mxu0 0
      %395 = vmatpush1.bf16.msra.mxu0 0
      %396 = vmatprep.subr.bf16.mxu0 0
      %397 = vmatpush1.bf16.msra.mxu0 0
      %398 = vmatprep.subr.bf16.mxu0 0
      %399 = vmatpush1.bf16.msra.mxu0 0
      %400 = vmatprep.subr.bf16.mxu0 0
      %401 = vmatpush1.bf16.msra.mxu0 0
      %402 = vmatprep.subr.bf16.mxu0 0
      %403 = vmatpush1.bf16.msra.mxu0 0
      %404 = vmatprep.subr.bf16.mxu0 0
      %405 = vmatpush1.bf16.msra.mxu0 0
      %406 = vmatprep.subr.bf16.mxu0 0
      %407 = vmatpush1.bf16.msra.mxu0 0
      %408 = vmatprep.subr.bf16.mxu0 0
      %409 = vmatpush1.bf16.msra.mxu0 0
      %410 = vmatprep.subr.bf16.mxu0 0
      %411 = vmatpush1.bf16.msra.mxu0 0
      %412 = vmatprep.subr.bf16.mxu0 0
      %413 = vmatpush1.bf16.msra.mxu0 0
      %414 = vmatprep.subr.bf16.mxu0 0
      %415 = vmatpush1.bf16.msra.mxu0 0
      %416 = vmatprep.subr.bf16.mxu0 0
      %417 = vmatpush1.bf16.msra.mxu0 0
      %418 = vmatprep.subr.bf16.mxu0 0
      %419 = vmatpush1.bf16.msra.mxu0 0
      %420 = vmatprep.mubr.bf16.mxu0 0
      %421 = vmatmul.mubr.bf16.gmra.mrb[0].mxu0 %v382
      %v422 = vpop.f32.mrb[0].mxu0
      %v423 = vadd.f32 0.0, %v422
      %v424 = vpop.f32.mrb[0].mxu0
      %v425 = vpop.f32.mrb[0].mxu0
      %v426 = vpop.f32.mrb[0].mxu0
      %427 = vdwg.mxu0
      %v428 = vunpack.c.l.bf16 %v379
      %v429 = vsel %vm380, %v428, 0.0
      %430 = vadd.xlane.f32.xlu0 %v429
      %v431 = vpop.xlane.xlu0 %430
      %v432 = vmax.f32 %v431, 1.0
      %v433 = vrcp.pop %v432
      %v434 = vmul.f32 %v423, %v433
      %v435 = vpack.c.bf16 %v434, %v434
      %v436 = vld [vmem:[%s2] sm:$0xff]
      %v437 = vld [vmem:[%s2 + $0x8] sm:$0xff]
      %v438 = vld [vmem:[%s2 + $0x10] sm:$0xff]
      %v439 = vld [vmem:[%s2 + $0x18] sm:$0xff]
      %v440 = vpack.c.bf16 %v437, %v436
      %v441 = vpack.c.bf16 %v439, %v438
      %v442 = vld [vmem:[%s3] sm:$0x1]
      %v444 = vlaneseq
      %v445 = vshrl.u32 %v444, 7
      %v446 = vsub.s32 0, %v445
      %v447 = vrot.slane %v442, %v446
      %vm449 = vcmask 261120
      %v451 = vsel %vm449, %v435, 0
      %453 = vmatprep.subr.bf16.mxu0 0
      %454 = vmatpush1.bf16.msra.mxu0 %v440
      %455 = vmatprep.subr.bf16.mxu0 0
      %456 = vmatpush1.bf16.msra.mxu0 %v441
      %457 = vmatprep.subr.bf16.mxu0 0
      %458 = vmatpush1.bf16.msra.mxu0 0
      %459 = vmatprep.subr.bf16.mxu0 0
      %460 = vmatpush1.bf16.msra.mxu0 0
      %461 = vmatprep.subr.bf16.mxu0 0
      %462 = vmatpush1.bf16.msra.mxu0 0
      %463 = vmatprep.subr.bf16.mxu0 0
      %464 = vmatpush1.bf16.msra.mxu0 0
      %465 = vmatprep.subr.bf16.mxu0 0
      %466 = vmatpush1.bf16.msra.mxu0 0
      %467 = vmatprep.subr.bf16.mxu0 0
      %468 = vmatpush1.bf16.msra.mxu0 0
      %469 = vmatprep.subr.bf16.mxu0 0
      %470 = vmatpush1.bf16.msra.mxu0 0
      %471 = vmatprep.subr.bf16.mxu0 0
      %472 = vmatpush1.bf16.msra.mxu0 0
      %473 = vmatprep.subr.bf16.mxu0 0
      %474 = vmatpush1.bf16.msra.mxu0 0
      %475 = vmatprep.subr.bf16.mxu0 0
      %476 = vmatpush1.bf16.msra.mxu0 0
      %477 = vmatprep.subr.bf16.mxu0 0
      %478 = vmatpush1.bf16.msra.mxu0 0
      %479 = vmatprep.subr.bf16.mxu0 0
      %480 = vmatpush1.bf16.msra.mxu0 0
      %481 = vmatprep.subr.bf16.mxu0 0
      %482 = vmatpush1.bf16.msra.mxu0 0
      %483 = vmatprep.subr.bf16.mxu0 0
      %484 = vmatpush1.bf16.msra.mxu0 0
      %485 = vmatprep.mubr.bf16.mxu0 0
      %486 = vmatmul.mubr.bf16.gmra.mrb[0].mxu0 %v451
      %v487 = vpop.f32.mrb[0].mxu0
      %v488 = vadd.f32 %v447, %v487
      %v489 = vpop.f32.mrb[0].mxu0
      %v490 = vpop.f32.mrb[0].mxu0
      %v491 = vpop.f32.mrb[0].mxu0
      %492 = vdwg.mxu0
      %v493 = vmax.f32 %v488, 0.0
      %v494 = vpack.c.bf16 %v493, %v493
      %vm495 = vcmask 27648
      %496 = vst.msk [vmem:[%s363] sm:$0xf] %vm495, %v494
      %vm497 = vcmask 31744
      %v498 = vsel %vm497, %v493, 0.0
      %v499 = vrot.slane %v498, 4
      %v500 = vadd.f32 %v498, %v499
      %v501 = vrot.slane %v500, 2
      %v502 = vadd.f32 %v500, %v501
      %v503 = vrot.slane %v502, 1
      %v504 = vadd.f32 %v502, %v503
      %v505 = vmul.f32 %v493, %v493
      %v506 = vsel %vm497, %v505, 0.0
      %v507 = vrot.slane %v506, 4
      %v508 = vadd.f32 %v506, %v507
      %v509 = vrot.slane %v508, 2
      %v510 = vadd.f32 %v508, %v509
      %v511 = vrot.slane %v510, 1
      %v512 = vadd.f32 %v510, %v511
      %vm513 = vcmask 1040384
      %v514 = vsel %vm513, %v504, %v512
      %vm515 = vcmask 25600
      %516 = vst.msk [vmem:[%s371] sm:$0x3] %vm515, %v514
      %v517 = vld [vmem:[%s4] sm:$0xff]
      %v518 = vld [vmem:[%s4 + $0x8] sm:$0xff]
      %v519 = vld [vmem:[%s4 + $0x10] sm:$0xff]
      %v520 = vld [vmem:[%s4 + $0x18] sm:$0xff]
      %v521 = vpack.c.bf16 %v518, %v517
      %v522 = vpack.c.bf16 %v520, %v519
      %v523 = vld [vmem:[%s5] sm:$0x1]
      %v525 = vlaneseq
      %v526 = vshrl.u32 %v525, 7
      %v527 = vsub.s32 0, %v526
      %v528 = vrot.slane %v523, %v527
      %530 = vmatprep.subr.bf16.mxu0 0
      %531 = vmatpush1.bf16.msra.mxu0 %v521
      %532 = vmatprep.subr.bf16.mxu0 0
      %533 = vmatpush1.bf16.msra.mxu0 %v522
      %534 = vmatprep.subr.bf16.mxu0 0
      %535 = vmatpush1.bf16.msra.mxu0 0
      %536 = vmatprep.subr.bf16.mxu0 0
      %537 = vmatpush1.bf16.msra.mxu0 0
      %538 = vmatprep.subr.bf16.mxu0 0
      %539 = vmatpush1.bf16.msra.mxu0 0
      %540 = vmatprep.subr.bf16.mxu0 0
      %541 = vmatpush1.bf16.msra.mxu0 0
      %542 = vmatprep.subr.bf16.mxu0 0
      %543 = vmatpush1.bf16.msra.mxu0 0
      %544 = vmatprep.subr.bf16.mxu0 0
      %545 = vmatpush1.bf16.msra.mxu0 0
      %546 = vmatprep.subr.bf16.mxu0 0
      %547 = vmatpush1.bf16.msra.mxu0 0
      %548 = vmatprep.subr.bf16.mxu0 0
      %549 = vmatpush1.bf16.msra.mxu0 0
      %550 = vmatprep.subr.bf16.mxu0 0
      %551 = vmatpush1.bf16.msra.mxu0 0
      %552 = vmatprep.subr.bf16.mxu0 0
      %553 = vmatpush1.bf16.msra.mxu0 0
      %554 = vmatprep.subr.bf16.mxu0 0
      %555 = vmatpush1.bf16.msra.mxu0 0
      %556 = vmatprep.subr.bf16.mxu0 0
      %557 = vmatpush1.bf16.msra.mxu0 0
      %558 = vmatprep.subr.bf16.mxu0 0
      %559 = vmatpush1.bf16.msra.mxu0 0
      %560 = vmatprep.subr.bf16.mxu0 0
      %561 = vmatpush1.bf16.msra.mxu0 0
      %562 = vmatprep.mubr.bf16.mxu0 0
      %563 = vmatmul.mubr.bf16.gmra.mrb[0].mxu0 %v451
      %v564 = vpop.f32.mrb[0].mxu0
      %v565 = vadd.f32 %v528, %v564
      %v566 = vpop.f32.mrb[0].mxu0
      %v567 = vpop.f32.mrb[0].mxu0
      %v568 = vpop.f32.mrb[0].mxu0
      %569 = vdwg.mxu0
      %v570 = vmax.f32 %v565, 0.0
      %v571 = vpack.c.bf16 %v570, %v570
      %vm572 = vcmask 257024
      %573 = vst.msk [vmem:[%s367] sm:$0xf] %vm572, %v571
      %v574 = vsel %vm449, %v570, 0.0
      %v575 = vrot.slane %v574, 4
      %v576 = vadd.f32 %v574, %v575
      %v577 = vrot.slane %v576, 2
      %v578 = vadd.f32 %v576, %v577
      %v579 = vrot.slane %v578, 1
      %v580 = vadd.f32 %v578, %v579
      %v581 = vmul.f32 %v570, %v570
      %v582 = vsel %vm449, %v581, 0.0
      %v583 = vrot.slane %v582, 4
      %v584 = vadd.f32 %v582, %v583
      %v585 = vrot.slane %v584, 2
      %v586 = vadd.f32 %v584, %v585
      %v587 = vrot.slane %v586, 1
      %v588 = vadd.f32 %v586, %v587
      %v589 = vsel %vm513, %v580, %v588
      %vm590 = vcmask 254976
      %591 = vst.msk [vmem:[%s375] sm:$0x3] %vm590, %v589
      %p592 = scmp.lt.s32.totalorder %s21, 1
      %s593 = scalar_select %p592, %s21, 1
      %s594 = smul.addr %s593, 4
      %s595 = scalar_lea.vmem %s6, %s594
      %p596 = scmp.lt.s32.totalorder %s21, 1
      %s597 = scalar_select %p596, %s21, 1
      %s598 = smul.addr %s597, 4
      %s599 = scalar_lea.vmem %s7, %s598
      %p600 = scmp.lt.s32.totalorder %s21, 1
      %s601 = scalar_select %p600, %s21, 1
      %s602 = smul.addr %s601, 2
      %s603 = scalar_lea.vmem %s8, %s602
      %p604 = scmp.lt.s32.totalorder %s21, 1
      %s605 = scalar_select %p604, %s21, 1
      %s606 = smul.addr %s605, 2
      %s607 = scalar_lea.vmem %s9, %s606
      // Predicated region
      $region45: #{diffpool_net_forward.10} parent=43 // pred_check
        %p608 = pneg %p175
      $region46: #{diffpool_net_forward.10} parent=43 // pred_check_branch
        %610 = sbr.rel (%p608) target = $region48
      $region47: #{diffpool_net_forward.10} parent=43 // pred_region
        _
      $region48: #{diffpool_net_forward.10} parent=43 // pred_fallthru
        _
      // Predicated region
      $region49: #{diffpool_net_forward.10} parent=43 // pred_check
        %p611 = pneg %p201
      $region50: #{diffpool_net_forward.10} parent=43 // pred_check_branch
        %613 = sbr.rel (%p611) target = $region52
      $region51: #{diffpool_net_forward.10} parent=43 // pred_region
        _
      $region52: #{diffpool_net_forward.10} parent=43 // pred_fallthru
        _
      // Predicated region
      $region53: #{diffpool_net_forward.10} parent=43 // pred_check
        %p614 = pneg %p227
      $region54: #{diffpool_net_forward.10} parent=43 // pred_check_branch
        %616 = sbr.rel (%p614) target = $region56
      $region55: #{diffpool_net_forward.10} parent=43 // pred_region
        _
      $region56: #{diffpool_net_forward.10} parent=43 // pred_fallthru
        _
      // Predicated region
      $region57: #{diffpool_net_forward.10} parent=43 // pred_check
        %p617 = pneg %p253
      $region58: #{diffpool_net_forward.10} parent=43 // pred_check_branch
        %619 = sbr.rel (%p617) target = $region60
      $region59: #{diffpool_net_forward.10} parent=43 // pred_region
        _
      $region60: #{diffpool_net_forward.10} parent=43 // pred_fallthru
        _
    $region44: #{diffpool_net_forward.10} parent=5 // pred_fallthru
      _
    %p620 = scmp.le.s32.totalorder 2, %s16
    // Predicated region
    $region61: #{diffpool_net_forward.10} parent=5 // pred_check
      %p621 = pneg %p620
    $region62: #{diffpool_net_forward.10} parent=5 // pred_check_branch
      %623 = sbr.rel (%p621) target = $region64
    $region63: #{diffpool_net_forward.10} parent=5 // pred_region
      %s624 = ssub.s32 %s16, 2
      // Predicated region
      $region65: #{diffpool_net_forward.10} parent=63 // pred_check
        %p625 = pneg %p181
      $region66: #{diffpool_net_forward.10} parent=63 // pred_check_branch
        %627 = sbr.rel (%p625) target = $region68
      $region67: #{diffpool_net_forward.10} parent=63 // pred_region
        %p628 = scmp.lt.s32.totalorder %s22, 1
        %s629 = scalar_select %p628, %s22, 1
        %s630 = smul.addr %s629, 4
        %s631 = scalar_lea.vmem %s6, %s630
      $region68: #{diffpool_net_forward.10} parent=63 // pred_fallthru
        _
      // Predicated region
      $region69: #{diffpool_net_forward.10} parent=63 // pred_check
        %p632 = pneg %p207
      $region70: #{diffpool_net_forward.10} parent=63 // pred_check_branch
        %634 = sbr.rel (%p632) target = $region72
      $region71: #{diffpool_net_forward.10} parent=63 // pred_region
        %p635 = scmp.lt.s32.totalorder %s22, 1
        %s636 = scalar_select %p635, %s22, 1
        %s637 = smul.addr %s636, 4
        %s638 = scalar_lea.vmem %s7, %s637
      $region72: #{diffpool_net_forward.10} parent=63 // pred_fallthru
        _
      // Predicated region
      $region73: #{diffpool_net_forward.10} parent=63 // pred_check
        %p639 = pneg %p233
      $region74: #{diffpool_net_forward.10} parent=63 // pred_check_branch
        %641 = sbr.rel (%p639) target = $region76
      $region75: #{diffpool_net_forward.10} parent=63 // pred_region
        %p642 = scmp.lt.s32.totalorder %s22, 1
        %s643 = scalar_select %p642, %s22, 1
        %s644 = smul.addr %s643, 2
        %s645 = scalar_lea.vmem %s8, %s644
      $region76: #{diffpool_net_forward.10} parent=63 // pred_fallthru
        _
      // Predicated region
      $region77: #{diffpool_net_forward.10} parent=63 // pred_check
        %p646 = pneg %p259
      $region78: #{diffpool_net_forward.10} parent=63 // pred_check_branch
        %648 = sbr.rel (%p646) target = $region80
      $region79: #{diffpool_net_forward.10} parent=63 // pred_region
        %p649 = scmp.lt.s32.totalorder %s22, 1
        %s650 = scalar_select %p649, %s22, 1
        %s651 = smul.addr %s650, 2
        %s652 = scalar_lea.vmem %s9, %s651
      $region80: #{diffpool_net_forward.10} parent=63 // pred_fallthru
        _
    $region64: #{diffpool_net_forward.10} parent=5 // pred_fallthru
      _
  $region6: #{diffpool_net_forward.10} parent=0 // loop_footer
    %s20 = sadd.s32 1, %s16
  $region7: #{diffpool_net_forward.10} parent=0 // loop_footer_branch
    %15 = sbr.rel target = $region3
  $region8: #{diffpool_net_forward.10} parent=0 // loop_exit
    _

// kernel: diffpool_net_forward.11
$region0: #{diffpool_net_forward.11}
  #allocation0 [shape = 'u32[]', space=smem, size = 0x4, offset = 0x4, fixed_abs, tag = 'smem constant byte address 0x4 - core index']
  #allocation1 [shape = 'u32[144,128]{1,0:T(1,128)}', space=vmem, size = 0x12000, scoped, tag = 'internal scratch']
  %s0 = inlined_call_operand.vmem [shape: bf16[2,8,4], index: 0, kind: input, shape index: {}]
  %s1 = inlined_call_operand.vmem [shape: f32[1,4], index: 1, kind: input, shape index: {}]
  %s2 = inlined_call_operand.vmem [shape: f32[1,4], index: 2, kind: input, shape index: {}]
  %s3 = inlined_call_operand.vmem [shape: f32[4,4], index: 3, kind: input, shape index: {}]
  %s4 = inlined_call_operand.vmem [shape: f32[1,4], index: 4, kind: input, shape index: {}]
  %s5 = inlined_call_operand.vmem [shape: bf16[2,8,4], index: 5, kind: output, shape index: {}]
  %s6 = sld [smem:[#allocation0]]
  $region53: #{diffpool_net_forward.11} parent=0
    _
  %s8 = ssub.s32 1, %s6
  %s9 = scalar_select 0, %s8, %s6
  loop: start=0, step=1, limit=4
  $region2: #{diffpool_net_forward.11} parent=0 // loop_pre_header
    _
  $region3: #{diffpool_net_forward.11} parent=0 // loop_header
    %s11 = sphi 0, %s15
    %p12 = scmp.ge.s32.totalorder %s11, 4
    %s21 = sphi 0, %s23
    %s24 = sphi 0, %s21
    %s25 = sphi 0, %s24
    %s41 = sphi 0, %s25
    %s45 = sphi 0, %s45
    %s47 = sphi 0, %s45
    %s48 = sphi 0, %s47
    %s62 = sphi 0, %s48
    %s66 = sphi 0, %s66
    %s68 = sphi 0, %s66
    %s69 = sphi 0, %s68
    %s83 = sphi 0, %s69
    %s87 = sphi 0, %s87
    %s89 = sphi 0, %s87
    %s90 = sphi 0, %s89
    %s104 = sphi 0, %s90
    %s108 = sphi 0, %s108
    %s110 = sphi 0, %s108
    %s111 = sphi 0, %s110
    %s125 = sphi 0, %s111
    %s131 = sphi 0, %s133
    %s134 = sphi 0, %s131
    %s135 = sphi 0, %s134
    %s151 = sphi 0, %s135
  $region4: #{diffpool_net_forward.11} parent=0 // loop_header_branch
    %14 = sbr.rel (%p12) target = $region8
  $region5: #{diffpool_net_forward.11} parent=0 // loop_body
    %s16 = ssub.s32 %s11, 1
    %s17 = ssub.s32 %s11, 2
    %s18 = sadd.s32 %s11, 1
    %s19 = ssub.s32 %s11, %s18
    %p20 = scmp.eq.s32.totalorder %s19, 0
    %s22 = sadd.s32 %s21, 1
    %s23 = scalar_select %p20, %s21, %s22
    %p26 = pneg %p20
    %p27 = scmp.eq.s32.totalorder %s11, 1
    %p28 = por %p26, %p27
    %p29 = scmp.ne.s32.totalorder %s21, %s24
    %p30 = scmp.eq.s32.totalorder %s11, 0
    %p31 = por %p29, %p30
    %p32 = scmp.ne.s32.totalorder %s21, %s24
    %p33 = scmp.eq.s32.totalorder %s16, 1
    %p34 = por %p32, %p33
    %p35 = scmp.ne.s32.totalorder %s24, %s25
    %p36 = scmp.eq.s32.totalorder %s16, 0
    %p37 = por %p35, %p36
    %p38 = scmp.ne.s32.totalorder %s24, %s25
    %p39 = scmp.eq.s32.totalorder %s17, 1
    %p40 = por %p38, %p39
    %p42 = scmp.ne.s32.totalorder %s25, %s41
    %p43 = scmp.eq.s32.totalorder %s17, 0
    %p44 = por %p42, %p43
    %s46 = sadd.s32 %s45, 1
    %p49 = scmp.eq.s32.totalorder %s11, 1
    %p50 = scmp.ne.s32.totalorder %s45, %s47
    %p51 = scmp.eq.s32.totalorder %s11, 0
    %p52 = por %p50, %p51
    %p53 = scmp.ne.s32.totalorder %s45, %s47
    %p54 = scmp.eq.s32.totalorder %s16, 1
    %p55 = por %p53, %p54
    %p56 = scmp.ne.s32.totalorder %s47, %s48
    %p57 = scmp.eq.s32.totalorder %s16, 0
    %p58 = por %p56, %p57
    %p59 = scmp.ne.s32.totalorder %s47, %s48
    %p60 = scmp.eq.s32.totalorder %s17, 1
    %p61 = por %p59, %p60
    %p63 = scmp.ne.s32.totalorder %s48, %s62
    %p64 = scmp.eq.s32.totalorder %s17, 0
    %p65 = por %p63, %p64
    %s67 = sadd.s32 %s66, 1
    %p70 = scmp.eq.s32.totalorder %s11, 1
    %p71 = scmp.ne.s32.totalorder %s66, %s68
    %p72 = scmp.eq.s32.totalorder %s11, 0
    %p73 = por %p71, %p72
    %p74 = scmp.ne.s32.totalorder %s66, %s68
    %p75 = scmp.eq.s32.totalorder %s16, 1
    %p76 = por %p74, %p75
    %p77 = scmp.ne.s32.totalorder %s68, %s69
    %p78 = scmp.eq.s32.totalorder %s16, 0
    %p79 = por %p77, %p78
    %p80 = scmp.ne.s32.totalorder %s68, %s69
    %p81 = scmp.eq.s32.totalorder %s17, 1
    %p82 = por %p80, %p81
    %p84 = scmp.ne.s32.totalorder %s69, %s83
    %p85 = scmp.eq.s32.totalorder %s17, 0
    %p86 = por %p84, %p85
    %s88 = sadd.s32 %s87, 1
    %p91 = scmp.eq.s32.totalorder %s11, 1
    %p92 = scmp.ne.s32.totalorder %s87, %s89
    %p93 = scmp.eq.s32.totalorder %s11, 0
    %p94 = por %p92, %p93
    %p95 = scmp.ne.s32.totalorder %s87, %s89
    %p96 = scmp.eq.s32.totalorder %s16, 1
    %p97 = por %p95, %p96
    %p98 = scmp.ne.s32.totalorder %s89, %s90
    %p99 = scmp.eq.s32.totalorder %s16, 0
    %p100 = por %p98, %p99
    %p101 = scmp.ne.s32.totalorder %s89, %s90
    %p102 = scmp.eq.s32.totalorder %s17, 1
    %p103 = por %p101, %p102
    %p105 = scmp.ne.s32.totalorder %s90, %s104
    %p106 = scmp.eq.s32.totalorder %s17, 0
    %p107 = por %p105, %p106
    %s109 = sadd.s32 %s108, 1
    %p112 = scmp.eq.s32.totalorder %s11, 1
    %p113 = scmp.ne.s32.totalorder %s108, %s110
    %p114 = scmp.eq.s32.totalorder %s11, 0
    %p115 = por %p113, %p114
    %p116 = scmp.ne.s32.totalorder %s108, %s110
    %p117 = scmp.eq.s32.totalorder %s16, 1
    %p118 = por %p116, %p117
    %p119 = scmp.ne.s32.totalorder %s110, %s111
    %p120 = scmp.eq.s32.totalorder %s16, 0
    %p121 = por %p119, %p120
    %p122 = scmp.ne.s32.totalorder %s110, %s111
    %p123 = scmp.eq.s32.totalorder %s17, 1
    %p124 = por %p122, %p123
    %p126 = scmp.ne.s32.totalorder %s111, %s125
    %p127 = scmp.eq.s32.totalorder %s17, 0
    %p128 = por %p126, %p127
    %s129 = ssub.s32 %s11, %s18
    %p130 = scmp.eq.s32.totalorder %s129, 0
    %s132 = sadd.s32 %s131, 1
    %s133 = scalar_select %p130, %s131, %s132
    %p136 = pneg %p130
    %p137 = scmp.eq.s32.totalorder %s11, 1
    %p138 = por %p136, %p137
    %p139 = scmp.ne.s32.totalorder %s131, %s134
    %p140 = scmp.eq.s32.totalorder %s11, 0
    %p141 = por %p139, %p140
    %p142 = scmp.ne.s32.totalorder %s131, %s134
    %p143 = scmp.eq.s32.totalorder %s16, 1
    %p144 = por %p142, %p143
    %p145 = scmp.ne.s32.totalorder %s134, %s135
    %p146 = scmp.eq.s32.totalorder %s16, 0
    %p147 = por %p145, %p146
    %p148 = scmp.ne.s32.totalorder %s134, %s135
    %p149 = scmp.eq.s32.totalorder %s17, 1
    %p150 = por %p148, %p149
    %p152 = scmp.ne.s32.totalorder %s135, %s151
    %p153 = scmp.eq.s32.totalorder %s17, 0
    %p154 = por %p152, %p153
    %p155 = scmp.le.s32.totalorder 1, %s11
    %p156 = scmp.lt.s32.totalorder %s11, 3
    %p157 = pnand %p155, %p156
    %p158 = pneg %p157
    // Predicated region
    $region9: #{diffpool_net_forward.11} parent=5 // pred_check
      _
    $region10: #{diffpool_net_forward.11} parent=5 // pred_check_branch
      %160 = sbr.rel (%p157) target = $region12
    $region11: #{diffpool_net_forward.11} parent=5 // pred_region
      %s161 = ssub.s32 %s11, 1
      // Predicated region
      $region13: #{diffpool_net_forward.11} parent=11 // pred_check
        %p162 = pneg %p58
      $region14: #{diffpool_net_forward.11} parent=11 // pred_check_branch
        %164 = sbr.rel (%p162) target = $region16
      $region15: #{diffpool_net_forward.11} parent=11 // pred_region
        _
      $region16: #{diffpool_net_forward.11} parent=11 // pred_fallthru
        _
      // Predicated region
      $region17: #{diffpool_net_forward.11} parent=11 // pred_check
        %p165 = pneg %p79
      $region18: #{diffpool_net_forward.11} parent=11 // pred_check_branch
        %167 = sbr.rel (%p165) target = $region20
      $region19: #{diffpool_net_forward.11} parent=11 // pred_region
        _
      $region20: #{diffpool_net_forward.11} parent=11 // pred_fallthru
        _
      // Predicated region
      $region21: #{diffpool_net_forward.11} parent=11 // pred_check
        %p168 = pneg %p100
      $region22: #{diffpool_net_forward.11} parent=11 // pred_check_branch
        %170 = sbr.rel (%p168) target = $region24
      $region23: #{diffpool_net_forward.11} parent=11 // pred_region
        _
      $region24: #{diffpool_net_forward.11} parent=11 // pred_fallthru
        _
      // Predicated region
      $region25: #{diffpool_net_forward.11} parent=11 // pred_check
        %p171 = pneg %p121
      $region26: #{diffpool_net_forward.11} parent=11 // pred_check_branch
        %173 = sbr.rel (%p171) target = $region28
      $region27: #{diffpool_net_forward.11} parent=11 // pred_region
        _
      $region28: #{diffpool_net_forward.11} parent=11 // pred_fallthru
        _
    $region12: #{diffpool_net_forward.11} parent=5 // pred_fallthru
      _
    %p174 = scmp.lt.s32.totalorder %s11, 2
    // Predicated region
    $region29: #{diffpool_net_forward.11} parent=5 // pred_check
      %p175 = pneg %p174
    $region30: #{diffpool_net_forward.11} parent=5 // pred_check_branch
      %177 = sbr.rel (%p175) target = $region32
    $region31: #{diffpool_net_forward.11} parent=5 // pred_region
      // Predicated region
      $region33: #{diffpool_net_forward.11} parent=31 // pred_check
        %p178 = pneg %p31
      $region34: #{diffpool_net_forward.11} parent=31 // pred_check_branch
        %180 = sbr.rel (%p178) target = $region36
      $region35: #{diffpool_net_forward.11} parent=31 // pred_region
        %p181 = scmp.lt.s32.totalorder %s11, 1
        %s182 = scalar_select %p181, %s11, 1
        %s183 = smul.addr %s182, 4
        %s184 = scalar_lea.vmem %s0, %s183
      $region36: #{diffpool_net_forward.11} parent=31 // pred_fallthru
        _
    $region32: #{diffpool_net_forward.11} parent=5 // pred_fallthru
      _
    %p185 = scmp.le.s32.totalorder 1, %s11
    %p186 = scmp.lt.s32.totalorder %s11, 3
    %p187 = pnand %p185, %p186
    %p188 = pneg %p187
    // Predicated region
    $region37: #{diffpool_net_forward.11} parent=5 // pred_check
      _
    $region38: #{diffpool_net_forward.11} parent=5 // pred_check_branch
      %190 = sbr.rel (%p187) target = $region40
    $region39: #{diffpool_net_forward.11} parent=5 // pred_region
      %s191 = ssub.s32 %s11, 1
      %p192 = scmp.lt.s32.totalorder %s16, 1
      %s193 = scalar_select %p192, %s16, 1
      %s194 = smul.addr %s193, 4
      %s195 = scalar_lea.vmem %s0, %s194
      %p196 = pneg %p37
      %p197 = pneg %p34
      %p198 = pneg %p58
      %p199 = pneg %p55
      %p200 = pneg %p79
      %p201 = pneg %p76
      %p202 = pneg %p100
      %p203 = pneg %p97
      %p204 = pneg %p121
      %p205 = pneg %p118
      %p206 = pneg %p147
      %p207 = pneg %p144
      %p208 = scmp.lt.s32.totalorder %s16, 1
      %s209 = scalar_select %p208, %s16, 1
      %s210 = smul.addr %s209, 4
      %s211 = scalar_lea.vmem %s5, %s210
      %p212 = scmp.lt.s32.totalorder %s16, 1
      %s213 = scalar_select %p212, %s16, 1
      %s214 = smul.addr %s213, 4
      %s215 = scalar_lea.vmem %s0, %s214
      %p216 = scmp.lt.s32.totalorder %s16, 1
      %s217 = scalar_select %p216, %s16, 1
      %s218 = smul.addr %s217, 4
      %s219 = scalar_lea.vmem %s5, %s218
      %v221 = vld [vmem:[%s215] sm:$0xf]
      %v222 = vunpack.c.l.bf16 %v221
      %v223 = vld [vmem:[%s1] sm:$0x1]
      %v225 = vlaneseq
      %v226 = vshrl.u32 %v225, 7
      %v227 = vsub.s32 0, %v226
      %v228 = vrot.slane %v223, %v227
      %v230 = vmul.f32 %v222, %v228
      %v231 = vld [vmem:[%s2] sm:$0x1]
      %v233 = vlaneseq
      %v234 = vshrl.u32 %v233, 7
      %v235 = vsub.s32 0, %v234
      %v236 = vrot.slane %v231, %v235
      %v238 = vadd.f32 %v230, %v236
      %v239 = vpack.c.bf16 %v238, %v238
      %v240 = vld [vmem:[%s3] sm:$0xf]
      %v241 = vpack.c.bf16 %v240, %v240
      %v242 = vld [vmem:[%s4] sm:$0x1]
      %v244 = vlaneseq
      %v245 = vshrl.u32 %v244, 7
      %v246 = vsub.s32 0, %v245
      %v247 = vrot.slane %v242, %v246
      %vm249 = vcmask 31744
      %v251 = vsel %vm249, %v239, 0
      %vm253 = vcmask 1041408
      %v255 = vsel %vm253, %v241, 0
      %257 = vmatprep.subr.bf16.mxu0 0
      %258 = vmatpush1.bf16.msra.mxu0 %v255
      %259 = vmatprep.subr.bf16.mxu0 0
      %260 = vmatpush1.bf16.msra.mxu0 0
      %261 = vmatprep.subr.bf16.mxu0 0
      %262 = vmatpush1.bf16.msra.mxu0 0
      %263 = vmatprep.subr.bf16.mxu0 0
      %264 = vmatpush1.bf16.msra.mxu0 0
      %265 = vmatprep.subr.bf16.mxu0 0
      %266 = vmatpush1.bf16.msra.mxu0 0
      %267 = vmatprep.subr.bf16.mxu0 0
      %268 = vmatpush1.bf16.msra.mxu0 0
      %269 = vmatprep.subr.bf16.mxu0 0
      %270 = vmatpush1.bf16.msra.mxu0 0
      %271 = vmatprep.subr.bf16.mxu0 0
      %272 = vmatpush1.bf16.msra.mxu0 0
      %273 = vmatprep.subr.bf16.mxu0 0
      %274 = vmatpush1.bf16.msra.mxu0 0
      %275 = vmatprep.subr.bf16.mxu0 0
      %276 = vmatpush1.bf16.msra.mxu0 0
      %277 = vmatprep.subr.bf16.mxu0 0
      %278 = vmatpush1.bf16.msra.mxu0 0
      %279 = vmatprep.subr.bf16.mxu0 0
      %280 = vmatpush1.bf16.msra.mxu0 0
      %281 = vmatprep.subr.bf16.mxu0 0
      %282 = vmatpush1.bf16.msra.mxu0 0
      %283 = vmatprep.subr.bf16.mxu0 0
      %284 = vmatpush1.bf16.msra.mxu0 0
      %285 = vmatprep.subr.bf16.mxu0 0
      %286 = vmatpush1.bf16.msra.mxu0 0
      %287 = vmatprep.subr.bf16.mxu0 0
      %288 = vmatpush1.bf16.msra.mxu0 0
      %289 = vmatprep.mubr.bf16.mxu0 0
      %290 = vmatmul.mubr.bf16.gmra.mrb[0].mxu0 %v251
      %v291 = vpop.f32.mrb[0].mxu0
      %v292 = vadd.f32 %v247, %v291
      %v293 = vpop.f32.mrb[0].mxu0
      %v294 = vpop.f32.mrb[0].mxu0
      %v295 = vpop.f32.mrb[0].mxu0
      %296 = vdwg.mxu0
      %v297 = vmax.f32 %v292, 0.0
      %v298 = vpack.c.bf16 %v297, %v297
      %vm299 = vcmask 27648
      %300 = vst.msk [vmem:[%s219] sm:$0xf] %vm299, %v298
      %p301 = scmp.lt.s32.totalorder %s16, 1
      %s302 = scalar_select %p301, %s16, 1
      %s303 = smul.addr %s302, 4
      %s304 = scalar_lea.vmem %s5, %s303
      // Predicated region
      $region41: #{diffpool_net_forward.11} parent=39 // pred_check
        %p305 = pneg %p144
      $region42: #{diffpool_net_forward.11} parent=39 // pred_check_branch
        %307 = sbr.rel (%p305) target = $region44
      $region43: #{diffpool_net_forward.11} parent=39 // pred_region
        _
      $region44: #{diffpool_net_forward.11} parent=39 // pred_fallthru
        _
    $region40: #{diffpool_net_forward.11} parent=5 // pred_fallthru
      _
    %p308 = scmp.le.s32.totalorder 2, %s11
    // Predicated region
    $region45: #{diffpool_net_forward.11} parent=5 // pred_check
      %p309 = pneg %p308
    $region46: #{diffpool_net_forward.11} parent=5 // pred_check_branch
      %311 = sbr.rel (%p309) target = $region48
    $region47: #{diffpool_net_forward.11} parent=5 // pred_region
      %s312 = ssub.s32 %s11, 2
      // Predicated region
      $region49: #{diffpool_net_forward.11} parent=47 // pred_check
        %p313 = pneg %p150
      $region50: #{diffpool_net_forward.11} parent=47 // pred_check_branch
        %315 = sbr.rel (%p313) target = $region52
      $region51: #{diffpool_net_forward.11} parent=47 // pred_region
        %p316 = scmp.lt.s32.totalorder %s17, 1
        %s317 = scalar_select %p316, %s17, 1
        %s318 = smul.addr %s317, 4
        %s319 = scalar_lea.vmem %s5, %s318
      $region52: #{diffpool_net_forward.11} parent=47 // pred_fallthru
        _
    $region48: #{diffpool_net_forward.11} parent=5 // pred_fallthru
      _
  $region6: #{diffpool_net_forward.11} parent=0 // loop_footer
    %s15 = sadd.s32 1, %s11
  $region7: #{diffpool_net_forward.11} parent=0 // loop_footer_branch
    %10 = sbr.rel target = $region3
  $region8: #{diffpool_net_forward.11} parent=0 // loop_exit
    _

// kernel: diffpool_net_forward.13
$region0: #{diffpool_net_forward.13}
  #allocation0 [shape = 'u32[]', space=smem, size = 0x4, offset = 0x4, fixed_abs, tag = 'smem constant byte address 0x4 - core index']
  #allocation1 [shape = 'u32[144,128]{1,0:T(1,128)}', space=vmem, size = 0x12000, scoped, tag = 'internal scratch']
  %s0 = inlined_call_operand.vmem [shape: bf16[2,4,32], index: 0, kind: input, shape index: {}]
  %s1 = inlined_call_operand.vmem [shape: f32[2,4,4], index: 1, kind: input, shape index: {}]
  %s2 = inlined_call_operand.vmem [shape: f32[32,32], index: 2, kind: input, shape index: {}]
  %s3 = inlined_call_operand.vmem [shape: f32[1,32], index: 3, kind: input, shape index: {}]
  %s4 = inlined_call_operand.vmem [shape: bf16[2,4,32], index: 4, kind: output, shape index: {0}]
  %s5 = inlined_call_operand.vmem [shape: f32[2,2,32], index: 5, kind: output, shape index: {1}]
  %6 = xla_tuple %s4, %s5
  %s7 = sld [smem:[#allocation0]]
  $region57: #{diffpool_net_forward.13} parent=0
    _
  %s9 = ssub.s32 1, %s7
  %s10 = scalar_select 0, %s9, %s7
  loop: start=0, step=1, limit=4
  $region2: #{diffpool_net_forward.13} parent=0 // loop_pre_header
    _
  $region3: #{diffpool_net_forward.13} parent=0 // loop_header
    %s12 = sphi 0, %s16
    %p13 = scmp.ge.s32.totalorder %s12, 4
    %s22 = sphi 0, %s24
    %s25 = sphi 0, %s22
    %s26 = sphi 0, %s25
    %s42 = sphi 0, %s26
    %s48 = sphi 0, %s50
    %s51 = sphi 0, %s48
    %s52 = sphi 0, %s51
    %s68 = sphi 0, %s52
    %s72 = sphi 0, %s72
    %s74 = sphi 0, %s72
    %s75 = sphi 0, %s74
    %s89 = sphi 0, %s75
    %s93 = sphi 0, %s93
    %s95 = sphi 0, %s93
    %s96 = sphi 0, %s95
    %s110 = sphi 0, %s96
    %s116 = sphi 0, %s118
    %s119 = sphi 0, %s116
    %s120 = sphi 0, %s119
    %s136 = sphi 0, %s120
    %s142 = sphi 0, %s144
    %s145 = sphi 0, %s142
    %s146 = sphi 0, %s145
    %s162 = sphi 0, %s146
  $region4: #{diffpool_net_forward.13} parent=0 // loop_header_branch
    %15 = sbr.rel (%p13) target = $region8
  $region5: #{diffpool_net_forward.13} parent=0 // loop_body
    %s17 = ssub.s32 %s12, 1
    %s18 = ssub.s32 %s12, 2
    %s19 = sadd.s32 %s12, 1
    %s20 = ssub.s32 %s12, %s19
    %p21 = scmp.eq.s32.totalorder %s20, 0
    %s23 = sadd.s32 %s22, 1
    %s24 = scalar_select %p21, %s22, %s23
    %p27 = pneg %p21
    %p28 = scmp.eq.s32.totalorder %s12, 1
    %p29 = por %p27, %p28
    %p30 = scmp.ne.s32.totalorder %s22, %s25
    %p31 = scmp.eq.s32.totalorder %s12, 0
    %p32 = por %p30, %p31
    %p33 = scmp.ne.s32.totalorder %s22, %s25
    %p34 = scmp.eq.s32.totalorder %s17, 1
    %p35 = por %p33, %p34
    %p36 = scmp.ne.s32.totalorder %s25, %s26
    %p37 = scmp.eq.s32.totalorder %s17, 0
    %p38 = por %p36, %p37
    %p39 = scmp.ne.s32.totalorder %s25, %s26
    %p40 = scmp.eq.s32.totalorder %s18, 1
    %p41 = por %p39, %p40
    %p43 = scmp.ne.s32.totalorder %s26, %s42
    %p44 = scmp.eq.s32.totalorder %s18, 0
    %p45 = por %p43, %p44
    %s46 = ssub.s32 %s12, %s19
    %p47 = scmp.eq.s32.totalorder %s46, 0
    %s49 = sadd.s32 %s48, 1
    %s50 = scalar_select %p47, %s48, %s49
    %p53 = pneg %p47
    %p54 = scmp.eq.s32.totalorder %s12, 1
    %p55 = por %p53, %p54
    %p56 = scmp.ne.s32.totalorder %s48, %s51
    %p57 = scmp.eq.s32.totalorder %s12, 0
    %p58 = por %p56, %p57
    %p59 = scmp.ne.s32.totalorder %s48, %s51
    %p60 = scmp.eq.s32.totalorder %s17, 1
    %p61 = por %p59, %p60
    %p62 = scmp.ne.s32.totalorder %s51, %s52
    %p63 = scmp.eq.s32.totalorder %s17, 0
    %p64 = por %p62, %p63
    %p65 = scmp.ne.s32.totalorder %s51, %s52
    %p66 = scmp.eq.s32.totalorder %s18, 1
    %p67 = por %p65, %p66
    %p69 = scmp.ne.s32.totalorder %s52, %s68
    %p70 = scmp.eq.s32.totalorder %s18, 0
    %p71 = por %p69, %p70
    %s73 = sadd.s32 %s72, 1
    %p76 = scmp.eq.s32.totalorder %s12, 1
    %p77 = scmp.ne.s32.totalorder %s72, %s74
    %p78 = scmp.eq.s32.totalorder %s12, 0
    %p79 = por %p77, %p78
    %p80 = scmp.ne.s32.totalorder %s72, %s74
    %p81 = scmp.eq.s32.totalorder %s17, 1
    %p82 = por %p80, %p81
    %p83 = scmp.ne.s32.totalorder %s74, %s75
    %p84 = scmp.eq.s32.totalorder %s17, 0
    %p85 = por %p83, %p84
    %p86 = scmp.ne.s32.totalorder %s74, %s75
    %p87 = scmp.eq.s32.totalorder %s18, 1
    %p88 = por %p86, %p87
    %p90 = scmp.ne.s32.totalorder %s75, %s89
    %p91 = scmp.eq.s32.totalorder %s18, 0
    %p92 = por %p90, %p91
    %s94 = sadd.s32 %s93, 1
    %p97 = scmp.eq.s32.totalorder %s12, 1
    %p98 = scmp.ne.s32.totalorder %s93, %s95
    %p99 = scmp.eq.s32.totalorder %s12, 0
    %p100 = por %p98, %p99
    %p101 = scmp.ne.s32.totalorder %s93, %s95
    %p102 = scmp.eq.s32.totalorder %s17, 1
    %p103 = por %p101, %p102
    %p104 = scmp.ne.s32.totalorder %s95, %s96
    %p105 = scmp.eq.s32.totalorder %s17, 0
    %p106 = por %p104, %p105
    %p107 = scmp.ne.s32.totalorder %s95, %s96
    %p108 = scmp.eq.s32.totalorder %s18, 1
    %p109 = por %p107, %p108
    %p111 = scmp.ne.s32.totalorder %s96, %s110
    %p112 = scmp.eq.s32.totalorder %s18, 0
    %p113 = por %p111, %p112
    %s114 = ssub.s32 %s12, %s19
    %p115 = scmp.eq.s32.totalorder %s114, 0
    %s117 = sadd.s32 %s116, 1
    %s118 = scalar_select %p115, %s116, %s117
    %p121 = pneg %p115
    %p122 = scmp.eq.s32.totalorder %s12, 1
    %p123 = por %p121, %p122
    %p124 = scmp.ne.s32.totalorder %s116, %s119
    %p125 = scmp.eq.s32.totalorder %s12, 0
    %p126 = por %p124, %p125
    %p127 = scmp.ne.s32.totalorder %s116, %s119
    %p128 = scmp.eq.s32.totalorder %s17, 1
    %p129 = por %p127, %p128
    %p130 = scmp.ne.s32.totalorder %s119, %s120
    %p131 = scmp.eq.s32.totalorder %s17, 0
    %p132 = por %p130, %p131
    %p133 = scmp.ne.s32.totalorder %s119, %s120
    %p134 = scmp.eq.s32.totalorder %s18, 1
    %p135 = por %p133, %p134
    %p137 = scmp.ne.s32.totalorder %s120, %s136
    %p138 = scmp.eq.s32.totalorder %s18, 0
    %p139 = por %p137, %p138
    %s140 = ssub.s32 %s12, %s19
    %p141 = scmp.eq.s32.totalorder %s140, 0
    %s143 = sadd.s32 %s142, 1
    %s144 = scalar_select %p141, %s142, %s143
    %p147 = pneg %p141
    %p148 = scmp.eq.s32.totalorder %s12, 1
    %p149 = por %p147, %p148
    %p150 = scmp.ne.s32.totalorder %s142, %s145
    %p151 = scmp.eq.s32.totalorder %s12, 0
    %p152 = por %p150, %p151
    %p153 = scmp.ne.s32.totalorder %s142, %s145
    %p154 = scmp.eq.s32.totalorder %s17, 1
    %p155 = por %p153, %p154
    %p156 = scmp.ne.s32.totalorder %s145, %s146
    %p157 = scmp.eq.s32.totalorder %s17, 0
    %p158 = por %p156, %p157
    %p159 = scmp.ne.s32.totalorder %s145, %s146
    %p160 = scmp.eq.s32.totalorder %s18, 1
    %p161 = por %p159, %p160
    %p163 = scmp.ne.s32.totalorder %s146, %s162
    %p164 = scmp.eq.s32.totalorder %s18, 0
    %p165 = por %p163, %p164
    %p166 = scmp.le.s32.totalorder 1, %s12
    %p167 = scmp.lt.s32.totalorder %s12, 3
    %p168 = pnand %p166, %p167
    %p169 = pneg %p168
    // Predicated region
    $region9: #{diffpool_net_forward.13} parent=5 // pred_check
      _
    $region10: #{diffpool_net_forward.13} parent=5 // pred_check_branch
      %171 = sbr.rel (%p168) target = $region12
    $region11: #{diffpool_net_forward.13} parent=5 // pred_region
      %s172 = ssub.s32 %s12, 1
      // Predicated region
      $region13: #{diffpool_net_forward.13} parent=11 // pred_check
        %p173 = pneg %p85
      $region14: #{diffpool_net_forward.13} parent=11 // pred_check_branch
        %175 = sbr.rel (%p173) target = $region16
      $region15: #{diffpool_net_forward.13} parent=11 // pred_region
        _
      $region16: #{diffpool_net_forward.13} parent=11 // pred_fallthru
        _
      // Predicated region
      $region17: #{diffpool_net_forward.13} parent=11 // pred_check
        %p176 = pneg %p106
      $region18: #{diffpool_net_forward.13} parent=11 // pred_check_branch
        %178 = sbr.rel (%p176) target = $region20
      $region19: #{diffpool_net_forward.13} parent=11 // pred_region
        _
      $region20: #{diffpool_net_forward.13} parent=11 // pred_fallthru
        _
    $region12: #{diffpool_net_forward.13} parent=5 // pred_fallthru
      _
    %p179 = scmp.lt.s32.totalorder %s12, 2
    // Predicated region
    $region21: #{diffpool_net_forward.13} parent=5 // pred_check
      %p180 = pneg %p179
    $region22: #{diffpool_net_forward.13} parent=5 // pred_check_branch
      %182 = sbr.rel (%p180) target = $region24
    $region23: #{diffpool_net_forward.13} parent=5 // pred_region
      // Predicated region
      $region25: #{diffpool_net_forward.13} parent=23 // pred_check
        %p183 = pneg %p32
      $region26: #{diffpool_net_forward.13} parent=23 // pred_check_branch
        %185 = sbr.rel (%p183) target = $region28
      $region27: #{diffpool_net_forward.13} parent=23 // pred_region
        %p186 = scmp.lt.s32.totalorder %s12, 1
        %s187 = scalar_select %p186, %s12, 1
        %s188 = smul.addr %s187, 2
        %s189 = scalar_lea.vmem %s0, %s188
      $region28: #{diffpool_net_forward.13} parent=23 // pred_fallthru
        _
      // Predicated region
      $region29: #{diffpool_net_forward.13} parent=23 // pred_check
        %p190 = pneg %p58
      $region30: #{diffpool_net_forward.13} parent=23 // pred_check_branch
        %192 = sbr.rel (%p190) target = $region32
      $region31: #{diffpool_net_forward.13} parent=23 // pred_region
        %p193 = scmp.lt.s32.totalorder %s12, 1
        %s194 = scalar_select %p193, %s12, 1
        %s195 = smul.addr %s194, 4
        %s196 = scalar_lea.vmem %s1, %s195
      $region32: #{diffpool_net_forward.13} parent=23 // pred_fallthru
        _
    $region24: #{diffpool_net_forward.13} parent=5 // pred_fallthru
      _
    %p197 = scmp.le.s32.totalorder 1, %s12
    %p198 = scmp.lt.s32.totalorder %s12, 3
    %p199 = pnand %p197, %p198
    %p200 = pneg %p199
    // Predicated region
    $region33: #{diffpool_net_forward.13} parent=5 // pred_check
      _
    $region34: #{diffpool_net_forward.13} parent=5 // pred_check_branch
      %202 = sbr.rel (%p199) target = $region36
    $region35: #{diffpool_net_forward.13} parent=5 // pred_region
      %s203 = ssub.s32 %s12, 1
      %p204 = scmp.lt.s32.totalorder %s17, 1
      %s205 = scalar_select %p204, %s17, 1
      %s206 = smul.addr %s205, 2
      %s207 = scalar_lea.vmem %s0, %s206
      %p208 = pneg %p38
      %p209 = pneg %p35
      %p210 = scmp.lt.s32.totalorder %s17, 1
      %s211 = scalar_select %p210, %s17, 1
      %s212 = smul.addr %s211, 4
      %s213 = scalar_lea.vmem %s1, %s212
      %p214 = pneg %p64
      %p215 = pneg %p61
      %p216 = pneg %p85
      %p217 = pneg %p82
      %p218 = pneg %p106
      %p219 = pneg %p103
      %p220 = pneg %p132
      %p221 = pneg %p129
      %p222 = scmp.lt.s32.totalorder %s17, 1
      %s223 = scalar_select %p222, %s17, 1
      %s224 = smul.addr %s223, 2
      %s225 = scalar_lea.vmem %s4, %s224
      %p226 = pneg %p158
      %p227 = pneg %p155
      %p228 = scmp.lt.s32.totalorder %s17, 1
      %s229 = scalar_select %p228, %s17, 1
      %s230 = smul.addr %s229, 2
      %s231 = scalar_lea.vmem %s5, %s230
      %p232 = scmp.lt.s32.totalorder %s17, 1
      %s233 = scalar_select %p232, %s17, 1
      %s234 = smul.addr %s233, 2
      %s235 = scalar_lea.vmem %s0, %s234
      %p236 = scmp.lt.s32.totalorder %s17, 1
      %s237 = scalar_select %p236, %s17, 1
      %s238 = smul.addr %s237, 4
      %s239 = scalar_lea.vmem %s1, %s238
      %p240 = scmp.lt.s32.totalorder %s17, 1
      %s241 = scalar_select %p240, %s17, 1
      %s242 = smul.addr %s241, 2
      %s243 = scalar_lea.vmem %s4, %s242
      %p244 = scmp.lt.s32.totalorder %s17, 1
      %s245 = scalar_select %p244, %s17, 1
      %s246 = smul.addr %s245, 2
      %s247 = scalar_lea.vmem %s5, %s246
      %v249 = vld [vmem:[%s235] sm:$0x3]
      %v250 = vld [vmem:[%s239] sm:$0xf]
      %v251 = vpack.c.bf16 %v250, %v250
      %vm252 = vcmask 31744
      %v254 = vsel %vm252, %v251, 0
      %vm256 = vcmask 1041408
      %v258 = vsel %vm256, %v249, 0
      %260 = vmatprep.subr.bf16.mxu0 0
      %261 = vmatpush1.bf16.msra.mxu0 %v258
      %262 = vmatprep.subr.bf16.mxu0 0
      %263 = vmatpush1.bf16.msra.mxu0 0
      %264 = vmatprep.subr.bf16.mxu0 0
      %265 = vmatpush1.bf16.msra.mxu0 0
      %266 = vmatprep.subr.bf16.mxu0 0
      %267 = vmatpush1.bf16.msra.mxu0 0
      %268 = vmatprep.subr.bf16.mxu0 0
      %269 = vmatpush1.bf16.msra.mxu0 0
      %270 = vmatprep.subr.bf16.mxu0 0
      %271 = vmatpush1.bf16.msra.mxu0 0
      %272 = vmatprep.subr.bf16.mxu0 0
      %273 = vmatpush1.bf16.msra.mxu0 0
      %274 = vmatprep.subr.bf16.mxu0 0
      %275 = vmatpush1.bf16.msra.mxu0 0
      %276 = vmatprep.subr.bf16.mxu0 0
      %277 = vmatpush1.bf16.msra.mxu0 0
      %278 = vmatprep.subr.bf16.mxu0 0
      %279 = vmatpush1.bf16.msra.mxu0 0
      %280 = vmatprep.subr.bf16.mxu0 0
      %281 = vmatpush1.bf16.msra.mxu0 0
      %282 = vmatprep.subr.bf16.mxu0 0
      %283 = vmatpush1.bf16.msra.mxu0 0
      %284 = vmatprep.subr.bf16.mxu0 0
      %285 = vmatpush1.bf16.msra.mxu0 0
      %286 = vmatprep.subr.bf16.mxu0 0
      %287 = vmatpush1.bf16.msra.mxu0 0
      %288 = vmatprep.subr.bf16.mxu0 0
      %289 = vmatpush1.bf16.msra.mxu0 0
      %290 = vmatprep.subr.bf16.mxu0 0
      %291 = vmatpush1.bf16.msra.mxu0 0
      %292 = vmatprep.mubr.bf16.mxu0 0
      %293 = vmatmul.mubr.bf16.gmra.mrb[0].mxu0 %v254
      %v294 = vpop.f32.mrb[0].mxu0
      %v295 = vadd.f32 0.0, %v294
      %v296 = vpop.f32.mrb[0].mxu0
      %v297 = vpop.f32.mrb[0].mxu0
      %v298 = vpop.f32.mrb[0].mxu0
      %299 = vdwg.mxu0
      %v300 = vunpack.c.l.bf16 %v251
      %vm301 = vcmask 27648
      %v302 = vsel %vm301, %v300, 0.0
      %303 = vadd.xlane.f32.xlu0 %v302
      %v304 = vpop.xlane.xlu0 %303
      %v305 = vmax.f32 %v304, 1.0
      %v306 = vrcp.pop %v305
      %v307 = vmul.f32 %v295, %v306
      %v308 = vpack.c.bf16 %v307, %v307
      %v309 = vld [vmem:[%s2] sm:$0xff]
      %v310 = vld [vmem:[%s2 + $0x8] sm:$0xff]
      %v311 = vld [vmem:[%s2 + $0x10] sm:$0xff]
      %v312 = vld [vmem:[%s2 + $0x18] sm:$0xff]
      %v313 = vpack.c.bf16 %v310, %v309
      %v314 = vpack.c.bf16 %v312, %v311
      %v315 = vld [vmem:[%s3] sm:$0x1]
      %v317 = vlaneseq
      %v318 = vshrl.u32 %v317, 7
      %v319 = vsub.s32 0, %v318
      %v320 = vrot.slane %v315, %v319
      %vm322 = vcmask 261120
      %v324 = vsel %vm322, %v308, 0
      %326 = vmatprep.subr.bf16.mxu0 0
      %327 = vmatpush1.bf16.msra.mxu0 %v313
      %328 = vmatprep.subr.bf16.mxu0 0
      %329 = vmatpush1.bf16.msra.mxu0 %v314
      %330 = vmatprep.subr.bf16.mxu0 0
      %331 = vmatpush1.bf16.msra.mxu0 0
      %332 = vmatprep.subr.bf16.mxu0 0
      %333 = vmatpush1.bf16.msra.mxu0 0
      %334 = vmatprep.subr.bf16.mxu0 0
      %335 = vmatpush1.bf16.msra.mxu0 0
      %336 = vmatprep.subr.bf16.mxu0 0
      %337 = vmatpush1.bf16.msra.mxu0 0
      %338 = vmatprep.subr.bf16.mxu0 0
      %339 = vmatpush1.bf16.msra.mxu0 0
      %340 = vmatprep.subr.bf16.mxu0 0
      %341 = vmatpush1.bf16.msra.mxu0 0
      %342 = vmatprep.subr.bf16.mxu0 0
      %343 = vmatpush1.bf16.msra.mxu0 0
      %344 = vmatprep.subr.bf16.mxu0 0
      %345 = vmatpush1.bf16.msra.mxu0 0
      %346 = vmatprep.subr.bf16.mxu0 0
      %347 = vmatpush1.bf16.msra.mxu0 0
      %348 = vmatprep.subr.bf16.mxu0 0
      %349 = vmatpush1.bf16.msra.mxu0 0
      %350 = vmatprep.subr.bf16.mxu0 0
      %351 = vmatpush1.bf16.msra.mxu0 0
      %352 = vmatprep.subr.bf16.mxu0 0
      %353 = vmatpush1.bf16.msra.mxu0 0
      %354 = vmatprep.subr.bf16.mxu0 0
      %355 = vmatpush1.bf16.msra.mxu0 0
      %356 = vmatprep.subr.bf16.mxu0 0
      %357 = vmatpush1.bf16.msra.mxu0 0
      %358 = vmatprep.mubr.bf16.mxu0 0
      %359 = vmatmul.mubr.bf16.gmra.mrb[0].mxu0 %v324
      %v360 = vpop.f32.mrb[0].mxu0
      %v361 = vadd.f32 %v320, %v360
      %v362 = vpop.f32.mrb[0].mxu0
      %v363 = vpop.f32.mrb[0].mxu0
      %v364 = vpop.f32.mrb[0].mxu0
      %365 = vdwg.mxu0
      %v366 = vmax.f32 %v361, 0.0
      %v367 = vpack.c.bf16 %v366, %v366
      %vm368 = vcmask 254976
      %369 = vst.msk [vmem:[%s243] sm:$0x3] %vm368, %v367
      %vm370 = vcmask 257024
      %v371 = vsel %vm370, %v366, 0.0
      %v372 = vrot.slane %v371, 4
      %v373 = vadd.f32 %v371, %v372
      %v374 = vrot.slane %v373, 2
      %v375 = vadd.f32 %v373, %v374
      %v376 = vrot.slane %v375, 1
      %v377 = vadd.f32 %v375, %v376
      %v378 = vmul.f32 %v366, %v366
      %v379 = vsel %vm370, %v378, 0.0
      %v380 = vrot.slane %v379, 4
      %v381 = vadd.f32 %v379, %v380
      %v382 = vrot.slane %v381, 2
      %v383 = vadd.f32 %v381, %v382
      %v384 = vrot.slane %v383, 1
      %v385 = vadd.f32 %v383, %v384
      %vm386 = vcmask 1040384
      %v387 = vsel %vm386, %v377, %v385
      %388 = vst.msk [vmem:[%s247] sm:$0x3] %vm368, %v387
      %p389 = scmp.lt.s32.totalorder %s17, 1
      %s390 = scalar_select %p389, %s17, 1
      %s391 = smul.addr %s390, 2
      %s392 = scalar_lea.vmem %s4, %s391
      %p393 = scmp.lt.s32.totalorder %s17, 1
      %s394 = scalar_select %p393, %s17, 1
      %s395 = smul.addr %s394, 2
      %s396 = scalar_lea.vmem %s5, %s395
      // Predicated region
      $region37: #{diffpool_net_forward.13} parent=35 // pred_check
        %p397 = pneg %p129
      $region38: #{diffpool_net_forward.13} parent=35 // pred_check_branch
        %399 = sbr.rel (%p397) target = $region40
      $region39: #{diffpool_net_forward.13} parent=35 // pred_region
        _
      $region40: #{diffpool_net_forward.13} parent=35 // pred_fallthru
        _
      // Predicated region
      $region41: #{diffpool_net_forward.13} parent=35 // pred_check
        %p400 = pneg %p155
      $region42: #{diffpool_net_forward.13} parent=35 // pred_check_branch
        %402 = sbr.rel (%p400) target = $region44
      $region43: #{diffpool_net_forward.13} parent=35 // pred_region
        _
      $region44: #{diffpool_net_forward.13} parent=35 // pred_fallthru
        _
    $region36: #{diffpool_net_forward.13} parent=5 // pred_fallthru
      _
    %p403 = scmp.le.s32.totalorder 2, %s12
    // Predicated region
    $region45: #{diffpool_net_forward.13} parent=5 // pred_check
      %p404 = pneg %p403
    $region46: #{diffpool_net_forward.13} parent=5 // pred_check_branch
      %406 = sbr.rel (%p404) target = $region48
    $region47: #{diffpool_net_forward.13} parent=5 // pred_region
      %s407 = ssub.s32 %s12, 2
      // Predicated region
      $region49: #{diffpool_net_forward.13} parent=47 // pred_check
        %p408 = pneg %p135
      $region50: #{diffpool_net_forward.13} parent=47 // pred_check_branch
        %410 = sbr.rel (%p408) target = $region52
      $region51: #{diffpool_net_forward.13} parent=47 // pred_region
        %p411 = scmp.lt.s32.totalorder %s18, 1
        %s412 = scalar_select %p411, %s18, 1
        %s413 = smul.addr %s412, 2
        %s414 = scalar_lea.vmem %s4, %s413
      $region52: #{diffpool_net_forward.13} parent=47 // pred_fallthru
        _
      // Predicated region
      $region53: #{diffpool_net_forward.13} parent=47 // pred_check
        %p415 = pneg %p161
      $region54: #{diffpool_net_forward.13} parent=47 // pred_check_branch
        %417 = sbr.rel (%p415) target = $region56
      $region55: #{diffpool_net_forward.13} parent=47 // pred_region
        %p418 = scmp.lt.s32.totalorder %s18, 1
        %s419 = scalar_select %p418, %s18, 1
        %s420 = smul.addr %s419, 2
        %s421 = scalar_lea.vmem %s5, %s420
      $region56: #{diffpool_net_forward.13} parent=47 // pred_fallthru
        _
    $region48: #{diffpool_net_forward.13} parent=5 // pred_fallthru
      _
  $region6: #{diffpool_net_forward.13} parent=0 // loop_footer
    %s16 = sadd.s32 1, %s12
  $region7: #{diffpool_net_forward.13} parent=0 // loop_footer_branch
    %11 = sbr.rel target = $region3
  $region8: #{diffpool_net_forward.13} parent=0 // loop_exit
    _

// kernel: diffpool_net_forward.12
$region0: #{diffpool_net_forward.12}
  #allocation0 [shape = 'u32[]', space=smem, size = 0x4, offset = 0x4, fixed_abs, tag = 'smem constant byte address 0x4 - core index']
  #allocation1 [shape = 'u32[144,128]{1,0:T(1,128)}', space=vmem, size = 0x12000, scoped, tag = 'internal scratch']
  %s0 = inlined_call_operand.vmem [shape: bf16[2,8,32], index: 0, kind: input, shape index: {}]
  %s1 = inlined_call_operand.vmem [shape: f32[2,8,8], index: 1, kind: input, shape index: {}]
  %s2 = inlined_call_operand.vmem [shape: bf16[2,8,4], index: 2, kind: input, shape index: {}]
  %s3 = inlined_call_operand.vmem [shape: f32[1,32], index: 3, kind: input, shape index: {}]
  %s4 = inlined_call_operand.vmem [shape: f32[1,32], index: 4, kind: input, shape index: {}]
  %s5 = inlined_call_operand.vmem [shape: bf16[2,4,32], index: 5, kind: output, shape index: {0}]
  %s6 = inlined_call_operand.vmem [shape: f32[2,4,4], index: 6, kind: output, shape index: {1}]
  %7 = xla_tuple %s5, %s6
  %s8 = sld [smem:[#allocation0]]
  $region61: #{diffpool_net_forward.12} parent=0
    _
  %s10 = ssub.s32 1, %s8
  %s11 = scalar_select 0, %s10, %s8
  loop: start=0, step=1, limit=4
  $region2: #{diffpool_net_forward.12} parent=0 // loop_pre_header
    _
  $region3: #{diffpool_net_forward.12} parent=0 // loop_header
    %s13 = sphi 0, %s17
    %p14 = scmp.ge.s32.totalorder %s13, 4
    %s23 = sphi 0, %s25
    %s26 = sphi 0, %s23
    %s27 = sphi 0, %s26
    %s43 = sphi 0, %s27
    %s49 = sphi 0, %s51
    %s52 = sphi 0, %s49
    %s53 = sphi 0, %s52
    %s69 = sphi 0, %s53
    %s75 = sphi 0, %s77
    %s78 = sphi 0, %s75
    %s79 = sphi 0, %s78
    %s95 = sphi 0, %s79
    %s99 = sphi 0, %s99
    %s101 = sphi 0, %s99
    %s102 = sphi 0, %s101
    %s116 = sphi 0, %s102
    %s120 = sphi 0, %s120
    %s122 = sphi 0, %s120
    %s123 = sphi 0, %s122
    %s137 = sphi 0, %s123
    %s143 = sphi 0, %s145
    %s146 = sphi 0, %s143
    %s147 = sphi 0, %s146
    %s163 = sphi 0, %s147
    %s169 = sphi 0, %s171
    %s172 = sphi 0, %s169
    %s173 = sphi 0, %s172
    %s189 = sphi 0, %s173
  $region4: #{diffpool_net_forward.12} parent=0 // loop_header_branch
    %16 = sbr.rel (%p14) target = $region8
  $region5: #{diffpool_net_forward.12} parent=0 // loop_body
    %s18 = ssub.s32 %s13, 1
    %s19 = ssub.s32 %s13, 2
    %s20 = sadd.s32 %s13, 1
    %s21 = ssub.s32 %s13, %s20
    %p22 = scmp.eq.s32.totalorder %s21, 0
    %s24 = sadd.s32 %s23, 1
    %s25 = scalar_select %p22, %s23, %s24
    %p28 = pneg %p22
    %p29 = scmp.eq.s32.totalorder %s13, 1
    %p30 = por %p28, %p29
    %p31 = scmp.ne.s32.totalorder %s23, %s26
    %p32 = scmp.eq.s32.totalorder %s13, 0
    %p33 = por %p31, %p32
    %p34 = scmp.ne.s32.totalorder %s23, %s26
    %p35 = scmp.eq.s32.totalorder %s18, 1
    %p36 = por %p34, %p35
    %p37 = scmp.ne.s32.totalorder %s26, %s27
    %p38 = scmp.eq.s32.totalorder %s18, 0
    %p39 = por %p37, %p38
    %p40 = scmp.ne.s32.totalorder %s26, %s27
    %p41 = scmp.eq.s32.totalorder %s19, 1
    %p42 = por %p40, %p41
    %p44 = scmp.ne.s32.totalorder %s27, %s43
    %p45 = scmp.eq.s32.totalorder %s19, 0
    %p46 = por %p44, %p45
    %s47 = ssub.s32 %s13, %s20
    %p48 = scmp.eq.s32.totalorder %s47, 0
    %s50 = sadd.s32 %s49, 1
    %s51 = scalar_select %p48, %s49, %s50
    %p54 = pneg %p48
    %p55 = scmp.eq.s32.totalorder %s13, 1
    %p56 = por %p54, %p55
    %p57 = scmp.ne.s32.totalorder %s49, %s52
    %p58 = scmp.eq.s32.totalorder %s13, 0
    %p59 = por %p57, %p58
    %p60 = scmp.ne.s32.totalorder %s49, %s52
    %p61 = scmp.eq.s32.totalorder %s18, 1
    %p62 = por %p60, %p61
    %p63 = scmp.ne.s32.totalorder %s52, %s53
    %p64 = scmp.eq.s32.totalorder %s18, 0
    %p65 = por %p63, %p64
    %p66 = scmp.ne.s32.totalorder %s52, %s53
    %p67 = scmp.eq.s32.totalorder %s19, 1
    %p68 = por %p66, %p67
    %p70 = scmp.ne.s32.totalorder %s53, %s69
    %p71 = scmp.eq.s32.totalorder %s19, 0
    %p72 = por %p70, %p71
    %s73 = ssub.s32 %s13, %s20
    %p74 = scmp.eq.s32.totalorder %s73, 0
    %s76 = sadd.s32 %s75, 1
    %s77 = scalar_select %p74, %s75, %s76
    %p80 = pneg %p74
    %p81 = scmp.eq.s32.totalorder %s13, 1
    %p82 = por %p80, %p81
    %p83 = scmp.ne.s32.totalorder %s75, %s78
    %p84 = scmp.eq.s32.totalorder %s13, 0
    %p85 = por %p83, %p84
    %p86 = scmp.ne.s32.totalorder %s75, %s78
    %p87 = scmp.eq.s32.totalorder %s18, 1
    %p88 = por %p86, %p87
    %p89 = scmp.ne.s32.totalorder %s78, %s79
    %p90 = scmp.eq.s32.totalorder %s18, 0
    %p91 = por %p89, %p90
    %p92 = scmp.ne.s32.totalorder %s78, %s79
    %p93 = scmp.eq.s32.totalorder %s19, 1
    %p94 = por %p92, %p93
    %p96 = scmp.ne.s32.totalorder %s79, %s95
    %p97 = scmp.eq.s32.totalorder %s19, 0
    %p98 = por %p96, %p97
    %s100 = sadd.s32 %s99, 1
    %p103 = scmp.eq.s32.totalorder %s13, 1
    %p104 = scmp.ne.s32.totalorder %s99, %s101
    %p105 = scmp.eq.s32.totalorder %s13, 0
    %p106 = por %p104, %p105
    %p107 = scmp.ne.s32.totalorder %s99, %s101
    %p108 = scmp.eq.s32.totalorder %s18, 1
    %p109 = por %p107, %p108
    %p110 = scmp.ne.s32.totalorder %s101, %s102
    %p111 = scmp.eq.s32.totalorder %s18, 0
    %p112 = por %p110, %p111
    %p113 = scmp.ne.s32.totalorder %s101, %s102
    %p114 = scmp.eq.s32.totalorder %s19, 1
    %p115 = por %p113, %p114
    %p117 = scmp.ne.s32.totalorder %s102, %s116
    %p118 = scmp.eq.s32.totalorder %s19, 0
    %p119 = por %p117, %p118
    %s121 = sadd.s32 %s120, 1
    %p124 = scmp.eq.s32.totalorder %s13, 1
    %p125 = scmp.ne.s32.totalorder %s120, %s122
    %p126 = scmp.eq.s32.totalorder %s13, 0
    %p127 = por %p125, %p126
    %p128 = scmp.ne.s32.totalorder %s120, %s122
    %p129 = scmp.eq.s32.totalorder %s18, 1
    %p130 = por %p128, %p129
    %p131 = scmp.ne.s32.totalorder %s122, %s123
    %p132 = scmp.eq.s32.totalorder %s18, 0
    %p133 = por %p131, %p132
    %p134 = scmp.ne.s32.totalorder %s122, %s123
    %p135 = scmp.eq.s32.totalorder %s19, 1
    %p136 = por %p134, %p135
    %p138 = scmp.ne.s32.totalorder %s123, %s137
    %p139 = scmp.eq.s32.totalorder %s19, 0
    %p140 = por %p138, %p139
    %s141 = ssub.s32 %s13, %s20
    %p142 = scmp.eq.s32.totalorder %s141, 0
    %s144 = sadd.s32 %s143, 1
    %s145 = scalar_select %p142, %s143, %s144
    %p148 = pneg %p142
    %p149 = scmp.eq.s32.totalorder %s13, 1
    %p150 = por %p148, %p149
    %p151 = scmp.ne.s32.totalorder %s143, %s146
    %p152 = scmp.eq.s32.totalorder %s13, 0
    %p153 = por %p151, %p152
    %p154 = scmp.ne.s32.totalorder %s143, %s146
    %p155 = scmp.eq.s32.totalorder %s18, 1
    %p156 = por %p154, %p155
    %p157 = scmp.ne.s32.totalorder %s146, %s147
    %p158 = scmp.eq.s32.totalorder %s18, 0
    %p159 = por %p157, %p158
    %p160 = scmp.ne.s32.totalorder %s146, %s147
    %p161 = scmp.eq.s32.totalorder %s19, 1
    %p162 = por %p160, %p161
    %p164 = scmp.ne.s32.totalorder %s147, %s163
    %p165 = scmp.eq.s32.totalorder %s19, 0
    %p166 = por %p164, %p165
    %s167 = ssub.s32 %s13, %s20
    %p168 = scmp.eq.s32.totalorder %s167, 0
    %s170 = sadd.s32 %s169, 1
    %s171 = scalar_select %p168, %s169, %s170
    %p174 = pneg %p168
    %p175 = scmp.eq.s32.totalorder %s13, 1
    %p176 = por %p174, %p175
    %p177 = scmp.ne.s32.totalorder %s169, %s172
    %p178 = scmp.eq.s32.totalorder %s13, 0
    %p179 = por %p177, %p178
    %p180 = scmp.ne.s32.totalorder %s169, %s172
    %p181 = scmp.eq.s32.totalorder %s18, 1
    %p182 = por %p180, %p181
    %p183 = scmp.ne.s32.totalorder %s172, %s173
    %p184 = scmp.eq.s32.totalorder %s18, 0
    %p185 = por %p183, %p184
    %p186 = scmp.ne.s32.totalorder %s172, %s173
    %p187 = scmp.eq.s32.totalorder %s19, 1
    %p188 = por %p186, %p187
    %p190 = scmp.ne.s32.totalorder %s173, %s189
    %p191 = scmp.eq.s32.totalorder %s19, 0
    %p192 = por %p190, %p191
    %p193 = scmp.le.s32.totalorder 1, %s13
    %p194 = scmp.lt.s32.totalorder %s13, 3
    %p195 = pnand %p193, %p194
    %p196 = pneg %p195
    // Predicated region
    $region9: #{diffpool_net_forward.12} parent=5 // pred_check
      _
    $region10: #{diffpool_net_forward.12} parent=5 // pred_check_branch
      %198 = sbr.rel (%p195) target = $region12
    $region11: #{diffpool_net_forward.12} parent=5 // pred_region
      %s199 = ssub.s32 %s13, 1
      // Predicated region
      $region13: #{diffpool_net_forward.12} parent=11 // pred_check
        %p200 = pneg %p112
      $region14: #{diffpool_net_forward.12} parent=11 // pred_check_branch
        %202 = sbr.rel (%p200) target = $region16
      $region15: #{diffpool_net_forward.12} parent=11 // pred_region
        _
      $region16: #{diffpool_net_forward.12} parent=11 // pred_fallthru
        _
      // Predicated region
      $region17: #{diffpool_net_forward.12} parent=11 // pred_check
        %p203 = pneg %p133
      $region18: #{diffpool_net_forward.12} parent=11 // pred_check_branch
        %205 = sbr.rel (%p203) target = $region20
      $region19: #{diffpool_net_forward.12} parent=11 // pred_region
        _
      $region20: #{diffpool_net_forward.12} parent=11 // pred_fallthru
        _
    $region12: #{diffpool_net_forward.12} parent=5 // pred_fallthru
      _
    %p206 = scmp.lt.s32.totalorder %s13, 2
    // Predicated region
    $region21: #{diffpool_net_forward.12} parent=5 // pred_check
      %p207 = pneg %p206
    $region22: #{diffpool_net_forward.12} parent=5 // pred_check_branch
      %209 = sbr.rel (%p207) target = $region24
    $region23: #{diffpool_net_forward.12} parent=5 // pred_region
      // Predicated region
      $region25: #{diffpool_net_forward.12} parent=23 // pred_check
        %p210 = pneg %p33
      $region26: #{diffpool_net_forward.12} parent=23 // pred_check_branch
        %212 = sbr.rel (%p210) target = $region28
      $region27: #{diffpool_net_forward.12} parent=23 // pred_region
        %p213 = scmp.lt.s32.totalorder %s13, 1
        %s214 = scalar_select %p213, %s13, 1
        %s215 = smul.addr %s214, 4
        %s216 = scalar_lea.vmem %s0, %s215
      $region28: #{diffpool_net_forward.12} parent=23 // pred_fallthru
        _
      // Predicated region
      $region29: #{diffpool_net_forward.12} parent=23 // pred_check
        %p217 = pneg %p59
      $region30: #{diffpool_net_forward.12} parent=23 // pred_check_branch
        %219 = sbr.rel (%p217) target = $region32
      $region31: #{diffpool_net_forward.12} parent=23 // pred_region
        %p220 = scmp.lt.s32.totalorder %s13, 1
        %s221 = scalar_select %p220, %s13, 1
        %s222 = smul.addr %s221, 8
        %s223 = scalar_lea.vmem %s1, %s222
      $region32: #{diffpool_net_forward.12} parent=23 // pred_fallthru
        _
      // Predicated region
      $region33: #{diffpool_net_forward.12} parent=23 // pred_check
        %p224 = pneg %p85
      $region34: #{diffpool_net_forward.12} parent=23 // pred_check_branch
        %226 = sbr.rel (%p224) target = $region36
      $region35: #{diffpool_net_forward.12} parent=23 // pred_region
        %p227 = scmp.lt.s32.totalorder %s13, 1
        %s228 = scalar_select %p227, %s13, 1
        %s229 = smul.addr %s228, 4
        %s230 = scalar_lea.vmem %s2, %s229
      $region36: #{diffpool_net_forward.12} parent=23 // pred_fallthru
        _
    $region24: #{diffpool_net_forward.12} parent=5 // pred_fallthru
      _
    %p231 = scmp.le.s32.totalorder 1, %s13
    %p232 = scmp.lt.s32.totalorder %s13, 3
    %p233 = pnand %p231, %p232
    %p234 = pneg %p233
    // Predicated region
    $region37: #{diffpool_net_forward.12} parent=5 // pred_check
      _
    $region38: #{diffpool_net_forward.12} parent=5 // pred_check_branch
      %236 = sbr.rel (%p233) target = $region40
    $region39: #{diffpool_net_forward.12} parent=5 // pred_region
      %s237 = ssub.s32 %s13, 1
      %p238 = scmp.lt.s32.totalorder %s18, 1
      %s239 = scalar_select %p238, %s18, 1
      %s240 = smul.addr %s239, 4
      %s241 = scalar_lea.vmem %s0, %s240
      %p242 = pneg %p39
      %p243 = pneg %p36
      %p244 = scmp.lt.s32.totalorder %s18, 1
      %s245 = scalar_select %p244, %s18, 1
      %s246 = smul.addr %s245, 8
      %s247 = scalar_lea.vmem %s1, %s246
      %p248 = pneg %p65
      %p249 = pneg %p62
      %p250 = scmp.lt.s32.totalorder %s18, 1
      %s251 = scalar_select %p250, %s18, 1
      %s252 = smul.addr %s251, 4
      %s253 = scalar_lea.vmem %s2, %s252
      %p254 = pneg %p91
      %p255 = pneg %p88
      %p256 = pneg %p112
      %p257 = pneg %p109
      %p258 = pneg %p133
      %p259 = pneg %p130
      %p260 = pneg %p159
      %p261 = pneg %p156
      %p262 = scmp.lt.s32.totalorder %s18, 1
      %s263 = scalar_select %p262, %s18, 1
      %s264 = smul.addr %s263, 2
      %s265 = scalar_lea.vmem %s5, %s264
      %p266 = pneg %p185
      %p267 = pneg %p182
      %p268 = scmp.lt.s32.totalorder %s18, 1
      %s269 = scalar_select %p268, %s18, 1
      %s270 = smul.addr %s269, 4
      %s271 = scalar_lea.vmem %s6, %s270
      %p272 = scmp.lt.s32.totalorder %s18, 1
      %s273 = scalar_select %p272, %s18, 1
      %s274 = smul.addr %s273, 4
      %s275 = scalar_lea.vmem %s0, %s274
      %p276 = scmp.lt.s32.totalorder %s18, 1
      %s277 = scalar_select %p276, %s18, 1
      %s278 = smul.addr %s277, 8
      %s279 = scalar_lea.vmem %s1, %s278
      %p280 = scmp.lt.s32.totalorder %s18, 1
      %s281 = scalar_select %p280, %s18, 1
      %s282 = smul.addr %s281, 4
      %s283 = scalar_lea.vmem %s2, %s282
      %p284 = scmp.lt.s32.totalorder %s18, 1
      %s285 = scalar_select %p284, %s18, 1
      %s286 = smul.addr %s285, 2
      %s287 = scalar_lea.vmem %s5, %s286
      %p288 = scmp.lt.s32.totalorder %s18, 1
      %s289 = scalar_select %p288, %s18, 1
      %s290 = smul.addr %s289, 4
      %s291 = scalar_lea.vmem %s6, %s290
      %v293 = vld [vmem:[%s3] sm:$0x1]
      %v294 = vld [vmem:[%s4] sm:$0x1]
      %v295 = vld [vmem:[%s275] sm:$0xf]
      %v296 = vunpack.c.l.bf16 %v295
      %v298 = vlaneseq
      %v299 = vshrl.u32 %v298, 7
      %v300 = vsub.s32 0, %v299
      %v301 = vrot.slane %v293, %v300
      %v303 = vmul.f32 %v296, %v301
      %v305 = vlaneseq
      %v306 = vshrl.u32 %v305, 7
      %v307 = vsub.s32 0, %v306
      %v308 = vrot.slane %v294, %v307
      %v310 = vadd.f32 %v303, %v308
      %v311 = vld [vmem:[%s283] sm:$0xf]
      %v312 = vunpack.c.l.bf16 %v311
      %vm313 = vcmask 31744
      %v314 = vsel %vm313, %v312, -inf
      %315 = vmax.xlane.f32.xlu0 %v314
      %v316 = vpop.xlane.xlu0 %315
      %v317 = vsub.f32 %v312, %v316
      %v318 = vmul.f32 %v317, 1.442695
      %v319 = vpow.pop %v318
      %v320 = vsel %vm313, %v319, 0.0
      %321 = vadd.xlane.f32.xlu0 %v320
      %v322 = vpop.xlane.xlu0 %321
      %v323 = vrcp.pop %v322
      %v324 = vmul.f32 %v319, %v323
      %325 = vxpose.xlu0.b32.start [1/16] %v324, 128
      %326 = vxpose.xlu0.b32.cont [2/16] 0.0, 128
      %327 = vxpose.xlu0.b32.cont [3/16] 0.0, 128
      %328 = vxpose.xlu0.b32.cont [4/16] 0.0, 128
      %329 = vxpose.xlu0.b32.cont [5/16] 0.0, 128
      %330 = vxpose.xlu0.b32.cont [6/16] 0.0, 128
      %331 = vxpose.xlu0.b32.cont [7/16] 0.0, 128
      %332 = vxpose.xlu0.b32.cont [8/16] 0.0, 128
      %333 = vxpose.xlu0.b32.cont [9/16] 0.0, 128
      %334 = vxpose.xlu0.b32.cont [10/16] 0.0, 128
      %335 = vxpose.xlu0.b32.cont [11/16] 0.0, 128
      %336 = vxpose.xlu0.b32.cont [12/16] 0.0, 128
      %337 = vxpose.xlu0.b32.cont [13/16] 0.0, 128
      %338 = vxpose.xlu0.b32.cont [14/16] 0.0, 128
      %339 = vxpose.xlu0.b32.cont [15/16] 0.0, 128
      %340 = vxpose.xlu0.b32.end [16/16] 0.0, 128
      %v341 = vpop.trf.xlu0
      %v342 = vpop.trf.xlu0
      %v343 = vpop.trf.xlu0
      %v344 = vpop.trf.xlu0
      %v345 = vpop.trf.xlu0
      %v346 = vpop.trf.xlu0
      %v347 = vpop.trf.xlu0
      %v348 = vpop.trf.xlu0
      %v349 = vpop.trf.xlu0
      %v350 = vpop.trf.xlu0
      %v351 = vpop.trf.xlu0
      %v352 = vpop.trf.xlu0
      %v353 = vpop.trf.xlu0
      %v354 = vpop.trf.xlu0
      %v355 = vpop.trf.xlu0
      %v356 = vpop.trf.xlu0
      %v357 = vpack.c.bf16 %v341, %v341
      %v358 = vpack.c.bf16 %v324, %v324
      %v359 = vld [vmem:[%s279] sm:$0xff]
      %v360 = vpack.c.bf16 %v359, %v359
      %v361 = vpack.c.bf16 %v310, %v310
      %vm362 = vcmask 64512
      %v364 = vsel %vm362, %v357, 0
      %vm366 = vcmask 1043456
      %v368 = vsel %vm366, %v361, 0
      %370 = vmatprep.subr.bf16.mxu0 0
      %371 = vmatpush1.bf16.msra.mxu0 %v368
      %372 = vmatprep.subr.bf16.mxu0 0
      %373 = vmatpush1.bf16.msra.mxu0 0
      %374 = vmatprep.subr.bf16.mxu0 0
      %375 = vmatpush1.bf16.msra.mxu0 0
      %376 = vmatprep.subr.bf16.mxu0 0
      %377 = vmatpush1.bf16.msra.mxu0 0
      %378 = vmatprep.subr.bf16.mxu0 0
      %379 = vmatpush1.bf16.msra.mxu0 0
      %380 = vmatprep.subr.bf16.mxu0 0
      %381 = vmatpush1.bf16.msra.mxu0 0
      %382 = vmatprep.subr.bf16.mxu0 0
      %383 = vmatpush1.bf16.msra.mxu0 0
      %384 = vmatprep.subr.bf16.mxu0 0
      %385 = vmatpush1.bf16.msra.mxu0 0
      %386 = vmatprep.subr.bf16.mxu0 0
      %387 = vmatpush1.bf16.msra.mxu0 0
      %388 = vmatprep.subr.bf16.mxu0 0
      %389 = vmatpush1.bf16.msra.mxu0 0
      %390 = vmatprep.subr.bf16.mxu0 0
      %391 = vmatpush1.bf16.msra.mxu0 0
      %392 = vmatprep.subr.bf16.mxu0 0
      %393 = vmatpush1.bf16.msra.mxu0 0
      %394 = vmatprep.subr.bf16.mxu0 0
      %395 = vmatpush1.bf16.msra.mxu0 0
      %396 = vmatprep.subr.bf16.mxu0 0
      %397 = vmatpush1.bf16.msra.mxu0 0
      %398 = vmatprep.subr.bf16.mxu0 0
      %399 = vmatpush1.bf16.msra.mxu0 0
      %400 = vmatprep.subr.bf16.mxu0 0
      %401 = vmatpush1.bf16.msra.mxu0 0
      %402 = vmatprep.mubr.bf16.mxu0 0
      %403 = vmatmul.mubr.bf16.gmra.mrb[0].mxu0 %v364
      %v404 = vpop.f32.mrb[0].mxu0
      %v405 = vadd.f32 0.0, %v404
      %v406 = vpop.f32.mrb[0].mxu0
      %v407 = vpop.f32.mrb[0].mxu0
      %v408 = vpop.f32.mrb[0].mxu0
      %409 = vdwg.mxu0
      %v411 = vsel %vm366, %v360, 0
      %413 = vmatprep.subr.bf16.mxu0 0
      %414 = vmatpush1.bf16.msra.mxu0 %v411
      %415 = vmatprep.subr.bf16.mxu0 0
      %416 = vmatpush1.bf16.msra.mxu0 0
      %417 = vmatprep.subr.bf16.mxu0 0
      %418 = vmatpush1.bf16.msra.mxu0 0
      %419 = vmatprep.subr.bf16.mxu0 0
      %420 = vmatpush1.bf16.msra.mxu0 0
      %421 = vmatprep.subr.bf16.mxu0 0
      %422 = vmatpush1.bf16.msra.mxu0 0
      %423 = vmatprep.subr.bf16.mxu0 0
      %424 = vmatpush1.bf16.msra.mxu0 0
      %425 = vmatprep.subr.bf16.mxu0 0
      %426 = vmatpush1.bf16.msra.mxu0 0
      %427 = vmatprep.subr.bf16.mxu0 0
      %428 = vmatpush1.bf16.msra.mxu0 0
      %429 = vmatprep.subr.bf16.mxu0 0
      %430 = vmatpush1.bf16.msra.mxu0 0
      %431 = vmatprep.subr.bf16.mxu0 0
      %432 = vmatpush1.bf16.msra.mxu0 0
      %433 = vmatprep.subr.bf16.mxu0 0
      %434 = vmatpush1.bf16.msra.mxu0 0
      %435 = vmatprep.subr.bf16.mxu0 0
      %436 = vmatpush1.bf16.msra.mxu0 0
      %437 = vmatprep.subr.bf16.mxu0 0
      %438 = vmatpush1.bf16.msra.mxu0 0
      %439 = vmatprep.subr.bf16.mxu0 0
      %440 = vmatpush1.bf16.msra.mxu0 0
      %441 = vmatprep.subr.bf16.mxu0 0
      %442 = vmatpush1.bf16.msra.mxu0 0
      %443 = vmatprep.subr.bf16.mxu0 0
      %444 = vmatpush1.bf16.msra.mxu0 0
      %445 = vmatprep.mubr.bf16.mxu0 0
      %446 = vmatmul.mubr.bf16.gmra.mrb[0].mxu0 %v364
      %v447 = vpop.f32.mrb[0].mxu0
      %v448 = vadd.f32 0.0, %v447
      %v449 = vpop.f32.mrb[0].mxu0
      %v450 = vpop.f32.mrb[0].mxu0
      %v451 = vpop.f32.mrb[0].mxu0
      %452 = vdwg.mxu0
      %v453 = vpack.c.bf16 %v448, %v448
      %v455 = vsel %vm362, %v453, 0
      %v458 = vsel %vm366, %v358, 0
      %460 = vmatprep.subr.bf16.mxu0 0
      %461 = vmatpush1.bf16.msra.mxu0 %v458
      %462 = vmatprep.subr.bf16.mxu0 0
      %463 = vmatpush1.bf16.msra.mxu0 0
      %464 = vmatprep.subr.bf16.mxu0 0
      %465 = vmatpush1.bf16.msra.mxu0 0
      %466 = vmatprep.subr.bf16.mxu0 0
      %467 = vmatpush1.bf16.msra.mxu0 0
      %468 = vmatprep.subr.bf16.mxu0 0
      %469 = vmatpush1.bf16.msra.mxu0 0
      %470 = vmatprep.subr.bf16.mxu0 0
      %471 = vmatpush1.bf16.msra.mxu0 0
      %472 = vmatprep.subr.bf16.mxu0 0
      %473 = vmatpush1.bf16.msra.mxu0 0
      %474 = vmatprep.subr.bf16.mxu0 0
      %475 = vmatpush1.bf16.msra.mxu0 0
      %476 = vmatprep.subr.bf16.mxu0 0
      %477 = vmatpush1.bf16.msra.mxu0 0
      %478 = vmatprep.subr.bf16.mxu0 0
      %479 = vmatpush1.bf16.msra.mxu0 0
      %480 = vmatprep.subr.bf16.mxu0 0
      %481 = vmatpush1.bf16.msra.mxu0 0
      %482 = vmatprep.subr.bf16.mxu0 0
      %483 = vmatpush1.bf16.msra.mxu0 0
      %484 = vmatprep.subr.bf16.mxu0 0
      %485 = vmatpush1.bf16.msra.mxu0 0
      %486 = vmatprep.subr.bf16.mxu0 0
      %487 = vmatpush1.bf16.msra.mxu0 0
      %488 = vmatprep.subr.bf16.mxu0 0
      %489 = vmatpush1.bf16.msra.mxu0 0
      %490 = vmatprep.subr.bf16.mxu0 0
      %491 = vmatpush1.bf16.msra.mxu0 0
      %492 = vmatprep.mubr.bf16.mxu0 0
      %493 = vmatmul.mubr.bf16.gmra.mrb[0].mxu0 %v455
      %v494 = vpop.f32.mrb[0].mxu0
      %v495 = vadd.f32 0.0, %v494
      %v496 = vpop.f32.mrb[0].mxu0
      %v497 = vpop.f32.mrb[0].mxu0
      %v498 = vpop.f32.mrb[0].mxu0
      %499 = vdwg.mxu0
      %v500 = vpack.c.bf16 %v405, %v405
      %vm501 = vcmask 254976
      %502 = vst.msk [vmem:[%s287] sm:$0x3] %vm501, %v500
      %vm503 = vcmask 27648
      %504 = vst.msk [vmem:[%s291] sm:$0xf] %vm503, %v495
      %p505 = scmp.lt.s32.totalorder %s18, 1
      %s506 = scalar_select %p505, %s18, 1
      %s507 = smul.addr %s506, 2
      %s508 = scalar_lea.vmem %s5, %s507
      %p509 = scmp.lt.s32.totalorder %s18, 1
      %s510 = scalar_select %p509, %s18, 1
      %s511 = smul.addr %s510, 4
      %s512 = scalar_lea.vmem %s6, %s511
      // Predicated region
      $region41: #{diffpool_net_forward.12} parent=39 // pred_check
        %p513 = pneg %p156
      $region42: #{diffpool_net_forward.12} parent=39 // pred_check_branch
        %515 = sbr.rel (%p513) target = $region44
      $region43: #{diffpool_net_forward.12} parent=39 // pred_region
        _
      $region44: #{diffpool_net_forward.12} parent=39 // pred_fallthru
        _
      // Predicated region
      $region45: #{diffpool_net_forward.12} parent=39 // pred_check
        %p516 = pneg %p182
      $region46: #{diffpool_net_forward.12} parent=39 // pred_check_branch
        %518 = sbr.rel (%p516) target = $region48
      $region47: #{diffpool_net_forward.12} parent=39 // pred_region
        _
      $region48: #{diffpool_net_forward.12} parent=39 // pred_fallthru
        _
    $region40: #{diffpool_net_forward.12} parent=5 // pred_fallthru
      _
    %p519 = scmp.le.s32.totalorder 2, %s13
    // Predicated region
    $region49: #{diffpool_net_forward.12} parent=5 // pred_check
      %p520 = pneg %p519
    $region50: #{diffpool_net_forward.12} parent=5 // pred_check_branch
      %522 = sbr.rel (%p520) target = $region52
    $region51: #{diffpool_net_forward.12} parent=5 // pred_region
      %s523 = ssub.s32 %s13, 2
      // Predicated region
      $region53: #{diffpool_net_forward.12} parent=51 // pred_check
        %p524 = pneg %p162
      $region54: #{diffpool_net_forward.12} parent=51 // pred_check_branch
        %526 = sbr.rel (%p524) target = $region56
      $region55: #{diffpool_net_forward.12} parent=51 // pred_region
        %p527 = scmp.lt.s32.totalorder %s19, 1
        %s528 = scalar_select %p527, %s19, 1
        %s529 = smul.addr %s528, 2
        %s530 = scalar_lea.vmem %s5, %s529
      $region56: #{diffpool_net_forward.12} parent=51 // pred_fallthru
        _
      // Predicated region
      $region57: #{diffpool_net_forward.12} parent=51 // pred_check
        %p531 = pneg %p188
      $region58: #{diffpool_net_forward.12} parent=51 // pred_check_branch
        %533 = sbr.rel (%p531) target = $region60
      $region59: #{diffpool_net_forward.12} parent=51 // pred_region
        %p534 = scmp.lt.s32.totalorder %s19, 1
        %s535 = scalar_select %p534, %s19, 1
        %s536 = smul.addr %s535, 4
        %s537 = scalar_lea.vmem %s6, %s536
      $region60: #{diffpool_net_forward.12} parent=51 // pred_fallthru
        _
    $region52: #{diffpool_net_forward.12} parent=5 // pred_fallthru
      _
  $region6: #{diffpool_net_forward.12} parent=0 // loop_footer
    %s17 = sadd.s32 1, %s13
  $region7: #{diffpool_net_forward.12} parent=0 // loop_footer_branch
    %12 = sbr.rel target = $region3
  $region8: #{diffpool_net_forward.12} parent=0 // loop_exit
    _

</llo_original>
